<compile_context>
chip_gen: v7x
topology: tpu7x:2x2x1
jax: 0.10.0
libtpu: 0.0.40
codegen_flags: <defaults>
</compile_context>

<pallas_src>
import functools

import jax
import jax.numpy as jnp
import numpy as np
from jax.experimental import pallas as pl
from jax.experimental.pallas import tpu as pltpu

_K_PAD = 128                 # layer-1 contraction dim padded to a full MXU pass
_NC_PAD = 128                # lane-dense output width
_TAIL_PAD = 128              # lane width for the narrow tail layers (64 / 32)
_HIDDEN = (1024, 512, 256, 128, 64, 32)
_MAX_TILE = 1024             # safe on v7x's 64 MiB physical VMEM


def _round_up(n, m):
    return ((n + m - 1) // m) * m


def _relu6(x):
    return jnp.clip(x, 0.0, 6.0)


def _mlp_kernel(x_ref, w1, w2, w3, w4, w5, w6, w7, bias_ref, o_ref):
    b = bias_ref[...]                                  # (8, 1024) f32, rows 0..6 used
    # layer1: Linear + folded BatchNorm1d + ReLU      (Dropout = identity, eval)
    h = jnp.dot(x_ref[...], w1[...], preferred_element_type=jnp.float32)
    h = jnp.maximum(h + b[0:1, :1024], 0.0)
    # layer2..6: Linear + ReLU6                        (Dropout = identity, eval)
    h = _relu6(jnp.dot(h.astype(jnp.bfloat16), w2[...],
                       preferred_element_type=jnp.float32) + b[1:2, :512])
    h = _relu6(jnp.dot(h.astype(jnp.bfloat16), w3[...],
                       preferred_element_type=jnp.float32) + b[2:3, :256])
    h = _relu6(jnp.dot(h.astype(jnp.bfloat16), w4[...],
                       preferred_element_type=jnp.float32) + b[3:4, :128])
    # tail layers are lane-padded to 128; padded lanes stay zero (zero bias,
    # ReLU6(0)=0, zero weight rows), so no masked/partial-lane vregs.
    h = _relu6(jnp.dot(h.astype(jnp.bfloat16), w5[...],
                       preferred_element_type=jnp.float32) + b[4:5, :_TAIL_PAD])
    h = _relu6(jnp.dot(h.astype(jnp.bfloat16), w6[...],
                       preferred_element_type=jnp.float32) + b[5:6, :_TAIL_PAD])
    # out_layer (lane-padded to 128; sliced back to num_classes in the wrapper)
    o_ref[...] = (jnp.dot(h.astype(jnp.bfloat16), w7[...],
                          preferred_element_type=jnp.float32)
                  + b[6:7, :_NC_PAD]).astype(o_ref.dtype)


def prepare_params(params):
    """One-time repack of the 7 (W(in,out), b(1,out)) f32 params (eval-mode
    BatchNorm already folded into layer1, see init_params) into the kernel's
    VMEM-friendly layout.  Call once, reuse for every forward.

    Returns (ws, bias):
      ws   : tuple of 7 bf16 weights; W1 K-padded to 128, W5/W6/W7 padded to
             128x128 with zero rows/cols.
      bias : one (8, 1024) f32 slab; row i holds layer-(i+1)'s bias, zero-padded.
    """
    input_dim = params[0][0].shape[0]
    num_classes = params[-1][0].shape[1]
    assert input_dim <= _K_PAD, "input_dim > 128 needs a layer-1 K-loop (not implemented)"
    assert num_classes <= _NC_PAD

    # W1: (input_dim, 1024) -> (128, 1024), zero-padded rows.
    w1 = jnp.zeros((_K_PAD, _HIDDEN[0]), jnp.float32).at[:input_dim, :].set(params[0][0])
    ws = [w1.astype(jnp.bfloat16)]
    # W2..W4: already >= 128 on both dims.
    for (w, _) in params[1:4]:
        ws.append(w.astype(jnp.bfloat16))
    # W5: (128, 64) -> (128, 128), zero-padded output columns.
    w5 = jnp.zeros((128, _TAIL_PAD), jnp.float32).at[:, :_HIDDEN[4]].set(params[4][0])
    ws.append(w5.astype(jnp.bfloat16))
    # W6: (64, 32) -> (128, 128), zero-padded rows and columns.
    w6 = jnp.zeros((_TAIL_PAD, _TAIL_PAD), jnp.float32).at[:_HIDDEN[4], :_HIDDEN[5]].set(params[5][0])
    ws.append(w6.astype(jnp.bfloat16))
    # W7: (32, num_classes) -> (128, 128), zero-padded rows and columns.
    w7 = jnp.zeros((_TAIL_PAD, _NC_PAD), jnp.float32).at[:_HIDDEN[5], :num_classes].set(params[-1][0])
    ws.append(w7.astype(jnp.bfloat16))

    # All biases in one (8, 1024) f32 slab (row 7 is padding for the sublane tile of 8).
    bias = jnp.zeros((8, _HIDDEN[0]), jnp.float32)
    for i, (_, b) in enumerate(params):
        bias = bias.at[i, :b.shape[1]].set(b[0])

    return tuple(ws), bias


def _choose_tile(B, requested):
    """Clamp the batch tile to the real batch and keep >=2 grid steps for
    large batches (both v7x TensorCores busy).  Always a multiple of 16
    (bf16 sublane tile), capped at 1024 for v7x VMEM headroom."""
    b16 = _round_up(B, 16)
    tile = min(requested, b16)
    if b16 >= 256:
        # split the batch so the "parallel" grid axis has >= 2 steps.
        tile = min(tile, max(128, _round_up((b16 + 1) // 2, 16)))
    tile = max(16, _round_up(tile, 16))
    return min(tile, _MAX_TILE)


@functools.partial(jax.jit, static_argnames=("num_classes", "batch_tile"))
def define_classifier_forward(x, ws, bias, *, num_classes, batch_tile=512):
    """x: (B, input_dim) float32; (ws, bias) from prepare_params().

    batch_tile guidance: 128-256 on v5e (MXU-bound, no gain from bigger
    tiles), 512 on v6e (amortizes ~0.35 us/step + MXU weight push), and on
    v7x any value works since the tile is auto-capped to keep >=2 grid steps
    and <=1024 rows (64 MiB physical VMEM).  Small B is auto-clamped so no
    MXU work is spent on batch padding.
    """
    B, input_dim = x.shape
    assert input_dim <= _K_PAD

    tile = _choose_tile(B, batch_tile)
    b_pad = _round_up(B, tile)

    # per-call glue: only x is padded/cast (weights were repacked once).
    xp = jnp.zeros((b_pad, _K_PAD), jnp.float32).at[:B, :input_dim].set(x)
    xp = xp.astype(jnp.bfloat16)

    in_specs = [pl.BlockSpec((tile, _K_PAD), lambda i: (i, 0))]
    for w in ws:                                    # grid-invariant weights
        in_specs.append(pl.BlockSpec(w.shape, lambda i: (0, 0)))
    in_specs.append(pl.BlockSpec(bias.shape, lambda i: (0, 0)))

    out = pl.pallas_call(
        _mlp_kernel,
        out_shape=jax.ShapeDtypeStruct((b_pad, _NC_PAD), jnp.float32),
        grid_spec=pltpu.PrefetchScalarGridSpec(
            num_scalar_prefetch=0,
            grid=(b_pad // tile,),
            in_specs=in_specs,
            out_specs=pl.BlockSpec((tile, _NC_PAD), lambda i: (i, 0)),
        ),
        compiler_params=pltpu.CompilerParams(
            dimension_semantics=("parallel",),
            vmem_limit_bytes=32 * 1024 * 1024,
        ),
    )(xp, *ws, bias)
    return out[:B, :num_classes]


def init_params(input_dim, num_classes=2, seed=0):
    """Deterministic init mimicking PyTorch defaults (uniform +-1/sqrt(fan_in)),
    with BatchNorm1d (gamma=1, beta=0, running_mean=0, running_var=1, eps=1e-5)
    folded into layer1.  Weights are stored transposed vs PyTorch: (in, out)."""
    dims = [input_dim, 1024, 512, 256, 128, 64, 32, num_classes]
    key = jax.random.PRNGKey(seed)
    params = []
    for li in range(len(dims) - 1):
        fan_in, fan_out = dims[li], dims[li + 1]
        key, kw, kb = jax.random.split(key, 3)
        bound = 1.0 / np.sqrt(fan_in)
        w = jax.random.uniform(kw, (fan_in, fan_out), jnp.float32, -bound, bound)
        b = jax.random.uniform(kb, (1, fan_out), jnp.float32, -bound, bound)
        params.append([w, b])

    # Fold eval-mode BatchNorm1d(1024) into layer1: y = (xW+b)*scale + shift
    eps = 1e-5
    gamma = jnp.ones((1024,), jnp.float32)
    beta = jnp.zeros((1024,), jnp.float32)
    running_mean = jnp.zeros((1024,), jnp.float32)
    running_var = jnp.ones((1024,), jnp.float32)
    scale = gamma / jnp.sqrt(running_var + eps)
    shift = beta - running_mean * scale
    params[0][0] = params[0][0] * scale[None, :]
    params[0][1] = params[0][1] * scale[None, :] + shift[None, :]
    # TODO(synk): Dropout(0.5) layers are identity here (eval-mode forward).
    return [tuple(p) for p in params]


def _reference_forward(x, params):
    """Pure-f32 reference of the eval-mode forward pass."""
    h = jnp.maximum(x @ params[0][0] + params[0][1], 0.0)
    for (w, b) in params[1:-1]:
        h = jnp.clip(h @ w + b, 0.0, 6.0)
    w, b = params[-1]
    return h @ w + b


if __name__ == "__main__":
    input_dim = 32
    num_classes = 2
    B = 16

    params = init_params(input_dim, num_classes, seed=0)
    ws, bias = prepare_params(params)                 # one-time repack (bf16 + padding)
    x = jax.random.normal(jax.random.PRNGKey(0), (B, input_dim), jnp.float32)

    out = define_classifier_forward(x, ws, bias, num_classes=num_classes,
                                    batch_tile=128)   # tile auto-clamps to 16 for B=16
    out = jax.block_until_ready(out)
    assert out.shape == (B, num_classes)

    ref = _reference_forward(x, params)
    # Tolerance loosened vs the pure-f32 reference: kernel uses bf16 weights /
    # dot inputs with f32 accumulation.
    np.testing.assert_allclose(np.asarray(out), np.asarray(ref),
                               rtol=5e-2, atol=5e-2)
    print("KERNEL_OK")
</pallas_src>

<mosaic_0001>
module attributes {stable_mosaic.version = 11 : i64} {
  func.func @_mlp_kernel(%arg0: i32, %arg1: memref<16x128xbf16, #tpu.memory_space<vmem>>, %arg2: memref<128x1024xbf16, #tpu.memory_space<vmem>>, %arg3: memref<1024x512xbf16, #tpu.memory_space<vmem>>, %arg4: memref<512x256xbf16, #tpu.memory_space<vmem>>, %arg5: memref<256x128xbf16, #tpu.memory_space<vmem>>, %arg6: memref<128x128xbf16, #tpu.memory_space<vmem>>, %arg7: memref<128x128xbf16, #tpu.memory_space<vmem>>, %arg8: memref<128x128xbf16, #tpu.memory_space<vmem>>, %arg9: memref<8x1024xf32, #tpu.memory_space<vmem>>, %arg10: memref<16x128xf32, #tpu.memory_space<vmem>>) attributes {dimension_semantics = [#tpu.dimension_semantics<parallel>], iteration_bounds = array<i64: 1>, scalar_prefetch = 0 : i64, scratch_operands = 0 : i64, tpu.core_type = #tpu.core_type<tc>, window_params = [{transform_indices = @transform_0, window_bounds = array<i64: 16, 128>}, {pipeline_mode = #tpu.pipeline_mode<synchronous>, transform_indices = @transform_1, window_bounds = array<i64: 128, 1024>}, {pipeline_mode = #tpu.pipeline_mode<synchronous>, transform_indices = @transform_2, window_bounds = array<i64: 1024, 512>}, {pipeline_mode = #tpu.pipeline_mode<synchronous>, transform_indices = @transform_3, window_bounds = array<i64: 512, 256>}, {pipeline_mode = #tpu.pipeline_mode<synchronous>, transform_indices = @transform_4, window_bounds = array<i64: 256, 128>}, {pipeline_mode = #tpu.pipeline_mode<synchronous>, transform_indices = @transform_5, window_bounds = array<i64: 128, 128>}, {pipeline_mode = #tpu.pipeline_mode<synchronous>, transform_indices = @transform_6, window_bounds = array<i64: 128, 128>}, {pipeline_mode = #tpu.pipeline_mode<synchronous>, transform_indices = @transform_7, window_bounds = array<i64: 128, 128>}, {pipeline_mode = #tpu.pipeline_mode<synchronous>, transform_indices = @transform_8, window_bounds = array<i64: 8, 1024>}, {transform_indices = @transform_9, window_bounds = array<i64: 16, 128>}]} {
    %c0 = arith.constant 0 : index
    %c0_0 = arith.constant 0 : index
    %0 = vector.load %arg9[%c0, %c0_0] : memref<8x1024xf32, #tpu.memory_space<vmem>>, vector<8x1024xf32>
    %c0_1 = arith.constant 0 : index
    %c0_2 = arith.constant 0 : index
    %1 = vector.load %arg1[%c0_1, %c0_2] : memref<16x128xbf16, #tpu.memory_space<vmem>>, vector<16x128xbf16>
    %c0_3 = arith.constant 0 : index
    %c0_4 = arith.constant 0 : index
    %2 = vector.load %arg2[%c0_3, %c0_4] : memref<128x1024xbf16, #tpu.memory_space<vmem>>, vector<128x1024xbf16>
    %cst = arith.constant dense<0.000000e+00> : vector<16x1024xf32>
    %3 = tpu.matmul %1, %2, %cst {dimension_numbers = #tpu.dot_dimension_numbers<[1], [0], [0], [1], [0, 0, 1, 1], [], []>} : vector<16x128xbf16>, vector<128x1024xbf16>, vector<16x1024xf32> -> vector<16x1024xf32>
    %4 = vector.extract_strided_slice %0 {offsets = [0, 0], sizes = [1, 1024], strides = [1, 1]} : vector<8x1024xf32> to vector<1x1024xf32>
    %5 = vector.broadcast %4 : vector<1x1024xf32> to vector<16x1024xf32>
    %6 = arith.addf %3, %5 : vector<16x1024xf32>
    %cst_5 = arith.constant 0.000000e+00 : f32
    %7 = vector.broadcast %cst_5 : f32 to vector<16x1024xf32>
    %8 = arith.maximumf %6, %7 : vector<16x1024xf32>
    %9 = arith.truncf %8 : vector<16x1024xf32> to vector<16x1024xbf16>
    %c0_6 = arith.constant 0 : index
    %c0_7 = arith.constant 0 : index
    %10 = vector.load %arg3[%c0_6, %c0_7] : memref<1024x512xbf16, #tpu.memory_space<vmem>>, vector<1024x512xbf16>
    %cst_8 = arith.constant dense<0.000000e+00> : vector<16x512xf32>
    %11 = tpu.matmul %9, %10, %cst_8 {dimension_numbers = #tpu.dot_dimension_numbers<[1], [0], [0], [1], [0, 0, 1, 1], [], []>} : vector<16x1024xbf16>, vector<1024x512xbf16>, vector<16x512xf32> -> vector<16x512xf32>
    %12 = vector.extract_strided_slice %0 {offsets = [1, 0], sizes = [1, 512], strides = [1, 1]} : vector<8x1024xf32> to vector<1x512xf32>
    %13 = vector.broadcast %12 : vector<1x512xf32> to vector<16x512xf32>
    %14 = arith.addf %11, %13 : vector<16x512xf32>
    %cst_9 = arith.constant 0.000000e+00 : f32
    %cst_10 = arith.constant 6.000000e+00 : f32
    %15 = vector.broadcast %cst_9 : f32 to vector<16x512xf32>
    %16 = arith.maximumf %15, %14 : vector<16x512xf32>
    %17 = vector.broadcast %cst_10 : f32 to vector<16x512xf32>
    %18 = arith.minimumf %17, %16 : vector<16x512xf32>
    %19 = arith.truncf %18 : vector<16x512xf32> to vector<16x512xbf16>
    %c0_11 = arith.constant 0 : index
    %c0_12 = arith.constant 0 : index
    %20 = vector.load %arg4[%c0_11, %c0_12] : memref<512x256xbf16, #tpu.memory_space<vmem>>, vector<512x256xbf16>
    %cst_13 = arith.constant dense<0.000000e+00> : vector<16x256xf32>
    %21 = tpu.matmul %19, %20, %cst_13 {dimension_numbers = #tpu.dot_dimension_numbers<[1], [0], [0], [1], [0, 0, 1, 1], [], []>} : vector<16x512xbf16>, vector<512x256xbf16>, vector<16x256xf32> -> vector<16x256xf32>
    %22 = vector.extract_strided_slice %0 {offsets = [2, 0], sizes = [1, 256], strides = [1, 1]} : vector<8x1024xf32> to vector<1x256xf32>
    %23 = vector.broadcast %22 : vector<1x256xf32> to vector<16x256xf32>
    %24 = arith.addf %21, %23 : vector<16x256xf32>
    %cst_14 = arith.constant 0.000000e+00 : f32
    %cst_15 = arith.constant 6.000000e+00 : f32
    %25 = vector.broadcast %cst_14 : f32 to vector<16x256xf32>
    %26 = arith.maximumf %25, %24 : vector<16x256xf32>
    %27 = vector.broadcast %cst_15 : f32 to vector<16x256xf32>
    %28 = arith.minimumf %27, %26 : vector<16x256xf32>
    %29 = arith.truncf %28 : vector<16x256xf32> to vector<16x256xbf16>
    %c0_16 = arith.constant 0 : index
    %c0_17 = arith.constant 0 : index
    %30 = vector.load %arg5[%c0_16, %c0_17] : memref<256x128xbf16, #tpu.memory_space<vmem>>, vector<256x128xbf16>
    %cst_18 = arith.constant dense<0.000000e+00> : vector<16x128xf32>
    %31 = tpu.matmul %29, %30, %cst_18 {dimension_numbers = #tpu.dot_dimension_numbers<[1], [0], [0], [1], [0, 0, 1, 1], [], []>} : vector<16x256xbf16>, vector<256x128xbf16>, vector<16x128xf32> -> vector<16x128xf32>
    %32 = vector.extract_strided_slice %0 {offsets = [3, 0], sizes = [1, 128], strides = [1, 1]} : vector<8x1024xf32> to vector<1x128xf32>
    %33 = vector.broadcast %32 : vector<1x128xf32> to vector<16x128xf32>
    %34 = arith.addf %31, %33 : vector<16x128xf32>
    %cst_19 = arith.constant 0.000000e+00 : f32
    %cst_20 = arith.constant 6.000000e+00 : f32
    %35 = vector.broadcast %cst_19 : f32 to vector<16x128xf32>
    %36 = arith.maximumf %35, %34 : vector<16x128xf32>
    %37 = vector.broadcast %cst_20 : f32 to vector<16x128xf32>
    %38 = arith.minimumf %37, %36 : vector<16x128xf32>
    %39 = arith.truncf %38 : vector<16x128xf32> to vector<16x128xbf16>
    %c0_21 = arith.constant 0 : index
    %c0_22 = arith.constant 0 : index
    %40 = vector.load %arg6[%c0_21, %c0_22] : memref<128x128xbf16, #tpu.memory_space<vmem>>, vector<128x128xbf16>
    %cst_23 = arith.constant dense<0.000000e+00> : vector<16x128xf32>
    %41 = tpu.matmul %39, %40, %cst_23 {dimension_numbers = #tpu.dot_dimension_numbers<[1], [0], [0], [1], [0, 0, 1, 1], [], []>} : vector<16x128xbf16>, vector<128x128xbf16>, vector<16x128xf32> -> vector<16x128xf32>
    %42 = vector.extract_strided_slice %0 {offsets = [4, 0], sizes = [1, 128], strides = [1, 1]} : vector<8x1024xf32> to vector<1x128xf32>
    %43 = vector.broadcast %42 : vector<1x128xf32> to vector<16x128xf32>
    %44 = arith.addf %41, %43 : vector<16x128xf32>
    %cst_24 = arith.constant 0.000000e+00 : f32
    %cst_25 = arith.constant 6.000000e+00 : f32
    %45 = vector.broadcast %cst_24 : f32 to vector<16x128xf32>
    %46 = arith.maximumf %45, %44 : vector<16x128xf32>
    %47 = vector.broadcast %cst_25 : f32 to vector<16x128xf32>
    %48 = arith.minimumf %47, %46 : vector<16x128xf32>
    %49 = arith.truncf %48 : vector<16x128xf32> to vector<16x128xbf16>
    %c0_26 = arith.constant 0 : index
    %c0_27 = arith.constant 0 : index
    %50 = vector.load %arg7[%c0_26, %c0_27] : memref<128x128xbf16, #tpu.memory_space<vmem>>, vector<128x128xbf16>
    %cst_28 = arith.constant dense<0.000000e+00> : vector<16x128xf32>
    %51 = tpu.matmul %49, %50, %cst_28 {dimension_numbers = #tpu.dot_dimension_numbers<[1], [0], [0], [1], [0, 0, 1, 1], [], []>} : vector<16x128xbf16>, vector<128x128xbf16>, vector<16x128xf32> -> vector<16x128xf32>
    %52 = vector.extract_strided_slice %0 {offsets = [5, 0], sizes = [1, 128], strides = [1, 1]} : vector<8x1024xf32> to vector<1x128xf32>
    %53 = vector.broadcast %52 : vector<1x128xf32> to vector<16x128xf32>
    %54 = arith.addf %51, %53 : vector<16x128xf32>
    %cst_29 = arith.constant 0.000000e+00 : f32
    %cst_30 = arith.constant 6.000000e+00 : f32
    %55 = vector.broadcast %cst_29 : f32 to vector<16x128xf32>
    %56 = arith.maximumf %55, %54 : vector<16x128xf32>
    %57 = vector.broadcast %cst_30 : f32 to vector<16x128xf32>
    %58 = arith.minimumf %57, %56 : vector<16x128xf32>
    %59 = arith.truncf %58 : vector<16x128xf32> to vector<16x128xbf16>
    %c0_31 = arith.constant 0 : index
    %c0_32 = arith.constant 0 : index
    %60 = vector.load %arg8[%c0_31, %c0_32] : memref<128x128xbf16, #tpu.memory_space<vmem>>, vector<128x128xbf16>
    %cst_33 = arith.constant dense<0.000000e+00> : vector<16x128xf32>
    %61 = tpu.matmul %59, %60, %cst_33 {dimension_numbers = #tpu.dot_dimension_numbers<[1], [0], [0], [1], [0, 0, 1, 1], [], []>} : vector<16x128xbf16>, vector<128x128xbf16>, vector<16x128xf32> -> vector<16x128xf32>
    %62 = vector.extract_strided_slice %0 {offsets = [6, 0], sizes = [1, 128], strides = [1, 1]} : vector<8x1024xf32> to vector<1x128xf32>
    %63 = vector.broadcast %62 : vector<1x128xf32> to vector<16x128xf32>
    %64 = arith.addf %61, %63 : vector<16x128xf32>
    %c0_34 = arith.constant 0 : index
    %c0_35 = arith.constant 0 : index
    %65 = vector.load %arg10[%c0_34, %c0_35] : memref<16x128xf32, #tpu.memory_space<vmem>>, vector<16x128xf32>
    tpu.vector_store %arg10[%c0_34, %c0_35], %64 {strides = array<i32>} : memref<16x128xf32, #tpu.memory_space<vmem>>, vector<16x128xf32>,
    return
  }
  func.func @transform_0(%arg0: i32) -> (i32, i32) {
    %c0_i32 = arith.constant 0 : i32
    %c0_i32_0 = arith.constant 0 : i32
    return %arg0, %c0_i32 : i32, i32
  }
  func.func @transform_1(%arg0: i32) -> (i32, i32) {
    %c0_i32 = arith.constant 0 : i32
    %c0_i32_0 = arith.constant 0 : i32
    %c0_i32_1 = arith.constant 0 : i32
    return %c0_i32, %c0_i32_0 : i32, i32
  }
  func.func @transform_2(%arg0: i32) -> (i32, i32) {
    %c0_i32 = arith.constant 0 : i32
    %c0_i32_0 = arith.constant 0 : i32
    %c0_i32_1 = arith.constant 0 : i32
    return %c0_i32, %c0_i32_0 : i32, i32
  }
  func.func @transform_3(%arg0: i32) -> (i32, i32) {
    %c0_i32 = arith.constant 0 : i32
    %c0_i32_0 = arith.constant 0 : i32
    %c0_i32_1 = arith.constant 0 : i32
    return %c0_i32, %c0_i32_0 : i32, i32
  }
  func.func @transform_4(%arg0: i32) -> (i32, i32) {
    %c0_i32 = arith.constant 0 : i32
    %c0_i32_0 = arith.constant 0 : i32
    %c0_i32_1 = arith.constant 0 : i32
    return %c0_i32, %c0_i32_0 : i32, i32
  }
  func.func @transform_5(%arg0: i32) -> (i32, i32) {
    %c0_i32 = arith.constant 0 : i32
    %c0_i32_0 = arith.constant 0 : i32
    %c0_i32_1 = arith.constant 0 : i32
    return %c0_i32, %c0_i32_0 : i32, i32
  }
  func.func @transform_6(%arg0: i32) -> (i32, i32) {
    %c0_i32 = arith.constant 0 : i32
    %c0_i32_0 = arith.constant 0 : i32
    %c0_i32_1 = arith.constant 0 : i32
    return %c0_i32, %c0_i32_0 : i32, i32
  }
  func.func @transform_7(%arg0: i32) -> (i32, i32) {
    %c0_i32 = arith.constant 0 : i32
    %c0_i32_0 = arith.constant 0 : i32
    %c0_i32_1 = arith.constant 0 : i32
    return %c0_i32, %c0_i32_0 : i32, i32
  }
  func.func @transform_8(%arg0: i32) -> (i32, i32) {
    %c0_i32 = arith.constant 0 : i32
    %c0_i32_0 = arith.constant 0 : i32
    %c0_i32_1 = arith.constant 0 : i32
    return %c0_i32, %c0_i32_0 : i32, i32
  }
  func.func @transform_9(%arg0: i32) -> (i32, i32) {
    %c0_i32 = arith.constant 0 : i32
    %c0_i32_0 = arith.constant 0 : i32
    return %arg0, %c0_i32 : i32, i32
  }
}

</mosaic_0001>

<llo_original>
// kernel: define_classifier_forward.1
$region0: #{define_classifier_forward.1}
  #allocation0 [shape = 'u32[]', space=smem, size = 0x4, offset = 0x4, fixed_abs, tag = 'smem constant byte address 0x4 - core index']
  #allocation1 [shape = 'u32[144,128]{1,0:T(1,128)}', space=vmem, size = 0x12000, scoped, tag = 'internal scratch']
  %s0 = inlined_call_operand.vmem [shape: bf16[16,128], index: 0, kind: input, shape index: {}]
  %s1 = inlined_call_operand.hbm [shape: bf16[128,1024], index: 1, kind: input, shape index: {}]
  %s2 = inlined_call_operand.hbm [shape: bf16[1024,512], index: 2, kind: input, shape index: {}]
  %s3 = inlined_call_operand.hbm [shape: bf16[512,256], index: 3, kind: input, shape index: {}]
  %s4 = inlined_call_operand.hbm [shape: bf16[256,128], index: 4, kind: input, shape index: {}]
  %s5 = inlined_call_operand.vmem [shape: bf16[128,128], index: 5, kind: input, shape index: {}]
  %s6 = inlined_call_operand.hbm [shape: bf16[128,128], index: 6, kind: input, shape index: {}]
  %s7 = inlined_call_operand.hbm [shape: bf16[128,128], index: 7, kind: input, shape index: {}]
  %s8 = inlined_call_operand.hbm [shape: f32[8,1024], index: 8, kind: input, shape index: {}]
  %s9 = inlined_call_operand.vmem [shape: f32[16,128], index: 9, kind: output, shape index: {}]
  %s10 = sld [smem:[#allocation0]]
  $region74: #{define_classifier_forward.1} parent=0
    _
  %s12 = ssub.s32 1, %s10
  %s13 = scalar_select 0, %s12, %s10
  $region1: #{define_classifier_forward.1} parent=0
    #allocation2 [shape = 'u8[262144]{0}', space=vmem, size = 0x40000, scoped, tag = 'input window, operand 1, single buffered']
    #allocation3 [shape = 's32[1]{0}', space=sflag, size = 0x4, scoped, tag = 'scoped memory for define_classifier_forward.1']
    #allocation4 [shape = 'u8[1048576]{0}', space=vmem, size = 0x100000, scoped, tag = 'input window, operand 2, single buffered']
    #allocation5 [shape = 's32[1]{0}', space=sflag, size = 0x4, scoped, tag = 'scoped memory for define_classifier_forward.1']
    #allocation6 [shape = 'u8[262144]{0}', space=vmem, size = 0x40000, scoped, tag = 'input window, operand 3, single buffered']
    #allocation7 [shape = 'u8[65536]{0}', space=vmem, size = 0x10000, scoped, tag = 'input window, operand 4, single buffered']
    #allocation8 [shape = 's32[1]{0}', space=sflag, size = 0x4, scoped, tag = 'scoped memory for define_classifier_forward.1']
    #allocation9 [shape = 'u8[32768]{0}', space=vmem, size = 0x8000, scoped, tag = 'input window, operand 6, single buffered']
    #allocation10 [shape = 'u8[32768]{0}', space=vmem, size = 0x8000, scoped, tag = 'input window, operand 7, single buffered']
    #allocation11 [shape = 's32[1]{0}', space=sflag, size = 0x4, scoped, tag = 'scoped memory for define_classifier_forward.1']
    #allocation12 [shape = 'u8[32768]{0}', space=vmem, size = 0x8000, scoped, tag = 'input window, operand 8, single buffered']
    %14 = vsyncpa [#allocation3], 0
    %15 = vsyncpa [#allocation5], 0
    %16 = vsyncpa [#allocation8], 0
    %17 = vsyncpa [#allocation11], 0
    // Predicated region
    $region2: #{define_classifier_forward.1} parent=1 // pred_check
      _
    $region3: #{define_classifier_forward.1} parent=1 // pred_check_branch
      %19 = sbr.rel (0) target = $region5
    $region4: #{define_classifier_forward.1} parent=1 // pred_region
      _
    $region5: #{define_classifier_forward.1} parent=1 // pred_fallthru
      _
    // Predicated region
    $region6: #{define_classifier_forward.1} parent=1 // pred_check
      _
    $region7: #{define_classifier_forward.1} parent=1 // pred_check_branch
      %21 = sbr.rel (0) target = $region9
    $region8: #{define_classifier_forward.1} parent=1 // pred_region
      %s23 = ssub.s32 8192, 8192
      %24 = vsyncadd [#allocation3], %s23
      %s25 = sshll.u32 [#allocation2], 4
      %s26 = int_to_ptr.vmem [resolvable:$true] %s25
      %31 = dma.hbm_to_vmem [thread:$0]  %s1, 8192, %s26, [#allocation3], 512, 512, 32
    $region9: #{define_classifier_forward.1} parent=1 // pred_fallthru
      _
    // Predicated region
    $region10: #{define_classifier_forward.1} parent=1 // pred_check
      _
    $region11: #{define_classifier_forward.1} parent=1 // pred_check_branch
      %33 = sbr.rel (0) target = $region13
    $region12: #{define_classifier_forward.1} parent=1 // pred_region
      %s35 = ssub.s32 32768, 32768
      %36 = vsyncadd [#allocation5], %s35
      %s37 = sshll.u32 [#allocation4], 4
      %s38 = int_to_ptr.vmem [resolvable:$true] %s37
      %43 = dma.hbm_to_vmem [thread:$0]  %s2, 32768, %s38, [#allocation5], 256, 256, 16
    $region13: #{define_classifier_forward.1} parent=1 // pred_fallthru
      _
    // Predicated region
    $region14: #{define_classifier_forward.1} parent=1 // pred_check
      _
    $region15: #{define_classifier_forward.1} parent=1 // pred_check_branch
      %45 = sbr.rel (0) target = $region17
    $region16: #{define_classifier_forward.1} parent=1 // pred_region
      %s47 = ssub.s32 8192, 8192
      %48 = vsyncadd [#allocation5], %s47
      %s49 = sshll.u32 [#allocation6], 4
      %s50 = int_to_ptr.vmem [resolvable:$true] %s49
      %55 = dma.hbm_to_vmem [thread:$0]  %s3, 8192, %s50, [#allocation5], 128, 128, 8
    $region17: #{define_classifier_forward.1} parent=1 // pred_fallthru
      _
    // Predicated region
    $region18: #{define_classifier_forward.1} parent=1 // pred_check
      _
    $region19: #{define_classifier_forward.1} parent=1 // pred_check_branch
      %57 = sbr.rel (0) target = $region21
    $region20: #{define_classifier_forward.1} parent=1 // pred_region
      %s59 = ssub.s32 2048, 2048
      %60 = vsyncadd [#allocation8], %s59
      %s61 = sshll.u32 [#allocation7], 4
      %s62 = int_to_ptr.vmem [resolvable:$true] %s61
      %67 = dma.hbm_to_vmem [thread:$0]  %s4, 2048, %s62, [#allocation8], 64, 64, 4
    $region21: #{define_classifier_forward.1} parent=1 // pred_fallthru
      _
    // Predicated region
    $region22: #{define_classifier_forward.1} parent=1 // pred_check
      _
    $region23: #{define_classifier_forward.1} parent=1 // pred_check_branch
      %69 = sbr.rel (0) target = $region25
    $region24: #{define_classifier_forward.1} parent=1 // pred_region
      _
    $region25: #{define_classifier_forward.1} parent=1 // pred_fallthru
      _
    // Predicated region
    $region26: #{define_classifier_forward.1} parent=1 // pred_check
      _
    $region27: #{define_classifier_forward.1} parent=1 // pred_check_branch
      %71 = sbr.rel (0) target = $region29
    $region28: #{define_classifier_forward.1} parent=1 // pred_region
      %s73 = ssub.s32 1024, 1024
      %74 = vsyncadd [#allocation8], %s73
      %s75 = sshll.u32 [#allocation9], 4
      %s76 = int_to_ptr.vmem [resolvable:$true] %s75
      %81 = dma.hbm_to_vmem [thread:$0]  %s6, 1024, %s76, [#allocation8], 64, 64, 4
    $region29: #{define_classifier_forward.1} parent=1 // pred_fallthru
      _
    // Predicated region
    $region30: #{define_classifier_forward.1} parent=1 // pred_check
      _
    $region31: #{define_classifier_forward.1} parent=1 // pred_check_branch
      %83 = sbr.rel (0) target = $region33
    $region32: #{define_classifier_forward.1} parent=1 // pred_region
      %s85 = ssub.s32 1024, 1024
      %86 = vsyncadd [#allocation11], %s85
      %s87 = sshll.u32 [#allocation10], 4
      %s88 = int_to_ptr.vmem [resolvable:$true] %s87
      %93 = dma.hbm_to_vmem [thread:$0]  %s7, 1024, %s88, [#allocation11], 64, 64, 4
    $region33: #{define_classifier_forward.1} parent=1 // pred_fallthru
      _
    // Predicated region
    $region34: #{define_classifier_forward.1} parent=1 // pred_check
      _
    $region35: #{define_classifier_forward.1} parent=1 // pred_check_branch
      %95 = sbr.rel (0) target = $region37
    $region36: #{define_classifier_forward.1} parent=1 // pred_region
      %s97 = ssub.s32 1024, 1024
      %98 = vsyncadd [#allocation11], %s97
      %s100 = sshll.u32 [#allocation12], 4
      %s101 = int_to_ptr.vmem [resolvable:$true] %s100
      %103 = dma.hbm_to_vmem [thread:$0]  %s8, 1024, %s101, [#allocation11]
    $region37: #{define_classifier_forward.1} parent=1 // pred_fallthru
      _
    // Predicated region
    $region38: #{define_classifier_forward.1} parent=1 // pred_check
      _
    $region39: #{define_classifier_forward.1} parent=1 // pred_check_branch
      %105 = sbr.rel (0) target = $region41
    $region40: #{define_classifier_forward.1} parent=1 // pred_region
      %106 = dma.done [#allocation3], 8192
    $region41: #{define_classifier_forward.1} parent=1 // pred_fallthru
      _
    // Predicated region
    $region42: #{define_classifier_forward.1} parent=1 // pred_check
      _
    $region43: #{define_classifier_forward.1} parent=1 // pred_check_branch
      %108 = sbr.rel (0) target = $region45
    $region44: #{define_classifier_forward.1} parent=1 // pred_region
      %109 = dma.done [#allocation5], 32768
    $region45: #{define_classifier_forward.1} parent=1 // pred_fallthru
      _
    // Predicated region
    $region46: #{define_classifier_forward.1} parent=1 // pred_check
      _
    $region47: #{define_classifier_forward.1} parent=1 // pred_check_branch
      %111 = sbr.rel (0) target = $region49
    $region48: #{define_classifier_forward.1} parent=1 // pred_region
      %112 = dma.done [#allocation5], 8192
    $region49: #{define_classifier_forward.1} parent=1 // pred_fallthru
      _
    // Predicated region
    $region50: #{define_classifier_forward.1} parent=1 // pred_check
      _
    $region51: #{define_classifier_forward.1} parent=1 // pred_check_branch
      %114 = sbr.rel (0) target = $region53
    $region52: #{define_classifier_forward.1} parent=1 // pred_region
      %115 = dma.done [#allocation8], 2048
    $region53: #{define_classifier_forward.1} parent=1 // pred_fallthru
      _
    // Predicated region
    $region54: #{define_classifier_forward.1} parent=1 // pred_check
      _
    $region55: #{define_classifier_forward.1} parent=1 // pred_check_branch
      %117 = sbr.rel (0) target = $region57
    $region56: #{define_classifier_forward.1} parent=1 // pred_region
      %118 = dma.done [#allocation8], 1024
    $region57: #{define_classifier_forward.1} parent=1 // pred_fallthru
      _
    // Predicated region
    $region58: #{define_classifier_forward.1} parent=1 // pred_check
      _
    $region59: #{define_classifier_forward.1} parent=1 // pred_check_branch
      %120 = sbr.rel (0) target = $region61
    $region60: #{define_classifier_forward.1} parent=1 // pred_region
      %121 = dma.done [#allocation11], 1024
    $region61: #{define_classifier_forward.1} parent=1 // pred_fallthru
      _
    // Predicated region
    $region62: #{define_classifier_forward.1} parent=1 // pred_check
      _
    $region63: #{define_classifier_forward.1} parent=1 // pred_check_branch
      %123 = sbr.rel (0) target = $region65
    $region64: #{define_classifier_forward.1} parent=1 // pred_region
      %124 = dma.done [#allocation11], 1024
    $region65: #{define_classifier_forward.1} parent=1 // pred_fallthru
      _
    %v126 = vld [vmem:[#allocation12] sm:$0xff]
    %v127 = vld [vmem:[#allocation12 + $0x8] sm:$0xff]
    %v128 = vld [vmem:[#allocation12 + $0x10] sm:$0xff]
    %v129 = vld [vmem:[#allocation12 + $0x18] sm:$0xff]
    %v130 = vld [vmem:[#allocation12 + $0x20] sm:$0xff]
    %v131 = vld [vmem:[#allocation12 + $0x28] sm:$0xff]
    %v132 = vld [vmem:[#allocation12 + $0x30] sm:$0xff]
    %v133 = vld [vmem:[#allocation12 + $0x38] sm:$0xff]
    %v134 = vld [vmem:[%s0] sm:$0xf]
    %v135 = vld [vmem:[%s0 + $0x4] sm:$0xf]
    %v136 = vld [vmem:[#allocation2] sm:$0xff]
    %v137 = vld [vmem:[#allocation2 + $0x8] sm:$0xff]
    %v138 = vld [vmem:[#allocation2 + $0x10] sm:$0xff]
    %v139 = vld [vmem:[#allocation2 + $0x18] sm:$0xff]
    %v140 = vld [vmem:[#allocation2 + $0x20] sm:$0xff]
    %v141 = vld [vmem:[#allocation2 + $0x28] sm:$0xff]
    %v142 = vld [vmem:[#allocation2 + $0x30] sm:$0xff]
    %v143 = vld [vmem:[#allocation2 + $0x38] sm:$0xff]
    %v144 = vld [vmem:[#allocation2 + $0x40] sm:$0xff]
    %v145 = vld [vmem:[#allocation2 + $0x48] sm:$0xff]
    %v146 = vld [vmem:[#allocation2 + $0x50] sm:$0xff]
    %v147 = vld [vmem:[#allocation2 + $0x58] sm:$0xff]
    %v148 = vld [vmem:[#allocation2 + $0x60] sm:$0xff]
    %v149 = vld [vmem:[#allocation2 + $0x68] sm:$0xff]
    %v150 = vld [vmem:[#allocation2 + $0x70] sm:$0xff]
    %v151 = vld [vmem:[#allocation2 + $0x78] sm:$0xff]
    %v152 = vld [vmem:[#allocation2 + $0x80] sm:$0xff]
    %v153 = vld [vmem:[#allocation2 + $0x88] sm:$0xff]
    %v154 = vld [vmem:[#allocation2 + $0x90] sm:$0xff]
    %v155 = vld [vmem:[#allocation2 + $0x98] sm:$0xff]
    %v156 = vld [vmem:[#allocation2 + $0xa0] sm:$0xff]
    %v157 = vld [vmem:[#allocation2 + $0xa8] sm:$0xff]
    %v158 = vld [vmem:[#allocation2 + $0xb0] sm:$0xff]
    %v159 = vld [vmem:[#allocation2 + $0xb8] sm:$0xff]
    %v160 = vld [vmem:[#allocation2 + $0xc0] sm:$0xff]
    %v161 = vld [vmem:[#allocation2 + $0xc8] sm:$0xff]
    %v162 = vld [vmem:[#allocation2 + $0xd0] sm:$0xff]
    %v163 = vld [vmem:[#allocation2 + $0xd8] sm:$0xff]
    %v164 = vld [vmem:[#allocation2 + $0xe0] sm:$0xff]
    %v165 = vld [vmem:[#allocation2 + $0xe8] sm:$0xff]
    %v166 = vld [vmem:[#allocation2 + $0xf0] sm:$0xff]
    %v167 = vld [vmem:[#allocation2 + $0xf8] sm:$0xff]
    %v168 = vld [vmem:[#allocation2 + $0x100] sm:$0xff]
    %v169 = vld [vmem:[#allocation2 + $0x108] sm:$0xff]
    %v170 = vld [vmem:[#allocation2 + $0x110] sm:$0xff]
    %v171 = vld [vmem:[#allocation2 + $0x118] sm:$0xff]
    %v172 = vld [vmem:[#allocation2 + $0x120] sm:$0xff]
    %v173 = vld [vmem:[#allocation2 + $0x128] sm:$0xff]
    %v174 = vld [vmem:[#allocation2 + $0x130] sm:$0xff]
    %v175 = vld [vmem:[#allocation2 + $0x138] sm:$0xff]
    %v176 = vld [vmem:[#allocation2 + $0x140] sm:$0xff]
    %v177 = vld [vmem:[#allocation2 + $0x148] sm:$0xff]
    %v178 = vld [vmem:[#allocation2 + $0x150] sm:$0xff]
    %v179 = vld [vmem:[#allocation2 + $0x158] sm:$0xff]
    %v180 = vld [vmem:[#allocation2 + $0x160] sm:$0xff]
    %v181 = vld [vmem:[#allocation2 + $0x168] sm:$0xff]
    %v182 = vld [vmem:[#allocation2 + $0x170] sm:$0xff]
    %v183 = vld [vmem:[#allocation2 + $0x178] sm:$0xff]
    %v184 = vld [vmem:[#allocation2 + $0x180] sm:$0xff]
    %v185 = vld [vmem:[#allocation2 + $0x188] sm:$0xff]
    %v186 = vld [vmem:[#allocation2 + $0x190] sm:$0xff]
    %v187 = vld [vmem:[#allocation2 + $0x198] sm:$0xff]
    %v188 = vld [vmem:[#allocation2 + $0x1a0] sm:$0xff]
    %v189 = vld [vmem:[#allocation2 + $0x1a8] sm:$0xff]
    %v190 = vld [vmem:[#allocation2 + $0x1b0] sm:$0xff]
    %v191 = vld [vmem:[#allocation2 + $0x1b8] sm:$0xff]
    %v192 = vld [vmem:[#allocation2 + $0x1c0] sm:$0xff]
    %v193 = vld [vmem:[#allocation2 + $0x1c8] sm:$0xff]
    %v194 = vld [vmem:[#allocation2 + $0x1d0] sm:$0xff]
    %v195 = vld [vmem:[#allocation2 + $0x1d8] sm:$0xff]
    %v196 = vld [vmem:[#allocation2 + $0x1e0] sm:$0xff]
    %v197 = vld [vmem:[#allocation2 + $0x1e8] sm:$0xff]
    %v198 = vld [vmem:[#allocation2 + $0x1f0] sm:$0xff]
    %v199 = vld [vmem:[#allocation2 + $0x1f8] sm:$0xff]
    %v200 = vlaneseq
    %v201 = vshrl.u32 %v200, 7
    %v202 = vsub.s32 0, %v201
    %v203 = vrot.slane %v126, %v202
    %v204 = vlaneseq
    %v205 = vshrl.u32 %v204, 7
    %v206 = vsub.s32 0, %v205
    %v207 = vrot.slane %v127, %v206
    %v208 = vlaneseq
    %v209 = vshrl.u32 %v208, 7
    %v210 = vsub.s32 0, %v209
    %v211 = vrot.slane %v128, %v210
    %v212 = vlaneseq
    %v213 = vshrl.u32 %v212, 7
    %v214 = vsub.s32 0, %v213
    %v215 = vrot.slane %v129, %v214
    %v216 = vlaneseq
    %v217 = vshrl.u32 %v216, 7
    %v218 = vsub.s32 0, %v217
    %v219 = vrot.slane %v130, %v218
    %v220 = vlaneseq
    %v221 = vshrl.u32 %v220, 7
    %v222 = vsub.s32 0, %v221
    %v223 = vrot.slane %v131, %v222
    %v224 = vlaneseq
    %v225 = vshrl.u32 %v224, 7
    %v226 = vsub.s32 0, %v225
    %v227 = vrot.slane %v132, %v226
    %v228 = vlaneseq
    %v229 = vshrl.u32 %v228, 7
    %v230 = vsub.s32 0, %v229
    %v231 = vrot.slane %v133, %v230
    %v234 = vunpack.c.l.b16 %v134
    %v235 = vunpack.c.l.b16 %v135
    %v236 = vpack.c.b16 %v235, %v234
    %v302 = vunpack.c.l.b16 %v136
    %v303 = vunpack.c.h.b16 %v136
    %v304 = vunpack.c.l.b16 %v137
    %v305 = vunpack.c.h.b16 %v137
    %v306 = vunpack.c.l.b16 %v138
    %v307 = vunpack.c.h.b16 %v138
    %v308 = vunpack.c.l.b16 %v139
    %v309 = vunpack.c.h.b16 %v139
    %v310 = vunpack.c.l.b16 %v140
    %v311 = vunpack.c.h.b16 %v140
    %v312 = vunpack.c.l.b16 %v141
    %v313 = vunpack.c.h.b16 %v141
    %v314 = vunpack.c.l.b16 %v142
    %v315 = vunpack.c.h.b16 %v142
    %v316 = vunpack.c.l.b16 %v143
    %v317 = vunpack.c.h.b16 %v143
    %v318 = vunpack.c.l.b16 %v144
    %v319 = vunpack.c.h.b16 %v144
    %v320 = vunpack.c.l.b16 %v145
    %v321 = vunpack.c.h.b16 %v145
    %v322 = vunpack.c.l.b16 %v146
    %v323 = vunpack.c.h.b16 %v146
    %v324 = vunpack.c.l.b16 %v147
    %v325 = vunpack.c.h.b16 %v147
    %v326 = vunpack.c.l.b16 %v148
    %v327 = vunpack.c.h.b16 %v148
    %v328 = vunpack.c.l.b16 %v149
    %v329 = vunpack.c.h.b16 %v149
    %v330 = vunpack.c.l.b16 %v150
    %v331 = vunpack.c.h.b16 %v150
    %v332 = vunpack.c.l.b16 %v151
    %v333 = vunpack.c.h.b16 %v151
    %v334 = vunpack.c.l.b16 %v152
    %v335 = vunpack.c.h.b16 %v152
    %v336 = vunpack.c.l.b16 %v153
    %v337 = vunpack.c.h.b16 %v153
    %v338 = vunpack.c.l.b16 %v154
    %v339 = vunpack.c.h.b16 %v154
    %v340 = vunpack.c.l.b16 %v155
    %v341 = vunpack.c.h.b16 %v155
    %v342 = vunpack.c.l.b16 %v156
    %v343 = vunpack.c.h.b16 %v156
    %v344 = vunpack.c.l.b16 %v157
    %v345 = vunpack.c.h.b16 %v157
    %v346 = vunpack.c.l.b16 %v158
    %v347 = vunpack.c.h.b16 %v158
    %v348 = vunpack.c.l.b16 %v159
    %v349 = vunpack.c.h.b16 %v159
    %v350 = vunpack.c.l.b16 %v160
    %v351 = vunpack.c.h.b16 %v160
    %v352 = vunpack.c.l.b16 %v161
    %v353 = vunpack.c.h.b16 %v161
    %v354 = vunpack.c.l.b16 %v162
    %v355 = vunpack.c.h.b16 %v162
    %v356 = vunpack.c.l.b16 %v163
    %v357 = vunpack.c.h.b16 %v163
    %v358 = vunpack.c.l.b16 %v164
    %v359 = vunpack.c.h.b16 %v164
    %v360 = vunpack.c.l.b16 %v165
    %v361 = vunpack.c.h.b16 %v165
    %v362 = vunpack.c.l.b16 %v166
    %v363 = vunpack.c.h.b16 %v166
    %v364 = vunpack.c.l.b16 %v167
    %v365 = vunpack.c.h.b16 %v167
    %v366 = vunpack.c.l.b16 %v168
    %v367 = vunpack.c.h.b16 %v168
    %v368 = vunpack.c.l.b16 %v169
    %v369 = vunpack.c.h.b16 %v169
    %v370 = vunpack.c.l.b16 %v170
    %v371 = vunpack.c.h.b16 %v170
    %v372 = vunpack.c.l.b16 %v171
    %v373 = vunpack.c.h.b16 %v171
    %v374 = vunpack.c.l.b16 %v172
    %v375 = vunpack.c.h.b16 %v172
    %v376 = vunpack.c.l.b16 %v173
    %v377 = vunpack.c.h.b16 %v173
    %v378 = vunpack.c.l.b16 %v174
    %v379 = vunpack.c.h.b16 %v174
    %v380 = vunpack.c.l.b16 %v175
    %v381 = vunpack.c.h.b16 %v175
    %v382 = vunpack.c.l.b16 %v176
    %v383 = vunpack.c.h.b16 %v176
    %v384 = vunpack.c.l.b16 %v177
    %v385 = vunpack.c.h.b16 %v177
    %v386 = vunpack.c.l.b16 %v178
    %v387 = vunpack.c.h.b16 %v178
    %v388 = vunpack.c.l.b16 %v179
    %v389 = vunpack.c.h.b16 %v179
    %v390 = vunpack.c.l.b16 %v180
    %v391 = vunpack.c.h.b16 %v180
    %v392 = vunpack.c.l.b16 %v181
    %v393 = vunpack.c.h.b16 %v181
    %v394 = vunpack.c.l.b16 %v182
    %v395 = vunpack.c.h.b16 %v182
    %v396 = vunpack.c.l.b16 %v183
    %v397 = vunpack.c.h.b16 %v183
    %v398 = vunpack.c.l.b16 %v184
    %v399 = vunpack.c.h.b16 %v184
    %v400 = vunpack.c.l.b16 %v185
    %v401 = vunpack.c.h.b16 %v185
    %v402 = vunpack.c.l.b16 %v186
    %v403 = vunpack.c.h.b16 %v186
    %v404 = vunpack.c.l.b16 %v187
    %v405 = vunpack.c.h.b16 %v187
    %v406 = vunpack.c.l.b16 %v188
    %v407 = vunpack.c.h.b16 %v188
    %v408 = vunpack.c.l.b16 %v189
    %v409 = vunpack.c.h.b16 %v189
    %v410 = vunpack.c.l.b16 %v190
    %v411 = vunpack.c.h.b16 %v190
    %v412 = vunpack.c.l.b16 %v191
    %v413 = vunpack.c.h.b16 %v191
    %v414 = vunpack.c.l.b16 %v192
    %v415 = vunpack.c.h.b16 %v192
    %v416 = vunpack.c.l.b16 %v193
    %v417 = vunpack.c.h.b16 %v193
    %v418 = vunpack.c.l.b16 %v194
    %v419 = vunpack.c.h.b16 %v194
    %v420 = vunpack.c.l.b16 %v195
    %v421 = vunpack.c.h.b16 %v195
    %v422 = vunpack.c.l.b16 %v196
    %v423 = vunpack.c.h.b16 %v196
    %v424 = vunpack.c.l.b16 %v197
    %v425 = vunpack.c.h.b16 %v197
    %v426 = vunpack.c.l.b16 %v198
    %v427 = vunpack.c.h.b16 %v198
    %v428 = vunpack.c.l.b16 %v199
    %v429 = vunpack.c.h.b16 %v199
    %v430 = vpack.c.b16 %v310, %v302
    %v431 = vpack.c.b16 %v311, %v303
    %v432 = vpack.c.b16 %v312, %v304
    %v433 = vpack.c.b16 %v313, %v305
    %v434 = vpack.c.b16 %v314, %v306
    %v435 = vpack.c.b16 %v315, %v307
    %v436 = vpack.c.b16 %v316, %v308
    %v437 = vpack.c.b16 %v317, %v309
    %v438 = vpack.c.b16 %v326, %v318
    %v439 = vpack.c.b16 %v327, %v319
    %v440 = vpack.c.b16 %v328, %v320
    %v441 = vpack.c.b16 %v329, %v321
    %v442 = vpack.c.b16 %v330, %v322
    %v443 = vpack.c.b16 %v331, %v323
    %v444 = vpack.c.b16 %v332, %v324
    %v445 = vpack.c.b16 %v333, %v325
    %v446 = vpack.c.b16 %v342, %v334
    %v447 = vpack.c.b16 %v343, %v335
    %v448 = vpack.c.b16 %v344, %v336
    %v449 = vpack.c.b16 %v345, %v337
    %v450 = vpack.c.b16 %v346, %v338
    %v451 = vpack.c.b16 %v347, %v339
    %v452 = vpack.c.b16 %v348, %v340
    %v453 = vpack.c.b16 %v349, %v341
    %v454 = vpack.c.b16 %v358, %v350
    %v455 = vpack.c.b16 %v359, %v351
    %v456 = vpack.c.b16 %v360, %v352
    %v457 = vpack.c.b16 %v361, %v353
    %v458 = vpack.c.b16 %v362, %v354
    %v459 = vpack.c.b16 %v363, %v355
    %v460 = vpack.c.b16 %v364, %v356
    %v461 = vpack.c.b16 %v365, %v357
    %v462 = vpack.c.b16 %v374, %v366
    %v463 = vpack.c.b16 %v375, %v367
    %v464 = vpack.c.b16 %v376, %v368
    %v465 = vpack.c.b16 %v377, %v369
    %v466 = vpack.c.b16 %v378, %v370
    %v467 = vpack.c.b16 %v379, %v371
    %v468 = vpack.c.b16 %v380, %v372
    %v469 = vpack.c.b16 %v381, %v373
    %v470 = vpack.c.b16 %v390, %v382
    %v471 = vpack.c.b16 %v391, %v383
    %v472 = vpack.c.b16 %v392, %v384
    %v473 = vpack.c.b16 %v393, %v385
    %v474 = vpack.c.b16 %v394, %v386
    %v475 = vpack.c.b16 %v395, %v387
    %v476 = vpack.c.b16 %v396, %v388
    %v477 = vpack.c.b16 %v397, %v389
    %v478 = vpack.c.b16 %v406, %v398
    %v479 = vpack.c.b16 %v407, %v399
    %v480 = vpack.c.b16 %v408, %v400
    %v481 = vpack.c.b16 %v409, %v401
    %v482 = vpack.c.b16 %v410, %v402
    %v483 = vpack.c.b16 %v411, %v403
    %v484 = vpack.c.b16 %v412, %v404
    %v485 = vpack.c.b16 %v413, %v405
    %v486 = vpack.c.b16 %v422, %v414
    %v487 = vpack.c.b16 %v423, %v415
    %v488 = vpack.c.b16 %v424, %v416
    %v489 = vpack.c.b16 %v425, %v417
    %v490 = vpack.c.b16 %v426, %v418
    %v491 = vpack.c.b16 %v427, %v419
    %v492 = vpack.c.b16 %v428, %v420
    %v493 = vpack.c.b16 %v429, %v421
    %558 = vmatprep.subr.bf16.mxu0 %v431
    %559 = vmatpush1.bf16.msra.mxu0 %v430
    %560 = vmatprep.subr.bf16.mxu0 %v439
    %561 = vmatpush1.bf16.msra.mxu0 %v438
    %562 = vmatprep.subr.bf16.mxu0 %v447
    %563 = vmatpush1.bf16.msra.mxu0 %v446
    %564 = vmatprep.subr.bf16.mxu0 %v455
    %565 = vmatpush1.bf16.msra.mxu0 %v454
    %566 = vmatprep.subr.bf16.mxu0 %v463
    %567 = vmatpush1.bf16.msra.mxu0 %v462
    %568 = vmatprep.subr.bf16.mxu0 %v471
    %569 = vmatpush1.bf16.msra.mxu0 %v470
    %570 = vmatprep.subr.bf16.mxu0 %v479
    %571 = vmatpush1.bf16.msra.mxu0 %v478
    %572 = vmatprep.subr.bf16.mxu0 %v487
    %573 = vmatpush1.bf16.msra.mxu0 %v486
    %574 = vmatprep.subr.bf16.mxu0 0
    %575 = vmatpush1.bf16.msra.mxu0 0
    %576 = vmatprep.subr.bf16.mxu0 0
    %577 = vmatpush1.bf16.msra.mxu0 0
    %578 = vmatprep.subr.bf16.mxu0 0
    %579 = vmatpush1.bf16.msra.mxu0 0
    %580 = vmatprep.subr.bf16.mxu0 0
    %581 = vmatpush1.bf16.msra.mxu0 0
    %582 = vmatprep.subr.bf16.mxu0 0
    %583 = vmatpush1.bf16.msra.mxu0 0
    %584 = vmatprep.subr.bf16.mxu0 0
    %585 = vmatpush1.bf16.msra.mxu0 0
    %586 = vmatprep.subr.bf16.mxu0 0
    %587 = vmatpush1.bf16.msra.mxu0 0
    %588 = vmatprep.subr.bf16.mxu0 0
    %589 = vmatpush1.bf16.msra.mxu0 0
    %590 = vmatprep.mubr.bf16.mxu0 0
    %591 = vmatmul.mubr.bf16.gmra.mrb[0].mxu0 %v236
    %v592 = vpop.f32.mrb[0].mxu0
    %v593 = vadd.f32 %v203, %v592
    %v594 = vpop.f32.mrb[0].mxu0
    %v595 = vadd.f32 %v207, %v594
    %v596 = vpop.f32.mrb[0].mxu0
    %v597 = vadd.f32 %v203, %v596
    %v598 = vpop.f32.mrb[0].mxu0
    %v599 = vadd.f32 %v207, %v598
    %600 = vdwg.mxu0
    %601 = vmatprep.subr.bf16.mxu0 %v433
    %602 = vmatpush1.bf16.msra.mxu0 %v432
    %603 = vmatprep.subr.bf16.mxu0 %v441
    %604 = vmatpush1.bf16.msra.mxu0 %v440
    %605 = vmatprep.subr.bf16.mxu0 %v449
    %606 = vmatpush1.bf16.msra.mxu0 %v448
    %607 = vmatprep.subr.bf16.mxu0 %v457
    %608 = vmatpush1.bf16.msra.mxu0 %v456
    %609 = vmatprep.subr.bf16.mxu0 %v465
    %610 = vmatpush1.bf16.msra.mxu0 %v464
    %611 = vmatprep.subr.bf16.mxu0 %v473
    %612 = vmatpush1.bf16.msra.mxu0 %v472
    %613 = vmatprep.subr.bf16.mxu0 %v481
    %614 = vmatpush1.bf16.msra.mxu0 %v480
    %615 = vmatprep.subr.bf16.mxu0 %v489
    %616 = vmatpush1.bf16.msra.mxu0 %v488
    %617 = vmatprep.subr.bf16.mxu0 0
    %618 = vmatpush1.bf16.msra.mxu0 0
    %619 = vmatprep.subr.bf16.mxu0 0
    %620 = vmatpush1.bf16.msra.mxu0 0
    %621 = vmatprep.subr.bf16.mxu0 0
    %622 = vmatpush1.bf16.msra.mxu0 0
    %623 = vmatprep.subr.bf16.mxu0 0
    %624 = vmatpush1.bf16.msra.mxu0 0
    %625 = vmatprep.subr.bf16.mxu0 0
    %626 = vmatpush1.bf16.msra.mxu0 0
    %627 = vmatprep.subr.bf16.mxu0 0
    %628 = vmatpush1.bf16.msra.mxu0 0
    %629 = vmatprep.subr.bf16.mxu0 0
    %630 = vmatpush1.bf16.msra.mxu0 0
    %631 = vmatprep.subr.bf16.mxu0 0
    %632 = vmatpush1.bf16.msra.mxu0 0
    %633 = vmatprep.mubr.bf16.mxu0 0
    %634 = vmatmul.mubr.bf16.gmra.mrb[0].mxu0 %v236
    %v635 = vpop.f32.mrb[0].mxu0
    %v636 = vadd.f32 %v211, %v635
    %v637 = vpop.f32.mrb[0].mxu0
    %v638 = vadd.f32 %v215, %v637
    %v639 = vpop.f32.mrb[0].mxu0
    %v640 = vadd.f32 %v211, %v639
    %v641 = vpop.f32.mrb[0].mxu0
    %v642 = vadd.f32 %v215, %v641
    %643 = vdwg.mxu0
    %644 = vmatprep.subr.bf16.mxu0 %v435
    %645 = vmatpush1.bf16.msra.mxu0 %v434
    %646 = vmatprep.subr.bf16.mxu0 %v443
    %647 = vmatpush1.bf16.msra.mxu0 %v442
    %648 = vmatprep.subr.bf16.mxu0 %v451
    %649 = vmatpush1.bf16.msra.mxu0 %v450
    %650 = vmatprep.subr.bf16.mxu0 %v459
    %651 = vmatpush1.bf16.msra.mxu0 %v458
    %652 = vmatprep.subr.bf16.mxu0 %v467
    %653 = vmatpush1.bf16.msra.mxu0 %v466
    %654 = vmatprep.subr.bf16.mxu0 %v475
    %655 = vmatpush1.bf16.msra.mxu0 %v474
    %656 = vmatprep.subr.bf16.mxu0 %v483
    %657 = vmatpush1.bf16.msra.mxu0 %v482
    %658 = vmatprep.subr.bf16.mxu0 %v491
    %659 = vmatpush1.bf16.msra.mxu0 %v490
    %660 = vmatprep.subr.bf16.mxu0 0
    %661 = vmatpush1.bf16.msra.mxu0 0
    %662 = vmatprep.subr.bf16.mxu0 0
    %663 = vmatpush1.bf16.msra.mxu0 0
    %664 = vmatprep.subr.bf16.mxu0 0
    %665 = vmatpush1.bf16.msra.mxu0 0
    %666 = vmatprep.subr.bf16.mxu0 0
    %667 = vmatpush1.bf16.msra.mxu0 0
    %668 = vmatprep.subr.bf16.mxu0 0
    %669 = vmatpush1.bf16.msra.mxu0 0
    %670 = vmatprep.subr.bf16.mxu0 0
    %671 = vmatpush1.bf16.msra.mxu0 0
    %672 = vmatprep.subr.bf16.mxu0 0
    %673 = vmatpush1.bf16.msra.mxu0 0
    %674 = vmatprep.subr.bf16.mxu0 0
    %675 = vmatpush1.bf16.msra.mxu0 0
    %676 = vmatprep.mubr.bf16.mxu0 0
    %677 = vmatmul.mubr.bf16.gmra.mrb[0].mxu0 %v236
    %v678 = vpop.f32.mrb[0].mxu0
    %v679 = vadd.f32 %v219, %v678
    %v680 = vpop.f32.mrb[0].mxu0
    %v681 = vadd.f32 %v223, %v680
    %v682 = vpop.f32.mrb[0].mxu0
    %v683 = vadd.f32 %v219, %v682
    %v684 = vpop.f32.mrb[0].mxu0
    %v685 = vadd.f32 %v223, %v684
    %686 = vdwg.mxu0
    %687 = vmatprep.subr.bf16.mxu0 %v437
    %688 = vmatpush1.bf16.msra.mxu0 %v436
    %689 = vmatprep.subr.bf16.mxu0 %v445
    %690 = vmatpush1.bf16.msra.mxu0 %v444
    %691 = vmatprep.subr.bf16.mxu0 %v453
    %692 = vmatpush1.bf16.msra.mxu0 %v452
    %693 = vmatprep.subr.bf16.mxu0 %v461
    %694 = vmatpush1.bf16.msra.mxu0 %v460
    %695 = vmatprep.subr.bf16.mxu0 %v469
    %696 = vmatpush1.bf16.msra.mxu0 %v468
    %697 = vmatprep.subr.bf16.mxu0 %v477
    %698 = vmatpush1.bf16.msra.mxu0 %v476
    %699 = vmatprep.subr.bf16.mxu0 %v485
    %700 = vmatpush1.bf16.msra.mxu0 %v484
    %701 = vmatprep.subr.bf16.mxu0 %v493
    %702 = vmatpush1.bf16.msra.mxu0 %v492
    %703 = vmatprep.subr.bf16.mxu0 0
    %704 = vmatpush1.bf16.msra.mxu0 0
    %705 = vmatprep.subr.bf16.mxu0 0
    %706 = vmatpush1.bf16.msra.mxu0 0
    %707 = vmatprep.subr.bf16.mxu0 0
    %708 = vmatpush1.bf16.msra.mxu0 0
    %709 = vmatprep.subr.bf16.mxu0 0
    %710 = vmatpush1.bf16.msra.mxu0 0
    %711 = vmatprep.subr.bf16.mxu0 0
    %712 = vmatpush1.bf16.msra.mxu0 0
    %713 = vmatprep.subr.bf16.mxu0 0
    %714 = vmatpush1.bf16.msra.mxu0 0
    %715 = vmatprep.subr.bf16.mxu0 0
    %716 = vmatpush1.bf16.msra.mxu0 0
    %717 = vmatprep.subr.bf16.mxu0 0
    %718 = vmatpush1.bf16.msra.mxu0 0
    %719 = vmatprep.mubr.bf16.mxu0 0
    %720 = vmatmul.mubr.bf16.gmra.mrb[0].mxu0 %v236
    %v721 = vpop.f32.mrb[0].mxu0
    %v722 = vadd.f32 %v227, %v721
    %v723 = vpop.f32.mrb[0].mxu0
    %v724 = vadd.f32 %v231, %v723
    %v725 = vpop.f32.mrb[0].mxu0
    %v726 = vadd.f32 %v227, %v725
    %v727 = vpop.f32.mrb[0].mxu0
    %v728 = vadd.f32 %v231, %v727
    %729 = vdwg.mxu0
    %v730 = vmax.f32 %v593, 0.0
    %v731 = vmax.f32 %v595, 0.0
    %v732 = vmax.f32 %v636, 0.0
    %v733 = vmax.f32 %v638, 0.0
    %v734 = vmax.f32 %v679, 0.0
    %v735 = vmax.f32 %v681, 0.0
    %v736 = vmax.f32 %v722, 0.0
    %v737 = vmax.f32 %v724, 0.0
    %v738 = vmax.f32 %v597, 0.0
    %v739 = vmax.f32 %v599, 0.0
    %v740 = vmax.f32 %v640, 0.0
    %v741 = vmax.f32 %v642, 0.0
    %v742 = vmax.f32 %v683, 0.0
    %v743 = vmax.f32 %v685, 0.0
    %v744 = vmax.f32 %v726, 0.0
    %v745 = vmax.f32 %v728, 0.0
    %v746 = vpack.c.bf16 %v738, %v730
    %v747 = vpack.c.bf16 %v739, %v731
    %v748 = vpack.c.bf16 %v740, %v732
    %v749 = vpack.c.bf16 %v741, %v733
    %v750 = vpack.c.bf16 %v742, %v734
    %v751 = vpack.c.bf16 %v743, %v735
    %v752 = vpack.c.bf16 %v744, %v736
    %v753 = vpack.c.bf16 %v745, %v737
    %v754 = vld [vmem:[#allocation4] sm:$0xff]
    %v755 = vld [vmem:[#allocation4 + $0x8] sm:$0xff]
    %v756 = vld [vmem:[#allocation4 + $0x10] sm:$0xff]
    %v757 = vld [vmem:[#allocation4 + $0x18] sm:$0xff]
    %v758 = vld [vmem:[#allocation4 + $0x20] sm:$0xff]
    %v759 = vld [vmem:[#allocation4 + $0x28] sm:$0xff]
    %v760 = vld [vmem:[#allocation4 + $0x30] sm:$0xff]
    %v761 = vld [vmem:[#allocation4 + $0x38] sm:$0xff]
    %v762 = vld [vmem:[#allocation4 + $0x40] sm:$0xff]
    %v763 = vld [vmem:[#allocation4 + $0x48] sm:$0xff]
    %v764 = vld [vmem:[#allocation4 + $0x50] sm:$0xff]
    %v765 = vld [vmem:[#allocation4 + $0x58] sm:$0xff]
    %v766 = vld [vmem:[#allocation4 + $0x60] sm:$0xff]
    %v767 = vld [vmem:[#allocation4 + $0x68] sm:$0xff]
    %v768 = vld [vmem:[#allocation4 + $0x70] sm:$0xff]
    %v769 = vld [vmem:[#allocation4 + $0x78] sm:$0xff]
    %v770 = vld [vmem:[#allocation4 + $0x80] sm:$0xff]
    %v771 = vld [vmem:[#allocation4 + $0x88] sm:$0xff]
    %v772 = vld [vmem:[#allocation4 + $0x90] sm:$0xff]
    %v773 = vld [vmem:[#allocation4 + $0x98] sm:$0xff]
    %v774 = vld [vmem:[#allocation4 + $0xa0] sm:$0xff]
    %v775 = vld [vmem:[#allocation4 + $0xa8] sm:$0xff]
    %v776 = vld [vmem:[#allocation4 + $0xb0] sm:$0xff]
    %v777 = vld [vmem:[#allocation4 + $0xb8] sm:$0xff]
    %v778 = vld [vmem:[#allocation4 + $0xc0] sm:$0xff]
    %v779 = vld [vmem:[#allocation4 + $0xc8] sm:$0xff]
    %v780 = vld [vmem:[#allocation4 + $0xd0] sm:$0xff]
    %v781 = vld [vmem:[#allocation4 + $0xd8] sm:$0xff]
    %v782 = vld [vmem:[#allocation4 + $0xe0] sm:$0xff]
    %v783 = vld [vmem:[#allocation4 + $0xe8] sm:$0xff]
    %v784 = vld [vmem:[#allocation4 + $0xf0] sm:$0xff]
    %v785 = vld [vmem:[#allocation4 + $0xf8] sm:$0xff]
    %v786 = vld [vmem:[#allocation4 + $0x100] sm:$0xff]
    %v787 = vld [vmem:[#allocation4 + $0x108] sm:$0xff]
    %v788 = vld [vmem:[#allocation4 + $0x110] sm:$0xff]
    %v789 = vld [vmem:[#allocation4 + $0x118] sm:$0xff]
    %v790 = vld [vmem:[#allocation4 + $0x120] sm:$0xff]
    %v791 = vld [vmem:[#allocation4 + $0x128] sm:$0xff]
    %v792 = vld [vmem:[#allocation4 + $0x130] sm:$0xff]
    %v793 = vld [vmem:[#allocation4 + $0x138] sm:$0xff]
    %v794 = vld [vmem:[#allocation4 + $0x140] sm:$0xff]
    %v795 = vld [vmem:[#allocation4 + $0x148] sm:$0xff]
    %v796 = vld [vmem:[#allocation4 + $0x150] sm:$0xff]
    %v797 = vld [vmem:[#allocation4 + $0x158] sm:$0xff]
    %v798 = vld [vmem:[#allocation4 + $0x160] sm:$0xff]
    %v799 = vld [vmem:[#allocation4 + $0x168] sm:$0xff]
    %v800 = vld [vmem:[#allocation4 + $0x170] sm:$0xff]
    %v801 = vld [vmem:[#allocation4 + $0x178] sm:$0xff]
    %v802 = vld [vmem:[#allocation4 + $0x180] sm:$0xff]
    %v803 = vld [vmem:[#allocation4 + $0x188] sm:$0xff]
    %v804 = vld [vmem:[#allocation4 + $0x190] sm:$0xff]
    %v805 = vld [vmem:[#allocation4 + $0x198] sm:$0xff]
    %v806 = vld [vmem:[#allocation4 + $0x1a0] sm:$0xff]
    %v807 = vld [vmem:[#allocation4 + $0x1a8] sm:$0xff]
    %v808 = vld [vmem:[#allocation4 + $0x1b0] sm:$0xff]
    %v809 = vld [vmem:[#allocation4 + $0x1b8] sm:$0xff]
    %v810 = vld [vmem:[#allocation4 + $0x1c0] sm:$0xff]
    %v811 = vld [vmem:[#allocation4 + $0x1c8] sm:$0xff]
    %v812 = vld [vmem:[#allocation4 + $0x1d0] sm:$0xff]
    %v813 = vld [vmem:[#allocation4 + $0x1d8] sm:$0xff]
    %v814 = vld [vmem:[#allocation4 + $0x1e0] sm:$0xff]
    %v815 = vld [vmem:[#allocation4 + $0x1e8] sm:$0xff]
    %v816 = vld [vmem:[#allocation4 + $0x1f0] sm:$0xff]
    %v817 = vld [vmem:[#allocation4 + $0x1f8] sm:$0xff]
    %v818 = vld [vmem:[#allocation4 + $0x200] sm:$0xff]
    %v819 = vld [vmem:[#allocation4 + $0x208] sm:$0xff]
    %v820 = vld [vmem:[#allocation4 + $0x210] sm:$0xff]
    %v821 = vld [vmem:[#allocation4 + $0x218] sm:$0xff]
    %v822 = vld [vmem:[#allocation4 + $0x220] sm:$0xff]
    %v823 = vld [vmem:[#allocation4 + $0x228] sm:$0xff]
    %v824 = vld [vmem:[#allocation4 + $0x230] sm:$0xff]
    %v825 = vld [vmem:[#allocation4 + $0x238] sm:$0xff]
    %v826 = vld [vmem:[#allocation4 + $0x240] sm:$0xff]
    %v827 = vld [vmem:[#allocation4 + $0x248] sm:$0xff]
    %v828 = vld [vmem:[#allocation4 + $0x250] sm:$0xff]
    %v829 = vld [vmem:[#allocation4 + $0x258] sm:$0xff]
    %v830 = vld [vmem:[#allocation4 + $0x260] sm:$0xff]
    %v831 = vld [vmem:[#allocation4 + $0x268] sm:$0xff]
    %v832 = vld [vmem:[#allocation4 + $0x270] sm:$0xff]
    %v833 = vld [vmem:[#allocation4 + $0x278] sm:$0xff]
    %v834 = vld [vmem:[#allocation4 + $0x280] sm:$0xff]
    %v835 = vld [vmem:[#allocation4 + $0x288] sm:$0xff]
    %v836 = vld [vmem:[#allocation4 + $0x290] sm:$0xff]
    %v837 = vld [vmem:[#allocation4 + $0x298] sm:$0xff]
    %v838 = vld [vmem:[#allocation4 + $0x2a0] sm:$0xff]
    %v839 = vld [vmem:[#allocation4 + $0x2a8] sm:$0xff]
    %v840 = vld [vmem:[#allocation4 + $0x2b0] sm:$0xff]
    %v841 = vld [vmem:[#allocation4 + $0x2b8] sm:$0xff]
    %v842 = vld [vmem:[#allocation4 + $0x2c0] sm:$0xff]
    %v843 = vld [vmem:[#allocation4 + $0x2c8] sm:$0xff]
    %v844 = vld [vmem:[#allocation4 + $0x2d0] sm:$0xff]
    %v845 = vld [vmem:[#allocation4 + $0x2d8] sm:$0xff]
    %v846 = vld [vmem:[#allocation4 + $0x2e0] sm:$0xff]
    %v847 = vld [vmem:[#allocation4 + $0x2e8] sm:$0xff]
    %v848 = vld [vmem:[#allocation4 + $0x2f0] sm:$0xff]
    %v849 = vld [vmem:[#allocation4 + $0x2f8] sm:$0xff]
    %v850 = vld [vmem:[#allocation4 + $0x300] sm:$0xff]
    %v851 = vld [vmem:[#allocation4 + $0x308] sm:$0xff]
    %v852 = vld [vmem:[#allocation4 + $0x310] sm:$0xff]
    %v853 = vld [vmem:[#allocation4 + $0x318] sm:$0xff]
    %v854 = vld [vmem:[#allocation4 + $0x320] sm:$0xff]
    %v855 = vld [vmem:[#allocation4 + $0x328] sm:$0xff]
    %v856 = vld [vmem:[#allocation4 + $0x330] sm:$0xff]
    %v857 = vld [vmem:[#allocation4 + $0x338] sm:$0xff]
    %v858 = vld [vmem:[#allocation4 + $0x340] sm:$0xff]
    %v859 = vld [vmem:[#allocation4 + $0x348] sm:$0xff]
    %v860 = vld [vmem:[#allocation4 + $0x350] sm:$0xff]
    %v861 = vld [vmem:[#allocation4 + $0x358] sm:$0xff]
    %v862 = vld [vmem:[#allocation4 + $0x360] sm:$0xff]
    %v863 = vld [vmem:[#allocation4 + $0x368] sm:$0xff]
    %v864 = vld [vmem:[#allocation4 + $0x370] sm:$0xff]
    %v865 = vld [vmem:[#allocation4 + $0x378] sm:$0xff]
    %v866 = vld [vmem:[#allocation4 + $0x380] sm:$0xff]
    %v867 = vld [vmem:[#allocation4 + $0x388] sm:$0xff]
    %v868 = vld [vmem:[#allocation4 + $0x390] sm:$0xff]
    %v869 = vld [vmem:[#allocation4 + $0x398] sm:$0xff]
    %v870 = vld [vmem:[#allocation4 + $0x3a0] sm:$0xff]
    %v871 = vld [vmem:[#allocation4 + $0x3a8] sm:$0xff]
    %v872 = vld [vmem:[#allocation4 + $0x3b0] sm:$0xff]
    %v873 = vld [vmem:[#allocation4 + $0x3b8] sm:$0xff]
    %v874 = vld [vmem:[#allocation4 + $0x3c0] sm:$0xff]
    %v875 = vld [vmem:[#allocation4 + $0x3c8] sm:$0xff]
    %v876 = vld [vmem:[#allocation4 + $0x3d0] sm:$0xff]
    %v877 = vld [vmem:[#allocation4 + $0x3d8] sm:$0xff]
    %v878 = vld [vmem:[#allocation4 + $0x3e0] sm:$0xff]
    %v879 = vld [vmem:[#allocation4 + $0x3e8] sm:$0xff]
    %v880 = vld [vmem:[#allocation4 + $0x3f0] sm:$0xff]
    %v881 = vld [vmem:[#allocation4 + $0x3f8] sm:$0xff]
    %v882 = vld [vmem:[#allocation4 + $0x400] sm:$0xff]
    %v883 = vld [vmem:[#allocation4 + $0x408] sm:$0xff]
    %v884 = vld [vmem:[#allocation4 + $0x410] sm:$0xff]
    %v885 = vld [vmem:[#allocation4 + $0x418] sm:$0xff]
    %v886 = vld [vmem:[#allocation4 + $0x420] sm:$0xff]
    %v887 = vld [vmem:[#allocation4 + $0x428] sm:$0xff]
    %v888 = vld [vmem:[#allocation4 + $0x430] sm:$0xff]
    %v889 = vld [vmem:[#allocation4 + $0x438] sm:$0xff]
    %v890 = vld [vmem:[#allocation4 + $0x440] sm:$0xff]
    %v891 = vld [vmem:[#allocation4 + $0x448] sm:$0xff]
    %v892 = vld [vmem:[#allocation4 + $0x450] sm:$0xff]
    %v893 = vld [vmem:[#allocation4 + $0x458] sm:$0xff]
    %v894 = vld [vmem:[#allocation4 + $0x460] sm:$0xff]
    %v895 = vld [vmem:[#allocation4 + $0x468] sm:$0xff]
    %v896 = vld [vmem:[#allocation4 + $0x470] sm:$0xff]
    %v897 = vld [vmem:[#allocation4 + $0x478] sm:$0xff]
    %v898 = vld [vmem:[#allocation4 + $0x480] sm:$0xff]
    %v899 = vld [vmem:[#allocation4 + $0x488] sm:$0xff]
    %v900 = vld [vmem:[#allocation4 + $0x490] sm:$0xff]
    %v901 = vld [vmem:[#allocation4 + $0x498] sm:$0xff]
    %v902 = vld [vmem:[#allocation4 + $0x4a0] sm:$0xff]
    %v903 = vld [vmem:[#allocation4 + $0x4a8] sm:$0xff]
    %v904 = vld [vmem:[#allocation4 + $0x4b0] sm:$0xff]
    %v905 = vld [vmem:[#allocation4 + $0x4b8] sm:$0xff]
    %v906 = vld [vmem:[#allocation4 + $0x4c0] sm:$0xff]
    %v907 = vld [vmem:[#allocation4 + $0x4c8] sm:$0xff]
    %v908 = vld [vmem:[#allocation4 + $0x4d0] sm:$0xff]
    %v909 = vld [vmem:[#allocation4 + $0x4d8] sm:$0xff]
    %v910 = vld [vmem:[#allocation4 + $0x4e0] sm:$0xff]
    %v911 = vld [vmem:[#allocation4 + $0x4e8] sm:$0xff]
    %v912 = vld [vmem:[#allocation4 + $0x4f0] sm:$0xff]
    %v913 = vld [vmem:[#allocation4 + $0x4f8] sm:$0xff]
    %v914 = vld [vmem:[#allocation4 + $0x500] sm:$0xff]
    %v915 = vld [vmem:[#allocation4 + $0x508] sm:$0xff]
    %v916 = vld [vmem:[#allocation4 + $0x510] sm:$0xff]
    %v917 = vld [vmem:[#allocation4 + $0x518] sm:$0xff]
    %v918 = vld [vmem:[#allocation4 + $0x520] sm:$0xff]
    %v919 = vld [vmem:[#allocation4 + $0x528] sm:$0xff]
    %v920 = vld [vmem:[#allocation4 + $0x530] sm:$0xff]
    %v921 = vld [vmem:[#allocation4 + $0x538] sm:$0xff]
    %v922 = vld [vmem:[#allocation4 + $0x540] sm:$0xff]
    %v923 = vld [vmem:[#allocation4 + $0x548] sm:$0xff]
    %v924 = vld [vmem:[#allocation4 + $0x550] sm:$0xff]
    %v925 = vld [vmem:[#allocation4 + $0x558] sm:$0xff]
    %v926 = vld [vmem:[#allocation4 + $0x560] sm:$0xff]
    %v927 = vld [vmem:[#allocation4 + $0x568] sm:$0xff]
    %v928 = vld [vmem:[#allocation4 + $0x570] sm:$0xff]
    %v929 = vld [vmem:[#allocation4 + $0x578] sm:$0xff]
    %v930 = vld [vmem:[#allocation4 + $0x580] sm:$0xff]
    %v931 = vld [vmem:[#allocation4 + $0x588] sm:$0xff]
    %v932 = vld [vmem:[#allocation4 + $0x590] sm:$0xff]
    %v933 = vld [vmem:[#allocation4 + $0x598] sm:$0xff]
    %v934 = vld [vmem:[#allocation4 + $0x5a0] sm:$0xff]
    %v935 = vld [vmem:[#allocation4 + $0x5a8] sm:$0xff]
    %v936 = vld [vmem:[#allocation4 + $0x5b0] sm:$0xff]
    %v937 = vld [vmem:[#allocation4 + $0x5b8] sm:$0xff]
    %v938 = vld [vmem:[#allocation4 + $0x5c0] sm:$0xff]
    %v939 = vld [vmem:[#allocation4 + $0x5c8] sm:$0xff]
    %v940 = vld [vmem:[#allocation4 + $0x5d0] sm:$0xff]
    %v941 = vld [vmem:[#allocation4 + $0x5d8] sm:$0xff]
    %v942 = vld [vmem:[#allocation4 + $0x5e0] sm:$0xff]
    %v943 = vld [vmem:[#allocation4 + $0x5e8] sm:$0xff]
    %v944 = vld [vmem:[#allocation4 + $0x5f0] sm:$0xff]
    %v945 = vld [vmem:[#allocation4 + $0x5f8] sm:$0xff]
    %v946 = vld [vmem:[#allocation4 + $0x600] sm:$0xff]
    %v947 = vld [vmem:[#allocation4 + $0x608] sm:$0xff]
    %v948 = vld [vmem:[#allocation4 + $0x610] sm:$0xff]
    %v949 = vld [vmem:[#allocation4 + $0x618] sm:$0xff]
    %v950 = vld [vmem:[#allocation4 + $0x620] sm:$0xff]
    %v951 = vld [vmem:[#allocation4 + $0x628] sm:$0xff]
    %v952 = vld [vmem:[#allocation4 + $0x630] sm:$0xff]
    %v953 = vld [vmem:[#allocation4 + $0x638] sm:$0xff]
    %v954 = vld [vmem:[#allocation4 + $0x640] sm:$0xff]
    %v955 = vld [vmem:[#allocation4 + $0x648] sm:$0xff]
    %v956 = vld [vmem:[#allocation4 + $0x650] sm:$0xff]
    %v957 = vld [vmem:[#allocation4 + $0x658] sm:$0xff]
    %v958 = vld [vmem:[#allocation4 + $0x660] sm:$0xff]
    %v959 = vld [vmem:[#allocation4 + $0x668] sm:$0xff]
    %v960 = vld [vmem:[#allocation4 + $0x670] sm:$0xff]
    %v961 = vld [vmem:[#allocation4 + $0x678] sm:$0xff]
    %v962 = vld [vmem:[#allocation4 + $0x680] sm:$0xff]
    %v963 = vld [vmem:[#allocation4 + $0x688] sm:$0xff]
    %v964 = vld [vmem:[#allocation4 + $0x690] sm:$0xff]
    %v965 = vld [vmem:[#allocation4 + $0x698] sm:$0xff]
    %v966 = vld [vmem:[#allocation4 + $0x6a0] sm:$0xff]
    %v967 = vld [vmem:[#allocation4 + $0x6a8] sm:$0xff]
    %v968 = vld [vmem:[#allocation4 + $0x6b0] sm:$0xff]
    %v969 = vld [vmem:[#allocation4 + $0x6b8] sm:$0xff]
    %v970 = vld [vmem:[#allocation4 + $0x6c0] sm:$0xff]
    %v971 = vld [vmem:[#allocation4 + $0x6c8] sm:$0xff]
    %v972 = vld [vmem:[#allocation4 + $0x6d0] sm:$0xff]
    %v973 = vld [vmem:[#allocation4 + $0x6d8] sm:$0xff]
    %v974 = vld [vmem:[#allocation4 + $0x6e0] sm:$0xff]
    %v975 = vld [vmem:[#allocation4 + $0x6e8] sm:$0xff]
    %v976 = vld [vmem:[#allocation4 + $0x6f0] sm:$0xff]
    %v977 = vld [vmem:[#allocation4 + $0x6f8] sm:$0xff]
    %v978 = vld [vmem:[#allocation4 + $0x700] sm:$0xff]
    %v979 = vld [vmem:[#allocation4 + $0x708] sm:$0xff]
    %v980 = vld [vmem:[#allocation4 + $0x710] sm:$0xff]
    %v981 = vld [vmem:[#allocation4 + $0x718] sm:$0xff]
    %v982 = vld [vmem:[#allocation4 + $0x720] sm:$0xff]
    %v983 = vld [vmem:[#allocation4 + $0x728] sm:$0xff]
    %v984 = vld [vmem:[#allocation4 + $0x730] sm:$0xff]
    %v985 = vld [vmem:[#allocation4 + $0x738] sm:$0xff]
    %v986 = vld [vmem:[#allocation4 + $0x740] sm:$0xff]
    %v987 = vld [vmem:[#allocation4 + $0x748] sm:$0xff]
    %v988 = vld [vmem:[#allocation4 + $0x750] sm:$0xff]
    %v989 = vld [vmem:[#allocation4 + $0x758] sm:$0xff]
    %v990 = vld [vmem:[#allocation4 + $0x760] sm:$0xff]
    %v991 = vld [vmem:[#allocation4 + $0x768] sm:$0xff]
    %v992 = vld [vmem:[#allocation4 + $0x770] sm:$0xff]
    %v993 = vld [vmem:[#allocation4 + $0x778] sm:$0xff]
    %v994 = vld [vmem:[#allocation4 + $0x780] sm:$0xff]
    %v995 = vld [vmem:[#allocation4 + $0x788] sm:$0xff]
    %v996 = vld [vmem:[#allocation4 + $0x790] sm:$0xff]
    %v997 = vld [vmem:[#allocation4 + $0x798] sm:$0xff]
    %v998 = vld [vmem:[#allocation4 + $0x7a0] sm:$0xff]
    %v999 = vld [vmem:[#allocation4 + $0x7a8] sm:$0xff]
    %v1000 = vld [vmem:[#allocation4 + $0x7b0] sm:$0xff]
    %v1001 = vld [vmem:[#allocation4 + $0x7b8] sm:$0xff]
    %v1002 = vld [vmem:[#allocation4 + $0x7c0] sm:$0xff]
    %v1003 = vld [vmem:[#allocation4 + $0x7c8] sm:$0xff]
    %v1004 = vld [vmem:[#allocation4 + $0x7d0] sm:$0xff]
    %v1005 = vld [vmem:[#allocation4 + $0x7d8] sm:$0xff]
    %v1006 = vld [vmem:[#allocation4 + $0x7e0] sm:$0xff]
    %v1007 = vld [vmem:[#allocation4 + $0x7e8] sm:$0xff]
    %v1008 = vld [vmem:[#allocation4 + $0x7f0] sm:$0xff]
    %v1009 = vld [vmem:[#allocation4 + $0x7f8] sm:$0xff]
    %v1010 = vlaneseq
    %v1011 = vshrl.u32 %v1010, 7
    %v1012 = vsub.s32 1, %v1011
    %v1013 = vrot.slane %v126, %v1012
    %v1014 = vlaneseq
    %v1015 = vshrl.u32 %v1014, 7
    %v1016 = vsub.s32 1, %v1015
    %v1017 = vrot.slane %v127, %v1016
    %v1018 = vlaneseq
    %v1019 = vshrl.u32 %v1018, 7
    %v1020 = vsub.s32 1, %v1019
    %v1021 = vrot.slane %v128, %v1020
    %v1022 = vlaneseq
    %v1023 = vshrl.u32 %v1022, 7
    %v1024 = vsub.s32 1, %v1023
    %v1025 = vrot.slane %v129, %v1024
    %v1282 = vunpack.c.l.b16 %v754
    %v1283 = vunpack.c.h.b16 %v754
    %v1284 = vunpack.c.l.b16 %v755
    %v1285 = vunpack.c.h.b16 %v755
    %v1286 = vunpack.c.l.b16 %v756
    %v1287 = vunpack.c.h.b16 %v756
    %v1288 = vunpack.c.l.b16 %v757
    %v1289 = vunpack.c.h.b16 %v757
    %v1290 = vunpack.c.l.b16 %v758
    %v1291 = vunpack.c.h.b16 %v758
    %v1292 = vunpack.c.l.b16 %v759
    %v1293 = vunpack.c.h.b16 %v759
    %v1294 = vunpack.c.l.b16 %v760
    %v1295 = vunpack.c.h.b16 %v760
    %v1296 = vunpack.c.l.b16 %v761
    %v1297 = vunpack.c.h.b16 %v761
    %v1298 = vunpack.c.l.b16 %v762
    %v1299 = vunpack.c.h.b16 %v762
    %v1300 = vunpack.c.l.b16 %v763
    %v1301 = vunpack.c.h.b16 %v763
    %v1302 = vunpack.c.l.b16 %v764
    %v1303 = vunpack.c.h.b16 %v764
    %v1304 = vunpack.c.l.b16 %v765
    %v1305 = vunpack.c.h.b16 %v765
    %v1306 = vunpack.c.l.b16 %v766
    %v1307 = vunpack.c.h.b16 %v766
    %v1308 = vunpack.c.l.b16 %v767
    %v1309 = vunpack.c.h.b16 %v767
    %v1310 = vunpack.c.l.b16 %v768
    %v1311 = vunpack.c.h.b16 %v768
    %v1312 = vunpack.c.l.b16 %v769
    %v1313 = vunpack.c.h.b16 %v769
    %v1314 = vunpack.c.l.b16 %v770
    %v1315 = vunpack.c.h.b16 %v770
    %v1316 = vunpack.c.l.b16 %v771
    %v1317 = vunpack.c.h.b16 %v771
    %v1318 = vunpack.c.l.b16 %v772
    %v1319 = vunpack.c.h.b16 %v772
    %v1320 = vunpack.c.l.b16 %v773
    %v1321 = vunpack.c.h.b16 %v773
    %v1322 = vunpack.c.l.b16 %v774
    %v1323 = vunpack.c.h.b16 %v774
    %v1324 = vunpack.c.l.b16 %v775
    %v1325 = vunpack.c.h.b16 %v775
    %v1326 = vunpack.c.l.b16 %v776
    %v1327 = vunpack.c.h.b16 %v776
    %v1328 = vunpack.c.l.b16 %v777
    %v1329 = vunpack.c.h.b16 %v777
    %v1330 = vunpack.c.l.b16 %v778
    %v1331 = vunpack.c.h.b16 %v778
    %v1332 = vunpack.c.l.b16 %v779
    %v1333 = vunpack.c.h.b16 %v779
    %v1334 = vunpack.c.l.b16 %v780
    %v1335 = vunpack.c.h.b16 %v780
    %v1336 = vunpack.c.l.b16 %v781
    %v1337 = vunpack.c.h.b16 %v781
    %v1338 = vunpack.c.l.b16 %v782
    %v1339 = vunpack.c.h.b16 %v782
    %v1340 = vunpack.c.l.b16 %v783
    %v1341 = vunpack.c.h.b16 %v783
    %v1342 = vunpack.c.l.b16 %v784
    %v1343 = vunpack.c.h.b16 %v784
    %v1344 = vunpack.c.l.b16 %v785
    %v1345 = vunpack.c.h.b16 %v785
    %v1346 = vunpack.c.l.b16 %v786
    %v1347 = vunpack.c.h.b16 %v786
    %v1348 = vunpack.c.l.b16 %v787
    %v1349 = vunpack.c.h.b16 %v787
    %v1350 = vunpack.c.l.b16 %v788
    %v1351 = vunpack.c.h.b16 %v788
    %v1352 = vunpack.c.l.b16 %v789
    %v1353 = vunpack.c.h.b16 %v789
    %v1354 = vunpack.c.l.b16 %v790
    %v1355 = vunpack.c.h.b16 %v790
    %v1356 = vunpack.c.l.b16 %v791
    %v1357 = vunpack.c.h.b16 %v791
    %v1358 = vunpack.c.l.b16 %v792
    %v1359 = vunpack.c.h.b16 %v792
    %v1360 = vunpack.c.l.b16 %v793
    %v1361 = vunpack.c.h.b16 %v793
    %v1362 = vunpack.c.l.b16 %v794
    %v1363 = vunpack.c.h.b16 %v794
    %v1364 = vunpack.c.l.b16 %v795
    %v1365 = vunpack.c.h.b16 %v795
    %v1366 = vunpack.c.l.b16 %v796
    %v1367 = vunpack.c.h.b16 %v796
    %v1368 = vunpack.c.l.b16 %v797
    %v1369 = vunpack.c.h.b16 %v797
    %v1370 = vunpack.c.l.b16 %v798
    %v1371 = vunpack.c.h.b16 %v798
    %v1372 = vunpack.c.l.b16 %v799
    %v1373 = vunpack.c.h.b16 %v799
    %v1374 = vunpack.c.l.b16 %v800
    %v1375 = vunpack.c.h.b16 %v800
    %v1376 = vunpack.c.l.b16 %v801
    %v1377 = vunpack.c.h.b16 %v801
    %v1378 = vunpack.c.l.b16 %v802
    %v1379 = vunpack.c.h.b16 %v802
    %v1380 = vunpack.c.l.b16 %v803
    %v1381 = vunpack.c.h.b16 %v803
    %v1382 = vunpack.c.l.b16 %v804
    %v1383 = vunpack.c.h.b16 %v804
    %v1384 = vunpack.c.l.b16 %v805
    %v1385 = vunpack.c.h.b16 %v805
    %v1386 = vunpack.c.l.b16 %v806
    %v1387 = vunpack.c.h.b16 %v806
    %v1388 = vunpack.c.l.b16 %v807
    %v1389 = vunpack.c.h.b16 %v807
    %v1390 = vunpack.c.l.b16 %v808
    %v1391 = vunpack.c.h.b16 %v808
    %v1392 = vunpack.c.l.b16 %v809
    %v1393 = vunpack.c.h.b16 %v809
    %v1394 = vunpack.c.l.b16 %v810
    %v1395 = vunpack.c.h.b16 %v810
    %v1396 = vunpack.c.l.b16 %v811
    %v1397 = vunpack.c.h.b16 %v811
    %v1398 = vunpack.c.l.b16 %v812
    %v1399 = vunpack.c.h.b16 %v812
    %v1400 = vunpack.c.l.b16 %v813
    %v1401 = vunpack.c.h.b16 %v813
    %v1402 = vunpack.c.l.b16 %v814
    %v1403 = vunpack.c.h.b16 %v814
    %v1404 = vunpack.c.l.b16 %v815
    %v1405 = vunpack.c.h.b16 %v815
    %v1406 = vunpack.c.l.b16 %v816
    %v1407 = vunpack.c.h.b16 %v816
    %v1408 = vunpack.c.l.b16 %v817
    %v1409 = vunpack.c.h.b16 %v817
    %v1410 = vunpack.c.l.b16 %v818
    %v1411 = vunpack.c.h.b16 %v818
    %v1412 = vunpack.c.l.b16 %v819
    %v1413 = vunpack.c.h.b16 %v819
    %v1414 = vunpack.c.l.b16 %v820
    %v1415 = vunpack.c.h.b16 %v820
    %v1416 = vunpack.c.l.b16 %v821
    %v1417 = vunpack.c.h.b16 %v821
    %v1418 = vunpack.c.l.b16 %v822
    %v1419 = vunpack.c.h.b16 %v822
    %v1420 = vunpack.c.l.b16 %v823
    %v1421 = vunpack.c.h.b16 %v823
    %v1422 = vunpack.c.l.b16 %v824
    %v1423 = vunpack.c.h.b16 %v824
    %v1424 = vunpack.c.l.b16 %v825
    %v1425 = vunpack.c.h.b16 %v825
    %v1426 = vunpack.c.l.b16 %v826
    %v1427 = vunpack.c.h.b16 %v826
    %v1428 = vunpack.c.l.b16 %v827
    %v1429 = vunpack.c.h.b16 %v827
    %v1430 = vunpack.c.l.b16 %v828
    %v1431 = vunpack.c.h.b16 %v828
    %v1432 = vunpack.c.l.b16 %v829
    %v1433 = vunpack.c.h.b16 %v829
    %v1434 = vunpack.c.l.b16 %v830
    %v1435 = vunpack.c.h.b16 %v830
    %v1436 = vunpack.c.l.b16 %v831
    %v1437 = vunpack.c.h.b16 %v831
    %v1438 = vunpack.c.l.b16 %v832
    %v1439 = vunpack.c.h.b16 %v832
    %v1440 = vunpack.c.l.b16 %v833
    %v1441 = vunpack.c.h.b16 %v833
    %v1442 = vunpack.c.l.b16 %v834
    %v1443 = vunpack.c.h.b16 %v834
    %v1444 = vunpack.c.l.b16 %v835
    %v1445 = vunpack.c.h.b16 %v835
    %v1446 = vunpack.c.l.b16 %v836
    %v1447 = vunpack.c.h.b16 %v836
    %v1448 = vunpack.c.l.b16 %v837
    %v1449 = vunpack.c.h.b16 %v837
    %v1450 = vunpack.c.l.b16 %v838
    %v1451 = vunpack.c.h.b16 %v838
    %v1452 = vunpack.c.l.b16 %v839
    %v1453 = vunpack.c.h.b16 %v839
    %v1454 = vunpack.c.l.b16 %v840
    %v1455 = vunpack.c.h.b16 %v840
    %v1456 = vunpack.c.l.b16 %v841
    %v1457 = vunpack.c.h.b16 %v841
    %v1458 = vunpack.c.l.b16 %v842
    %v1459 = vunpack.c.h.b16 %v842
    %v1460 = vunpack.c.l.b16 %v843
    %v1461 = vunpack.c.h.b16 %v843
    %v1462 = vunpack.c.l.b16 %v844
    %v1463 = vunpack.c.h.b16 %v844
    %v1464 = vunpack.c.l.b16 %v845
    %v1465 = vunpack.c.h.b16 %v845
    %v1466 = vunpack.c.l.b16 %v846
    %v1467 = vunpack.c.h.b16 %v846
    %v1468 = vunpack.c.l.b16 %v847
    %v1469 = vunpack.c.h.b16 %v847
    %v1470 = vunpack.c.l.b16 %v848
    %v1471 = vunpack.c.h.b16 %v848
    %v1472 = vunpack.c.l.b16 %v849
    %v1473 = vunpack.c.h.b16 %v849
    %v1474 = vunpack.c.l.b16 %v850
    %v1475 = vunpack.c.h.b16 %v850
    %v1476 = vunpack.c.l.b16 %v851
    %v1477 = vunpack.c.h.b16 %v851
    %v1478 = vunpack.c.l.b16 %v852
    %v1479 = vunpack.c.h.b16 %v852
    %v1480 = vunpack.c.l.b16 %v853
    %v1481 = vunpack.c.h.b16 %v853
    %v1482 = vunpack.c.l.b16 %v854
    %v1483 = vunpack.c.h.b16 %v854
    %v1484 = vunpack.c.l.b16 %v855
    %v1485 = vunpack.c.h.b16 %v855
    %v1486 = vunpack.c.l.b16 %v856
    %v1487 = vunpack.c.h.b16 %v856
    %v1488 = vunpack.c.l.b16 %v857
    %v1489 = vunpack.c.h.b16 %v857
    %v1490 = vunpack.c.l.b16 %v858
    %v1491 = vunpack.c.h.b16 %v858
    %v1492 = vunpack.c.l.b16 %v859
    %v1493 = vunpack.c.h.b16 %v859
    %v1494 = vunpack.c.l.b16 %v860
    %v1495 = vunpack.c.h.b16 %v860
    %v1496 = vunpack.c.l.b16 %v861
    %v1497 = vunpack.c.h.b16 %v861
    %v1498 = vunpack.c.l.b16 %v862
    %v1499 = vunpack.c.h.b16 %v862
    %v1500 = vunpack.c.l.b16 %v863
    %v1501 = vunpack.c.h.b16 %v863
    %v1502 = vunpack.c.l.b16 %v864
    %v1503 = vunpack.c.h.b16 %v864
    %v1504 = vunpack.c.l.b16 %v865
    %v1505 = vunpack.c.h.b16 %v865
    %v1506 = vunpack.c.l.b16 %v866
    %v1507 = vunpack.c.h.b16 %v866
    %v1508 = vunpack.c.l.b16 %v867
    %v1509 = vunpack.c.h.b16 %v867
    %v1510 = vunpack.c.l.b16 %v868
    %v1511 = vunpack.c.h.b16 %v868
    %v1512 = vunpack.c.l.b16 %v869
    %v1513 = vunpack.c.h.b16 %v869
    %v1514 = vunpack.c.l.b16 %v870
    %v1515 = vunpack.c.h.b16 %v870
    %v1516 = vunpack.c.l.b16 %v871
    %v1517 = vunpack.c.h.b16 %v871
    %v1518 = vunpack.c.l.b16 %v872
    %v1519 = vunpack.c.h.b16 %v872
    %v1520 = vunpack.c.l.b16 %v873
    %v1521 = vunpack.c.h.b16 %v873
    %v1522 = vunpack.c.l.b16 %v874
    %v1523 = vunpack.c.h.b16 %v874
    %v1524 = vunpack.c.l.b16 %v875
    %v1525 = vunpack.c.h.b16 %v875
    %v1526 = vunpack.c.l.b16 %v876
    %v1527 = vunpack.c.h.b16 %v876
    %v1528 = vunpack.c.l.b16 %v877
    %v1529 = vunpack.c.h.b16 %v877
    %v1530 = vunpack.c.l.b16 %v878
    %v1531 = vunpack.c.h.b16 %v878
    %v1532 = vunpack.c.l.b16 %v879
    %v1533 = vunpack.c.h.b16 %v879
    %v1534 = vunpack.c.l.b16 %v880
    %v1535 = vunpack.c.h.b16 %v880
    %v1536 = vunpack.c.l.b16 %v881
    %v1537 = vunpack.c.h.b16 %v881
    %v1538 = vunpack.c.l.b16 %v882
    %v1539 = vunpack.c.h.b16 %v882
    %v1540 = vunpack.c.l.b16 %v883
    %v1541 = vunpack.c.h.b16 %v883
    %v1542 = vunpack.c.l.b16 %v884
    %v1543 = vunpack.c.h.b16 %v884
    %v1544 = vunpack.c.l.b16 %v885
    %v1545 = vunpack.c.h.b16 %v885
    %v1546 = vunpack.c.l.b16 %v886
    %v1547 = vunpack.c.h.b16 %v886
    %v1548 = vunpack.c.l.b16 %v887
    %v1549 = vunpack.c.h.b16 %v887
    %v1550 = vunpack.c.l.b16 %v888
    %v1551 = vunpack.c.h.b16 %v888
    %v1552 = vunpack.c.l.b16 %v889
    %v1553 = vunpack.c.h.b16 %v889
    %v1554 = vunpack.c.l.b16 %v890
    %v1555 = vunpack.c.h.b16 %v890
    %v1556 = vunpack.c.l.b16 %v891
    %v1557 = vunpack.c.h.b16 %v891
    %v1558 = vunpack.c.l.b16 %v892
    %v1559 = vunpack.c.h.b16 %v892
    %v1560 = vunpack.c.l.b16 %v893
    %v1561 = vunpack.c.h.b16 %v893
    %v1562 = vunpack.c.l.b16 %v894
    %v1563 = vunpack.c.h.b16 %v894
    %v1564 = vunpack.c.l.b16 %v895
    %v1565 = vunpack.c.h.b16 %v895
    %v1566 = vunpack.c.l.b16 %v896
    %v1567 = vunpack.c.h.b16 %v896
    %v1568 = vunpack.c.l.b16 %v897
    %v1569 = vunpack.c.h.b16 %v897
    %v1570 = vunpack.c.l.b16 %v898
    %v1571 = vunpack.c.h.b16 %v898
    %v1572 = vunpack.c.l.b16 %v899
    %v1573 = vunpack.c.h.b16 %v899
    %v1574 = vunpack.c.l.b16 %v900
    %v1575 = vunpack.c.h.b16 %v900
    %v1576 = vunpack.c.l.b16 %v901
    %v1577 = vunpack.c.h.b16 %v901
    %v1578 = vunpack.c.l.b16 %v902
    %v1579 = vunpack.c.h.b16 %v902
    %v1580 = vunpack.c.l.b16 %v903
    %v1581 = vunpack.c.h.b16 %v903
    %v1582 = vunpack.c.l.b16 %v904
    %v1583 = vunpack.c.h.b16 %v904
    %v1584 = vunpack.c.l.b16 %v905
    %v1585 = vunpack.c.h.b16 %v905
    %v1586 = vunpack.c.l.b16 %v906
    %v1587 = vunpack.c.h.b16 %v906
    %v1588 = vunpack.c.l.b16 %v907
    %v1589 = vunpack.c.h.b16 %v907
    %v1590 = vunpack.c.l.b16 %v908
    %v1591 = vunpack.c.h.b16 %v908
    %v1592 = vunpack.c.l.b16 %v909
    %v1593 = vunpack.c.h.b16 %v909
    %v1594 = vunpack.c.l.b16 %v910
    %v1595 = vunpack.c.h.b16 %v910
    %v1596 = vunpack.c.l.b16 %v911
    %v1597 = vunpack.c.h.b16 %v911
    %v1598 = vunpack.c.l.b16 %v912
    %v1599 = vunpack.c.h.b16 %v912
    %v1600 = vunpack.c.l.b16 %v913
    %v1601 = vunpack.c.h.b16 %v913
    %v1602 = vunpack.c.l.b16 %v914
    %v1603 = vunpack.c.h.b16 %v914
    %v1604 = vunpack.c.l.b16 %v915
    %v1605 = vunpack.c.h.b16 %v915
    %v1606 = vunpack.c.l.b16 %v916
    %v1607 = vunpack.c.h.b16 %v916
    %v1608 = vunpack.c.l.b16 %v917
    %v1609 = vunpack.c.h.b16 %v917
    %v1610 = vunpack.c.l.b16 %v918
    %v1611 = vunpack.c.h.b16 %v918
    %v1612 = vunpack.c.l.b16 %v919
    %v1613 = vunpack.c.h.b16 %v919
    %v1614 = vunpack.c.l.b16 %v920
    %v1615 = vunpack.c.h.b16 %v920
    %v1616 = vunpack.c.l.b16 %v921
    %v1617 = vunpack.c.h.b16 %v921
    %v1618 = vunpack.c.l.b16 %v922
    %v1619 = vunpack.c.h.b16 %v922
    %v1620 = vunpack.c.l.b16 %v923
    %v1621 = vunpack.c.h.b16 %v923
    %v1622 = vunpack.c.l.b16 %v924
    %v1623 = vunpack.c.h.b16 %v924
    %v1624 = vunpack.c.l.b16 %v925
    %v1625 = vunpack.c.h.b16 %v925
    %v1626 = vunpack.c.l.b16 %v926
    %v1627 = vunpack.c.h.b16 %v926
    %v1628 = vunpack.c.l.b16 %v927
    %v1629 = vunpack.c.h.b16 %v927
    %v1630 = vunpack.c.l.b16 %v928
    %v1631 = vunpack.c.h.b16 %v928
    %v1632 = vunpack.c.l.b16 %v929
    %v1633 = vunpack.c.h.b16 %v929
    %v1634 = vunpack.c.l.b16 %v930
    %v1635 = vunpack.c.h.b16 %v930
    %v1636 = vunpack.c.l.b16 %v931
    %v1637 = vunpack.c.h.b16 %v931
    %v1638 = vunpack.c.l.b16 %v932
    %v1639 = vunpack.c.h.b16 %v932
    %v1640 = vunpack.c.l.b16 %v933
    %v1641 = vunpack.c.h.b16 %v933
    %v1642 = vunpack.c.l.b16 %v934
    %v1643 = vunpack.c.h.b16 %v934
    %v1644 = vunpack.c.l.b16 %v935
    %v1645 = vunpack.c.h.b16 %v935
    %v1646 = vunpack.c.l.b16 %v936
    %v1647 = vunpack.c.h.b16 %v936
    %v1648 = vunpack.c.l.b16 %v937
    %v1649 = vunpack.c.h.b16 %v937
    %v1650 = vunpack.c.l.b16 %v938
    %v1651 = vunpack.c.h.b16 %v938
    %v1652 = vunpack.c.l.b16 %v939
    %v1653 = vunpack.c.h.b16 %v939
    %v1654 = vunpack.c.l.b16 %v940
    %v1655 = vunpack.c.h.b16 %v940
    %v1656 = vunpack.c.l.b16 %v941
    %v1657 = vunpack.c.h.b16 %v941
    %v1658 = vunpack.c.l.b16 %v942
    %v1659 = vunpack.c.h.b16 %v942
    %v1660 = vunpack.c.l.b16 %v943
    %v1661 = vunpack.c.h.b16 %v943
    %v1662 = vunpack.c.l.b16 %v944
    %v1663 = vunpack.c.h.b16 %v944
    %v1664 = vunpack.c.l.b16 %v945
    %v1665 = vunpack.c.h.b16 %v945
    %v1666 = vunpack.c.l.b16 %v946
    %v1667 = vunpack.c.h.b16 %v946
    %v1668 = vunpack.c.l.b16 %v947
    %v1669 = vunpack.c.h.b16 %v947
    %v1670 = vunpack.c.l.b16 %v948
    %v1671 = vunpack.c.h.b16 %v948
    %v1672 = vunpack.c.l.b16 %v949
    %v1673 = vunpack.c.h.b16 %v949
    %v1674 = vunpack.c.l.b16 %v950
    %v1675 = vunpack.c.h.b16 %v950
    %v1676 = vunpack.c.l.b16 %v951
    %v1677 = vunpack.c.h.b16 %v951
    %v1678 = vunpack.c.l.b16 %v952
    %v1679 = vunpack.c.h.b16 %v952
    %v1680 = vunpack.c.l.b16 %v953
    %v1681 = vunpack.c.h.b16 %v953
    %v1682 = vunpack.c.l.b16 %v954
    %v1683 = vunpack.c.h.b16 %v954
    %v1684 = vunpack.c.l.b16 %v955
    %v1685 = vunpack.c.h.b16 %v955
    %v1686 = vunpack.c.l.b16 %v956
    %v1687 = vunpack.c.h.b16 %v956
    %v1688 = vunpack.c.l.b16 %v957
    %v1689 = vunpack.c.h.b16 %v957
    %v1690 = vunpack.c.l.b16 %v958
    %v1691 = vunpack.c.h.b16 %v958
    %v1692 = vunpack.c.l.b16 %v959
    %v1693 = vunpack.c.h.b16 %v959
    %v1694 = vunpack.c.l.b16 %v960
    %v1695 = vunpack.c.h.b16 %v960
    %v1696 = vunpack.c.l.b16 %v961
    %v1697 = vunpack.c.h.b16 %v961
    %v1698 = vunpack.c.l.b16 %v962
    %v1699 = vunpack.c.h.b16 %v962
    %v1700 = vunpack.c.l.b16 %v963
    %v1701 = vunpack.c.h.b16 %v963
    %v1702 = vunpack.c.l.b16 %v964
    %v1703 = vunpack.c.h.b16 %v964
    %v1704 = vunpack.c.l.b16 %v965
    %v1705 = vunpack.c.h.b16 %v965
    %v1706 = vunpack.c.l.b16 %v966
    %v1707 = vunpack.c.h.b16 %v966
    %v1708 = vunpack.c.l.b16 %v967
    %v1709 = vunpack.c.h.b16 %v967
    %v1710 = vunpack.c.l.b16 %v968
    %v1711 = vunpack.c.h.b16 %v968
    %v1712 = vunpack.c.l.b16 %v969
    %v1713 = vunpack.c.h.b16 %v969
    %v1714 = vunpack.c.l.b16 %v970
    %v1715 = vunpack.c.h.b16 %v970
    %v1716 = vunpack.c.l.b16 %v971
    %v1717 = vunpack.c.h.b16 %v971
    %v1718 = vunpack.c.l.b16 %v972
    %v1719 = vunpack.c.h.b16 %v972
    %v1720 = vunpack.c.l.b16 %v973
    %v1721 = vunpack.c.h.b16 %v973
    %v1722 = vunpack.c.l.b16 %v974
    %v1723 = vunpack.c.h.b16 %v974
    %v1724 = vunpack.c.l.b16 %v975
    %v1725 = vunpack.c.h.b16 %v975
    %v1726 = vunpack.c.l.b16 %v976
    %v1727 = vunpack.c.h.b16 %v976
    %v1728 = vunpack.c.l.b16 %v977
    %v1729 = vunpack.c.h.b16 %v977
    %v1730 = vunpack.c.l.b16 %v978
    %v1731 = vunpack.c.h.b16 %v978
    %v1732 = vunpack.c.l.b16 %v979
    %v1733 = vunpack.c.h.b16 %v979
    %v1734 = vunpack.c.l.b16 %v980
    %v1735 = vunpack.c.h.b16 %v980
    %v1736 = vunpack.c.l.b16 %v981
    %v1737 = vunpack.c.h.b16 %v981
    %v1738 = vunpack.c.l.b16 %v982
    %v1739 = vunpack.c.h.b16 %v982
    %v1740 = vunpack.c.l.b16 %v983
    %v1741 = vunpack.c.h.b16 %v983
    %v1742 = vunpack.c.l.b16 %v984
    %v1743 = vunpack.c.h.b16 %v984
    %v1744 = vunpack.c.l.b16 %v985
    %v1745 = vunpack.c.h.b16 %v985
    %v1746 = vunpack.c.l.b16 %v986
    %v1747 = vunpack.c.h.b16 %v986
    %v1748 = vunpack.c.l.b16 %v987
    %v1749 = vunpack.c.h.b16 %v987
    %v1750 = vunpack.c.l.b16 %v988
    %v1751 = vunpack.c.h.b16 %v988
    %v1752 = vunpack.c.l.b16 %v989
    %v1753 = vunpack.c.h.b16 %v989
    %v1754 = vunpack.c.l.b16 %v990
    %v1755 = vunpack.c.h.b16 %v990
    %v1756 = vunpack.c.l.b16 %v991
    %v1757 = vunpack.c.h.b16 %v991
    %v1758 = vunpack.c.l.b16 %v992
    %v1759 = vunpack.c.h.b16 %v992
    %v1760 = vunpack.c.l.b16 %v993
    %v1761 = vunpack.c.h.b16 %v993
    %v1762 = vunpack.c.l.b16 %v994
    %v1763 = vunpack.c.h.b16 %v994
    %v1764 = vunpack.c.l.b16 %v995
    %v1765 = vunpack.c.h.b16 %v995
    %v1766 = vunpack.c.l.b16 %v996
    %v1767 = vunpack.c.h.b16 %v996
    %v1768 = vunpack.c.l.b16 %v997
    %v1769 = vunpack.c.h.b16 %v997
    %v1770 = vunpack.c.l.b16 %v998
    %v1771 = vunpack.c.h.b16 %v998
    %v1772 = vunpack.c.l.b16 %v999
    %v1773 = vunpack.c.h.b16 %v999
    %v1774 = vunpack.c.l.b16 %v1000
    %v1775 = vunpack.c.h.b16 %v1000
    %v1776 = vunpack.c.l.b16 %v1001
    %v1777 = vunpack.c.h.b16 %v1001
    %v1778 = vunpack.c.l.b16 %v1002
    %v1779 = vunpack.c.h.b16 %v1002
    %v1780 = vunpack.c.l.b16 %v1003
    %v1781 = vunpack.c.h.b16 %v1003
    %v1782 = vunpack.c.l.b16 %v1004
    %v1783 = vunpack.c.h.b16 %v1004
    %v1784 = vunpack.c.l.b16 %v1005
    %v1785 = vunpack.c.h.b16 %v1005
    %v1786 = vunpack.c.l.b16 %v1006
    %v1787 = vunpack.c.h.b16 %v1006
    %v1788 = vunpack.c.l.b16 %v1007
    %v1789 = vunpack.c.h.b16 %v1007
    %v1790 = vunpack.c.l.b16 %v1008
    %v1791 = vunpack.c.h.b16 %v1008
    %v1792 = vunpack.c.l.b16 %v1009
    %v1793 = vunpack.c.h.b16 %v1009
    %v1794 = vpack.c.b16 %v1286, %v1282
    %v1795 = vpack.c.b16 %v1287, %v1283
    %v1796 = vpack.c.b16 %v1288, %v1284
    %v1797 = vpack.c.b16 %v1289, %v1285
    %v1798 = vpack.c.b16 %v1294, %v1290
    %v1799 = vpack.c.b16 %v1295, %v1291
    %v1800 = vpack.c.b16 %v1296, %v1292
    %v1801 = vpack.c.b16 %v1297, %v1293
    %v1802 = vpack.c.b16 %v1302, %v1298
    %v1803 = vpack.c.b16 %v1303, %v1299
    %v1804 = vpack.c.b16 %v1304, %v1300
    %v1805 = vpack.c.b16 %v1305, %v1301
    %v1806 = vpack.c.b16 %v1310, %v1306
    %v1807 = vpack.c.b16 %v1311, %v1307
    %v1808 = vpack.c.b16 %v1312, %v1308
    %v1809 = vpack.c.b16 %v1313, %v1309
    %v1810 = vpack.c.b16 %v1318, %v1314
    %v1811 = vpack.c.b16 %v1319, %v1315
    %v1812 = vpack.c.b16 %v1320, %v1316
    %v1813 = vpack.c.b16 %v1321, %v1317
    %v1814 = vpack.c.b16 %v1326, %v1322
    %v1815 = vpack.c.b16 %v1327, %v1323
    %v1816 = vpack.c.b16 %v1328, %v1324
    %v1817 = vpack.c.b16 %v1329, %v1325
    %v1818 = vpack.c.b16 %v1334, %v1330
    %v1819 = vpack.c.b16 %v1335, %v1331
    %v1820 = vpack.c.b16 %v1336, %v1332
    %v1821 = vpack.c.b16 %v1337, %v1333
    %v1822 = vpack.c.b16 %v1342, %v1338
    %v1823 = vpack.c.b16 %v1343, %v1339
    %v1824 = vpack.c.b16 %v1344, %v1340
    %v1825 = vpack.c.b16 %v1345, %v1341
    %v1826 = vpack.c.b16 %v1350, %v1346
    %v1827 = vpack.c.b16 %v1351, %v1347
    %v1828 = vpack.c.b16 %v1352, %v1348
    %v1829 = vpack.c.b16 %v1353, %v1349
    %v1830 = vpack.c.b16 %v1358, %v1354
    %v1831 = vpack.c.b16 %v1359, %v1355
    %v1832 = vpack.c.b16 %v1360, %v1356
    %v1833 = vpack.c.b16 %v1361, %v1357
    %v1834 = vpack.c.b16 %v1366, %v1362
    %v1835 = vpack.c.b16 %v1367, %v1363
    %v1836 = vpack.c.b16 %v1368, %v1364
    %v1837 = vpack.c.b16 %v1369, %v1365
    %v1838 = vpack.c.b16 %v1374, %v1370
    %v1839 = vpack.c.b16 %v1375, %v1371
    %v1840 = vpack.c.b16 %v1376, %v1372
    %v1841 = vpack.c.b16 %v1377, %v1373
    %v1842 = vpack.c.b16 %v1382, %v1378
    %v1843 = vpack.c.b16 %v1383, %v1379
    %v1844 = vpack.c.b16 %v1384, %v1380
    %v1845 = vpack.c.b16 %v1385, %v1381
    %v1846 = vpack.c.b16 %v1390, %v1386
    %v1847 = vpack.c.b16 %v1391, %v1387
    %v1848 = vpack.c.b16 %v1392, %v1388
    %v1849 = vpack.c.b16 %v1393, %v1389
    %v1850 = vpack.c.b16 %v1398, %v1394
    %v1851 = vpack.c.b16 %v1399, %v1395
    %v1852 = vpack.c.b16 %v1400, %v1396
    %v1853 = vpack.c.b16 %v1401, %v1397
    %v1854 = vpack.c.b16 %v1406, %v1402
    %v1855 = vpack.c.b16 %v1407, %v1403
    %v1856 = vpack.c.b16 %v1408, %v1404
    %v1857 = vpack.c.b16 %v1409, %v1405
    %v1858 = vpack.c.b16 %v1414, %v1410
    %v1859 = vpack.c.b16 %v1415, %v1411
    %v1860 = vpack.c.b16 %v1416, %v1412
    %v1861 = vpack.c.b16 %v1417, %v1413
    %v1862 = vpack.c.b16 %v1422, %v1418
    %v1863 = vpack.c.b16 %v1423, %v1419
    %v1864 = vpack.c.b16 %v1424, %v1420
    %v1865 = vpack.c.b16 %v1425, %v1421
    %v1866 = vpack.c.b16 %v1430, %v1426
    %v1867 = vpack.c.b16 %v1431, %v1427
    %v1868 = vpack.c.b16 %v1432, %v1428
    %v1869 = vpack.c.b16 %v1433, %v1429
    %v1870 = vpack.c.b16 %v1438, %v1434
    %v1871 = vpack.c.b16 %v1439, %v1435
    %v1872 = vpack.c.b16 %v1440, %v1436
    %v1873 = vpack.c.b16 %v1441, %v1437
    %v1874 = vpack.c.b16 %v1446, %v1442
    %v1875 = vpack.c.b16 %v1447, %v1443
    %v1876 = vpack.c.b16 %v1448, %v1444
    %v1877 = vpack.c.b16 %v1449, %v1445
    %v1878 = vpack.c.b16 %v1454, %v1450
    %v1879 = vpack.c.b16 %v1455, %v1451
    %v1880 = vpack.c.b16 %v1456, %v1452
    %v1881 = vpack.c.b16 %v1457, %v1453
    %v1882 = vpack.c.b16 %v1462, %v1458
    %v1883 = vpack.c.b16 %v1463, %v1459
    %v1884 = vpack.c.b16 %v1464, %v1460
    %v1885 = vpack.c.b16 %v1465, %v1461
    %v1886 = vpack.c.b16 %v1470, %v1466
    %v1887 = vpack.c.b16 %v1471, %v1467
    %v1888 = vpack.c.b16 %v1472, %v1468
    %v1889 = vpack.c.b16 %v1473, %v1469
    %v1890 = vpack.c.b16 %v1478, %v1474
    %v1891 = vpack.c.b16 %v1479, %v1475
    %v1892 = vpack.c.b16 %v1480, %v1476
    %v1893 = vpack.c.b16 %v1481, %v1477
    %v1894 = vpack.c.b16 %v1486, %v1482
    %v1895 = vpack.c.b16 %v1487, %v1483
    %v1896 = vpack.c.b16 %v1488, %v1484
    %v1897 = vpack.c.b16 %v1489, %v1485
    %v1898 = vpack.c.b16 %v1494, %v1490
    %v1899 = vpack.c.b16 %v1495, %v1491
    %v1900 = vpack.c.b16 %v1496, %v1492
    %v1901 = vpack.c.b16 %v1497, %v1493
    %v1902 = vpack.c.b16 %v1502, %v1498
    %v1903 = vpack.c.b16 %v1503, %v1499
    %v1904 = vpack.c.b16 %v1504, %v1500
    %v1905 = vpack.c.b16 %v1505, %v1501
    %v1906 = vpack.c.b16 %v1510, %v1506
    %v1907 = vpack.c.b16 %v1511, %v1507
    %v1908 = vpack.c.b16 %v1512, %v1508
    %v1909 = vpack.c.b16 %v1513, %v1509
    %v1910 = vpack.c.b16 %v1518, %v1514
    %v1911 = vpack.c.b16 %v1519, %v1515
    %v1912 = vpack.c.b16 %v1520, %v1516
    %v1913 = vpack.c.b16 %v1521, %v1517
    %v1914 = vpack.c.b16 %v1526, %v1522
    %v1915 = vpack.c.b16 %v1527, %v1523
    %v1916 = vpack.c.b16 %v1528, %v1524
    %v1917 = vpack.c.b16 %v1529, %v1525
    %v1918 = vpack.c.b16 %v1534, %v1530
    %v1919 = vpack.c.b16 %v1535, %v1531
    %v1920 = vpack.c.b16 %v1536, %v1532
    %v1921 = vpack.c.b16 %v1537, %v1533
    %v1922 = vpack.c.b16 %v1542, %v1538
    %v1923 = vpack.c.b16 %v1543, %v1539
    %v1924 = vpack.c.b16 %v1544, %v1540
    %v1925 = vpack.c.b16 %v1545, %v1541
    %v1926 = vpack.c.b16 %v1550, %v1546
    %v1927 = vpack.c.b16 %v1551, %v1547
    %v1928 = vpack.c.b16 %v1552, %v1548
    %v1929 = vpack.c.b16 %v1553, %v1549
    %v1930 = vpack.c.b16 %v1558, %v1554
    %v1931 = vpack.c.b16 %v1559, %v1555
    %v1932 = vpack.c.b16 %v1560, %v1556
    %v1933 = vpack.c.b16 %v1561, %v1557
    %v1934 = vpack.c.b16 %v1566, %v1562
    %v1935 = vpack.c.b16 %v1567, %v1563
    %v1936 = vpack.c.b16 %v1568, %v1564
    %v1937 = vpack.c.b16 %v1569, %v1565
    %v1938 = vpack.c.b16 %v1574, %v1570
    %v1939 = vpack.c.b16 %v1575, %v1571
    %v1940 = vpack.c.b16 %v1576, %v1572
    %v1941 = vpack.c.b16 %v1577, %v1573
    %v1942 = vpack.c.b16 %v1582, %v1578
    %v1943 = vpack.c.b16 %v1583, %v1579
    %v1944 = vpack.c.b16 %v1584, %v1580
    %v1945 = vpack.c.b16 %v1585, %v1581
    %v1946 = vpack.c.b16 %v1590, %v1586
    %v1947 = vpack.c.b16 %v1591, %v1587
    %v1948 = vpack.c.b16 %v1592, %v1588
    %v1949 = vpack.c.b16 %v1593, %v1589
    %v1950 = vpack.c.b16 %v1598, %v1594
    %v1951 = vpack.c.b16 %v1599, %v1595
    %v1952 = vpack.c.b16 %v1600, %v1596
    %v1953 = vpack.c.b16 %v1601, %v1597
    %v1954 = vpack.c.b16 %v1606, %v1602
    %v1955 = vpack.c.b16 %v1607, %v1603
    %v1956 = vpack.c.b16 %v1608, %v1604
    %v1957 = vpack.c.b16 %v1609, %v1605
    %v1958 = vpack.c.b16 %v1614, %v1610
    %v1959 = vpack.c.b16 %v1615, %v1611
    %v1960 = vpack.c.b16 %v1616, %v1612
    %v1961 = vpack.c.b16 %v1617, %v1613
    %v1962 = vpack.c.b16 %v1622, %v1618
    %v1963 = vpack.c.b16 %v1623, %v1619
    %v1964 = vpack.c.b16 %v1624, %v1620
    %v1965 = vpack.c.b16 %v1625, %v1621
    %v1966 = vpack.c.b16 %v1630, %v1626
    %v1967 = vpack.c.b16 %v1631, %v1627
    %v1968 = vpack.c.b16 %v1632, %v1628
    %v1969 = vpack.c.b16 %v1633, %v1629
    %v1970 = vpack.c.b16 %v1638, %v1634
    %v1971 = vpack.c.b16 %v1639, %v1635
    %v1972 = vpack.c.b16 %v1640, %v1636
    %v1973 = vpack.c.b16 %v1641, %v1637
    %v1974 = vpack.c.b16 %v1646, %v1642
    %v1975 = vpack.c.b16 %v1647, %v1643
    %v1976 = vpack.c.b16 %v1648, %v1644
    %v1977 = vpack.c.b16 %v1649, %v1645
    %v1978 = vpack.c.b16 %v1654, %v1650
    %v1979 = vpack.c.b16 %v1655, %v1651
    %v1980 = vpack.c.b16 %v1656, %v1652
    %v1981 = vpack.c.b16 %v1657, %v1653
    %v1982 = vpack.c.b16 %v1662, %v1658
    %v1983 = vpack.c.b16 %v1663, %v1659
    %v1984 = vpack.c.b16 %v1664, %v1660
    %v1985 = vpack.c.b16 %v1665, %v1661
    %v1986 = vpack.c.b16 %v1670, %v1666
    %v1987 = vpack.c.b16 %v1671, %v1667
    %v1988 = vpack.c.b16 %v1672, %v1668
    %v1989 = vpack.c.b16 %v1673, %v1669
    %v1990 = vpack.c.b16 %v1678, %v1674
    %v1991 = vpack.c.b16 %v1679, %v1675
    %v1992 = vpack.c.b16 %v1680, %v1676
    %v1993 = vpack.c.b16 %v1681, %v1677
    %v1994 = vpack.c.b16 %v1686, %v1682
    %v1995 = vpack.c.b16 %v1687, %v1683
    %v1996 = vpack.c.b16 %v1688, %v1684
    %v1997 = vpack.c.b16 %v1689, %v1685
    %v1998 = vpack.c.b16 %v1694, %v1690
    %v1999 = vpack.c.b16 %v1695, %v1691
    %v2000 = vpack.c.b16 %v1696, %v1692
    %v2001 = vpack.c.b16 %v1697, %v1693
    %v2002 = vpack.c.b16 %v1702, %v1698
    %v2003 = vpack.c.b16 %v1703, %v1699
    %v2004 = vpack.c.b16 %v1704, %v1700
    %v2005 = vpack.c.b16 %v1705, %v1701
    %v2006 = vpack.c.b16 %v1710, %v1706
    %v2007 = vpack.c.b16 %v1711, %v1707
    %v2008 = vpack.c.b16 %v1712, %v1708
    %v2009 = vpack.c.b16 %v1713, %v1709
    %v2010 = vpack.c.b16 %v1718, %v1714
    %v2011 = vpack.c.b16 %v1719, %v1715
    %v2012 = vpack.c.b16 %v1720, %v1716
    %v2013 = vpack.c.b16 %v1721, %v1717
    %v2014 = vpack.c.b16 %v1726, %v1722
    %v2015 = vpack.c.b16 %v1727, %v1723
    %v2016 = vpack.c.b16 %v1728, %v1724
    %v2017 = vpack.c.b16 %v1729, %v1725
    %v2018 = vpack.c.b16 %v1734, %v1730
    %v2019 = vpack.c.b16 %v1735, %v1731
    %v2020 = vpack.c.b16 %v1736, %v1732
    %v2021 = vpack.c.b16 %v1737, %v1733
    %v2022 = vpack.c.b16 %v1742, %v1738
    %v2023 = vpack.c.b16 %v1743, %v1739
    %v2024 = vpack.c.b16 %v1744, %v1740
    %v2025 = vpack.c.b16 %v1745, %v1741
    %v2026 = vpack.c.b16 %v1750, %v1746
    %v2027 = vpack.c.b16 %v1751, %v1747
    %v2028 = vpack.c.b16 %v1752, %v1748
    %v2029 = vpack.c.b16 %v1753, %v1749
    %v2030 = vpack.c.b16 %v1758, %v1754
    %v2031 = vpack.c.b16 %v1759, %v1755
    %v2032 = vpack.c.b16 %v1760, %v1756
    %v2033 = vpack.c.b16 %v1761, %v1757
    %v2034 = vpack.c.b16 %v1766, %v1762
    %v2035 = vpack.c.b16 %v1767, %v1763
    %v2036 = vpack.c.b16 %v1768, %v1764
    %v2037 = vpack.c.b16 %v1769, %v1765
    %v2038 = vpack.c.b16 %v1774, %v1770
    %v2039 = vpack.c.b16 %v1775, %v1771
    %v2040 = vpack.c.b16 %v1776, %v1772
    %v2041 = vpack.c.b16 %v1777, %v1773
    %v2042 = vpack.c.b16 %v1782, %v1778
    %v2043 = vpack.c.b16 %v1783, %v1779
    %v2044 = vpack.c.b16 %v1784, %v1780
    %v2045 = vpack.c.b16 %v1785, %v1781
    %v2046 = vpack.c.b16 %v1790, %v1786
    %v2047 = vpack.c.b16 %v1791, %v1787
    %v2048 = vpack.c.b16 %v1792, %v1788
    %v2049 = vpack.c.b16 %v1793, %v1789
    %2306 = vmatprep.subr.bf16.mxu0 %v1795
    %2307 = vmatpush1.bf16.msra.mxu0 %v1794
    %2308 = vmatprep.subr.bf16.mxu0 %v1799
    %2309 = vmatpush1.bf16.msra.mxu0 %v1798
    %2310 = vmatprep.subr.bf16.mxu0 %v1803
    %2311 = vmatpush1.bf16.msra.mxu0 %v1802
    %2312 = vmatprep.subr.bf16.mxu0 %v1807
    %2313 = vmatpush1.bf16.msra.mxu0 %v1806
    %2314 = vmatprep.subr.bf16.mxu0 %v1811
    %2315 = vmatpush1.bf16.msra.mxu0 %v1810
    %2316 = vmatprep.subr.bf16.mxu0 %v1815
    %2317 = vmatpush1.bf16.msra.mxu0 %v1814
    %2318 = vmatprep.subr.bf16.mxu0 %v1819
    %2319 = vmatpush1.bf16.msra.mxu0 %v1818
    %2320 = vmatprep.subr.bf16.mxu0 %v1823
    %2321 = vmatpush1.bf16.msra.mxu0 %v1822
    %2322 = vmatprep.subr.bf16.mxu0 %v1827
    %2323 = vmatpush1.bf16.msra.mxu0 %v1826
    %2324 = vmatprep.subr.bf16.mxu0 %v1831
    %2325 = vmatpush1.bf16.msra.mxu0 %v1830
    %2326 = vmatprep.subr.bf16.mxu0 %v1835
    %2327 = vmatpush1.bf16.msra.mxu0 %v1834
    %2328 = vmatprep.subr.bf16.mxu0 %v1839
    %2329 = vmatpush1.bf16.msra.mxu0 %v1838
    %2330 = vmatprep.subr.bf16.mxu0 %v1843
    %2331 = vmatpush1.bf16.msra.mxu0 %v1842
    %2332 = vmatprep.subr.bf16.mxu0 %v1847
    %2333 = vmatpush1.bf16.msra.mxu0 %v1846
    %2334 = vmatprep.subr.bf16.mxu0 %v1851
    %2335 = vmatpush1.bf16.msra.mxu0 %v1850
    %2336 = vmatprep.subr.bf16.mxu0 %v1855
    %2337 = vmatpush1.bf16.msra.mxu0 %v1854
    %2338 = vmatprep.mubr.bf16.mxu0 %v747
    %2339 = vmatmul.mubr.bf16.gmra.mrb[0].mxu0 %v746
    %v2340 = vpop.f32.mrb[0].mxu0
    %v2341 = vadd.f32 %v1013, %v2340
    %v2342 = vpop.f32.mrb[0].mxu0
    %v2343 = vadd.f32 %v1017, %v2342
    %v2344 = vpop.f32.mrb[0].mxu0
    %v2345 = vadd.f32 %v1013, %v2344
    %v2346 = vpop.f32.mrb[0].mxu0
    %v2347 = vadd.f32 %v1017, %v2346
    %2348 = vdwg.mxu0
    %2349 = vmatprep.subr.bf16.mxu0 %v1859
    %2350 = vmatpush1.bf16.msra.mxu0 %v1858
    %2351 = vmatprep.subr.bf16.mxu0 %v1863
    %2352 = vmatpush1.bf16.msra.mxu0 %v1862
    %2353 = vmatprep.subr.bf16.mxu0 %v1867
    %2354 = vmatpush1.bf16.msra.mxu0 %v1866
    %2355 = vmatprep.subr.bf16.mxu0 %v1871
    %2356 = vmatpush1.bf16.msra.mxu0 %v1870
    %2357 = vmatprep.subr.bf16.mxu0 %v1875
    %2358 = vmatpush1.bf16.msra.mxu0 %v1874
    %2359 = vmatprep.subr.bf16.mxu0 %v1879
    %2360 = vmatpush1.bf16.msra.mxu0 %v1878
    %2361 = vmatprep.subr.bf16.mxu0 %v1883
    %2362 = vmatpush1.bf16.msra.mxu0 %v1882
    %2363 = vmatprep.subr.bf16.mxu0 %v1887
    %2364 = vmatpush1.bf16.msra.mxu0 %v1886
    %2365 = vmatprep.subr.bf16.mxu0 %v1891
    %2366 = vmatpush1.bf16.msra.mxu0 %v1890
    %2367 = vmatprep.subr.bf16.mxu0 %v1895
    %2368 = vmatpush1.bf16.msra.mxu0 %v1894
    %2369 = vmatprep.subr.bf16.mxu0 %v1899
    %2370 = vmatpush1.bf16.msra.mxu0 %v1898
    %2371 = vmatprep.subr.bf16.mxu0 %v1903
    %2372 = vmatpush1.bf16.msra.mxu0 %v1902
    %2373 = vmatprep.subr.bf16.mxu0 %v1907
    %2374 = vmatpush1.bf16.msra.mxu0 %v1906
    %2375 = vmatprep.subr.bf16.mxu0 %v1911
    %2376 = vmatpush1.bf16.msra.mxu0 %v1910
    %2377 = vmatprep.subr.bf16.mxu0 %v1915
    %2378 = vmatpush1.bf16.msra.mxu0 %v1914
    %2379 = vmatprep.subr.bf16.mxu0 %v1919
    %2380 = vmatpush1.bf16.msra.mxu0 %v1918
    %2381 = vmatprep.mubr.bf16.mxu0 %v749
    %2382 = vmatmul.mubr.bf16.gmra.mrb[0].mxu0 %v748
    %v2383 = vpop.f32.mrb[0].mxu0
    %v2384 = vadd.f32 %v2341, %v2383
    %v2385 = vpop.f32.mrb[0].mxu0
    %v2386 = vadd.f32 %v2343, %v2385
    %v2387 = vpop.f32.mrb[0].mxu0
    %v2388 = vadd.f32 %v2345, %v2387
    %v2389 = vpop.f32.mrb[0].mxu0
    %v2390 = vadd.f32 %v2347, %v2389
    %2391 = vdwg.mxu0
    %2392 = vmatprep.subr.bf16.mxu0 %v1923
    %2393 = vmatpush1.bf16.msra.mxu0 %v1922
    %2394 = vmatprep.subr.bf16.mxu0 %v1927
    %2395 = vmatpush1.bf16.msra.mxu0 %v1926
    %2396 = vmatprep.subr.bf16.mxu0 %v1931
    %2397 = vmatpush1.bf16.msra.mxu0 %v1930
    %2398 = vmatprep.subr.bf16.mxu0 %v1935
    %2399 = vmatpush1.bf16.msra.mxu0 %v1934
    %2400 = vmatprep.subr.bf16.mxu0 %v1939
    %2401 = vmatpush1.bf16.msra.mxu0 %v1938
    %2402 = vmatprep.subr.bf16.mxu0 %v1943
    %2403 = vmatpush1.bf16.msra.mxu0 %v1942
    %2404 = vmatprep.subr.bf16.mxu0 %v1947
    %2405 = vmatpush1.bf16.msra.mxu0 %v1946
    %2406 = vmatprep.subr.bf16.mxu0 %v1951
    %2407 = vmatpush1.bf16.msra.mxu0 %v1950
    %2408 = vmatprep.subr.bf16.mxu0 %v1955
    %2409 = vmatpush1.bf16.msra.mxu0 %v1954
    %2410 = vmatprep.subr.bf16.mxu0 %v1959
    %2411 = vmatpush1.bf16.msra.mxu0 %v1958
    %2412 = vmatprep.subr.bf16.mxu0 %v1963
    %2413 = vmatpush1.bf16.msra.mxu0 %v1962
    %2414 = vmatprep.subr.bf16.mxu0 %v1967
    %2415 = vmatpush1.bf16.msra.mxu0 %v1966
    %2416 = vmatprep.subr.bf16.mxu0 %v1971
    %2417 = vmatpush1.bf16.msra.mxu0 %v1970
    %2418 = vmatprep.subr.bf16.mxu0 %v1975
    %2419 = vmatpush1.bf16.msra.mxu0 %v1974
    %2420 = vmatprep.subr.bf16.mxu0 %v1979
    %2421 = vmatpush1.bf16.msra.mxu0 %v1978
    %2422 = vmatprep.subr.bf16.mxu0 %v1983
    %2423 = vmatpush1.bf16.msra.mxu0 %v1982
    %2424 = vmatprep.mubr.bf16.mxu0 %v751
    %2425 = vmatmul.mubr.bf16.gmra.mrb[0].mxu0 %v750
    %v2426 = vpop.f32.mrb[0].mxu0
    %v2427 = vadd.f32 %v2384, %v2426
    %v2428 = vpop.f32.mrb[0].mxu0
    %v2429 = vadd.f32 %v2386, %v2428
    %v2430 = vpop.f32.mrb[0].mxu0
    %v2431 = vadd.f32 %v2388, %v2430
    %v2432 = vpop.f32.mrb[0].mxu0
    %v2433 = vadd.f32 %v2390, %v2432
    %2434 = vdwg.mxu0
    %2435 = vmatprep.subr.bf16.mxu0 %v1987
    %2436 = vmatpush1.bf16.msra.mxu0 %v1986
    %2437 = vmatprep.subr.bf16.mxu0 %v1991
    %2438 = vmatpush1.bf16.msra.mxu0 %v1990
    %2439 = vmatprep.subr.bf16.mxu0 %v1995
    %2440 = vmatpush1.bf16.msra.mxu0 %v1994
    %2441 = vmatprep.subr.bf16.mxu0 %v1999
    %2442 = vmatpush1.bf16.msra.mxu0 %v1998
    %2443 = vmatprep.subr.bf16.mxu0 %v2003
    %2444 = vmatpush1.bf16.msra.mxu0 %v2002
    %2445 = vmatprep.subr.bf16.mxu0 %v2007
    %2446 = vmatpush1.bf16.msra.mxu0 %v2006
    %2447 = vmatprep.subr.bf16.mxu0 %v2011
    %2448 = vmatpush1.bf16.msra.mxu0 %v2010
    %2449 = vmatprep.subr.bf16.mxu0 %v2015
    %2450 = vmatpush1.bf16.msra.mxu0 %v2014
    %2451 = vmatprep.subr.bf16.mxu0 %v2019
    %2452 = vmatpush1.bf16.msra.mxu0 %v2018
    %2453 = vmatprep.subr.bf16.mxu0 %v2023
    %2454 = vmatpush1.bf16.msra.mxu0 %v2022
    %2455 = vmatprep.subr.bf16.mxu0 %v2027
    %2456 = vmatpush1.bf16.msra.mxu0 %v2026
    %2457 = vmatprep.subr.bf16.mxu0 %v2031
    %2458 = vmatpush1.bf16.msra.mxu0 %v2030
    %2459 = vmatprep.subr.bf16.mxu0 %v2035
    %2460 = vmatpush1.bf16.msra.mxu0 %v2034
    %2461 = vmatprep.subr.bf16.mxu0 %v2039
    %2462 = vmatpush1.bf16.msra.mxu0 %v2038
    %2463 = vmatprep.subr.bf16.mxu0 %v2043
    %2464 = vmatpush1.bf16.msra.mxu0 %v2042
    %2465 = vmatprep.subr.bf16.mxu0 %v2047
    %2466 = vmatpush1.bf16.msra.mxu0 %v2046
    %2467 = vmatprep.mubr.bf16.mxu0 %v753
    %2468 = vmatmul.mubr.bf16.gmra.mrb[0].mxu0 %v752
    %v2469 = vpop.f32.mrb[0].mxu0
    %v2470 = vadd.f32 %v2427, %v2469
    %v2471 = vpop.f32.mrb[0].mxu0
    %v2472 = vadd.f32 %v2429, %v2471
    %v2473 = vpop.f32.mrb[0].mxu0
    %v2474 = vadd.f32 %v2431, %v2473
    %v2475 = vpop.f32.mrb[0].mxu0
    %v2476 = vadd.f32 %v2433, %v2475
    %2477 = vdwg.mxu0
    %2478 = vmatprep.subr.bf16.mxu0 %v1797
    %2479 = vmatpush1.bf16.msra.mxu0 %v1796
    %2480 = vmatprep.subr.bf16.mxu0 %v1801
    %2481 = vmatpush1.bf16.msra.mxu0 %v1800
    %2482 = vmatprep.subr.bf16.mxu0 %v1805
    %2483 = vmatpush1.bf16.msra.mxu0 %v1804
    %2484 = vmatprep.subr.bf16.mxu0 %v1809
    %2485 = vmatpush1.bf16.msra.mxu0 %v1808
    %2486 = vmatprep.subr.bf16.mxu0 %v1813
    %2487 = vmatpush1.bf16.msra.mxu0 %v1812
    %2488 = vmatprep.subr.bf16.mxu0 %v1817
    %2489 = vmatpush1.bf16.msra.mxu0 %v1816
    %2490 = vmatprep.subr.bf16.mxu0 %v1821
    %2491 = vmatpush1.bf16.msra.mxu0 %v1820
    %2492 = vmatprep.subr.bf16.mxu0 %v1825
    %2493 = vmatpush1.bf16.msra.mxu0 %v1824
    %2494 = vmatprep.subr.bf16.mxu0 %v1829
    %2495 = vmatpush1.bf16.msra.mxu0 %v1828
    %2496 = vmatprep.subr.bf16.mxu0 %v1833
    %2497 = vmatpush1.bf16.msra.mxu0 %v1832
    %2498 = vmatprep.subr.bf16.mxu0 %v1837
    %2499 = vmatpush1.bf16.msra.mxu0 %v1836
    %2500 = vmatprep.subr.bf16.mxu0 %v1841
    %2501 = vmatpush1.bf16.msra.mxu0 %v1840
    %2502 = vmatprep.subr.bf16.mxu0 %v1845
    %2503 = vmatpush1.bf16.msra.mxu0 %v1844
    %2504 = vmatprep.subr.bf16.mxu0 %v1849
    %2505 = vmatpush1.bf16.msra.mxu0 %v1848
    %2506 = vmatprep.subr.bf16.mxu0 %v1853
    %2507 = vmatpush1.bf16.msra.mxu0 %v1852
    %2508 = vmatprep.subr.bf16.mxu0 %v1857
    %2509 = vmatpush1.bf16.msra.mxu0 %v1856
    %2510 = vmatprep.mubr.bf16.mxu0 %v747
    %2511 = vmatmul.mubr.bf16.gmra.mrb[0].mxu0 %v746
    %v2512 = vpop.f32.mrb[0].mxu0
    %v2513 = vadd.f32 %v1021, %v2512
    %v2514 = vpop.f32.mrb[0].mxu0
    %v2515 = vadd.f32 %v1025, %v2514
    %v2516 = vpop.f32.mrb[0].mxu0
    %v2517 = vadd.f32 %v1021, %v2516
    %v2518 = vpop.f32.mrb[0].mxu0
    %v2519 = vadd.f32 %v1025, %v2518
    %2520 = vdwg.mxu0
    %2521 = vmatprep.subr.bf16.mxu0 %v1861
    %2522 = vmatpush1.bf16.msra.mxu0 %v1860
    %2523 = vmatprep.subr.bf16.mxu0 %v1865
    %2524 = vmatpush1.bf16.msra.mxu0 %v1864
    %2525 = vmatprep.subr.bf16.mxu0 %v1869
    %2526 = vmatpush1.bf16.msra.mxu0 %v1868
    %2527 = vmatprep.subr.bf16.mxu0 %v1873
    %2528 = vmatpush1.bf16.msra.mxu0 %v1872
    %2529 = vmatprep.subr.bf16.mxu0 %v1877
    %2530 = vmatpush1.bf16.msra.mxu0 %v1876
    %2531 = vmatprep.subr.bf16.mxu0 %v1881
    %2532 = vmatpush1.bf16.msra.mxu0 %v1880
    %2533 = vmatprep.subr.bf16.mxu0 %v1885
    %2534 = vmatpush1.bf16.msra.mxu0 %v1884
    %2535 = vmatprep.subr.bf16.mxu0 %v1889
    %2536 = vmatpush1.bf16.msra.mxu0 %v1888
    %2537 = vmatprep.subr.bf16.mxu0 %v1893
    %2538 = vmatpush1.bf16.msra.mxu0 %v1892
    %2539 = vmatprep.subr.bf16.mxu0 %v1897
    %2540 = vmatpush1.bf16.msra.mxu0 %v1896
    %2541 = vmatprep.subr.bf16.mxu0 %v1901
    %2542 = vmatpush1.bf16.msra.mxu0 %v1900
    %2543 = vmatprep.subr.bf16.mxu0 %v1905
    %2544 = vmatpush1.bf16.msra.mxu0 %v1904
    %2545 = vmatprep.subr.bf16.mxu0 %v1909
    %2546 = vmatpush1.bf16.msra.mxu0 %v1908
    %2547 = vmatprep.subr.bf16.mxu0 %v1913
    %2548 = vmatpush1.bf16.msra.mxu0 %v1912
    %2549 = vmatprep.subr.bf16.mxu0 %v1917
    %2550 = vmatpush1.bf16.msra.mxu0 %v1916
    %2551 = vmatprep.subr.bf16.mxu0 %v1921
    %2552 = vmatpush1.bf16.msra.mxu0 %v1920
    %2553 = vmatprep.mubr.bf16.mxu0 %v749
    %2554 = vmatmul.mubr.bf16.gmra.mrb[0].mxu0 %v748
    %v2555 = vpop.f32.mrb[0].mxu0
    %v2556 = vadd.f32 %v2513, %v2555
    %v2557 = vpop.f32.mrb[0].mxu0
    %v2558 = vadd.f32 %v2515, %v2557
    %v2559 = vpop.f32.mrb[0].mxu0
    %v2560 = vadd.f32 %v2517, %v2559
    %v2561 = vpop.f32.mrb[0].mxu0
    %v2562 = vadd.f32 %v2519, %v2561
    %2563 = vdwg.mxu0
    %2564 = vmatprep.subr.bf16.mxu0 %v1925
    %2565 = vmatpush1.bf16.msra.mxu0 %v1924
    %2566 = vmatprep.subr.bf16.mxu0 %v1929
    %2567 = vmatpush1.bf16.msra.mxu0 %v1928
    %2568 = vmatprep.subr.bf16.mxu0 %v1933
    %2569 = vmatpush1.bf16.msra.mxu0 %v1932
    %2570 = vmatprep.subr.bf16.mxu0 %v1937
    %2571 = vmatpush1.bf16.msra.mxu0 %v1936
    %2572 = vmatprep.subr.bf16.mxu0 %v1941
    %2573 = vmatpush1.bf16.msra.mxu0 %v1940
    %2574 = vmatprep.subr.bf16.mxu0 %v1945
    %2575 = vmatpush1.bf16.msra.mxu0 %v1944
    %2576 = vmatprep.subr.bf16.mxu0 %v1949
    %2577 = vmatpush1.bf16.msra.mxu0 %v1948
    %2578 = vmatprep.subr.bf16.mxu0 %v1953
    %2579 = vmatpush1.bf16.msra.mxu0 %v1952
    %2580 = vmatprep.subr.bf16.mxu0 %v1957
    %2581 = vmatpush1.bf16.msra.mxu0 %v1956
    %2582 = vmatprep.subr.bf16.mxu0 %v1961
    %2583 = vmatpush1.bf16.msra.mxu0 %v1960
    %2584 = vmatprep.subr.bf16.mxu0 %v1965
    %2585 = vmatpush1.bf16.msra.mxu0 %v1964
    %2586 = vmatprep.subr.bf16.mxu0 %v1969
    %2587 = vmatpush1.bf16.msra.mxu0 %v1968
    %2588 = vmatprep.subr.bf16.mxu0 %v1973
    %2589 = vmatpush1.bf16.msra.mxu0 %v1972
    %2590 = vmatprep.subr.bf16.mxu0 %v1977
    %2591 = vmatpush1.bf16.msra.mxu0 %v1976
    %2592 = vmatprep.subr.bf16.mxu0 %v1981
    %2593 = vmatpush1.bf16.msra.mxu0 %v1980
    %2594 = vmatprep.subr.bf16.mxu0 %v1985
    %2595 = vmatpush1.bf16.msra.mxu0 %v1984
    %2596 = vmatprep.mubr.bf16.mxu0 %v751
    %2597 = vmatmul.mubr.bf16.gmra.mrb[0].mxu0 %v750
    %v2598 = vpop.f32.mrb[0].mxu0
    %v2599 = vadd.f32 %v2556, %v2598
    %v2600 = vpop.f32.mrb[0].mxu0
    %v2601 = vadd.f32 %v2558, %v2600
    %v2602 = vpop.f32.mrb[0].mxu0
    %v2603 = vadd.f32 %v2560, %v2602
    %v2604 = vpop.f32.mrb[0].mxu0
    %v2605 = vadd.f32 %v2562, %v2604
    %2606 = vdwg.mxu0
    %2607 = vmatprep.subr.bf16.mxu0 %v1989
    %2608 = vmatpush1.bf16.msra.mxu0 %v1988
    %2609 = vmatprep.subr.bf16.mxu0 %v1993
    %2610 = vmatpush1.bf16.msra.mxu0 %v1992
    %2611 = vmatprep.subr.bf16.mxu0 %v1997
    %2612 = vmatpush1.bf16.msra.mxu0 %v1996
    %2613 = vmatprep.subr.bf16.mxu0 %v2001
    %2614 = vmatpush1.bf16.msra.mxu0 %v2000
    %2615 = vmatprep.subr.bf16.mxu0 %v2005
    %2616 = vmatpush1.bf16.msra.mxu0 %v2004
    %2617 = vmatprep.subr.bf16.mxu0 %v2009
    %2618 = vmatpush1.bf16.msra.mxu0 %v2008
    %2619 = vmatprep.subr.bf16.mxu0 %v2013
    %2620 = vmatpush1.bf16.msra.mxu0 %v2012
    %2621 = vmatprep.subr.bf16.mxu0 %v2017
    %2622 = vmatpush1.bf16.msra.mxu0 %v2016
    %2623 = vmatprep.subr.bf16.mxu0 %v2021
    %2624 = vmatpush1.bf16.msra.mxu0 %v2020
    %2625 = vmatprep.subr.bf16.mxu0 %v2025
    %2626 = vmatpush1.bf16.msra.mxu0 %v2024
    %2627 = vmatprep.subr.bf16.mxu0 %v2029
    %2628 = vmatpush1.bf16.msra.mxu0 %v2028
    %2629 = vmatprep.subr.bf16.mxu0 %v2033
    %2630 = vmatpush1.bf16.msra.mxu0 %v2032
    %2631 = vmatprep.subr.bf16.mxu0 %v2037
    %2632 = vmatpush1.bf16.msra.mxu0 %v2036
    %2633 = vmatprep.subr.bf16.mxu0 %v2041
    %2634 = vmatpush1.bf16.msra.mxu0 %v2040
    %2635 = vmatprep.subr.bf16.mxu0 %v2045
    %2636 = vmatpush1.bf16.msra.mxu0 %v2044
    %2637 = vmatprep.subr.bf16.mxu0 %v2049
    %2638 = vmatpush1.bf16.msra.mxu0 %v2048
    %2639 = vmatprep.mubr.bf16.mxu0 %v753
    %2640 = vmatmul.mubr.bf16.gmra.mrb[0].mxu0 %v752
    %v2641 = vpop.f32.mrb[0].mxu0
    %v2642 = vadd.f32 %v2599, %v2641
    %v2643 = vpop.f32.mrb[0].mxu0
    %v2644 = vadd.f32 %v2601, %v2643
    %v2645 = vpop.f32.mrb[0].mxu0
    %v2646 = vadd.f32 %v2603, %v2645
    %v2647 = vpop.f32.mrb[0].mxu0
    %v2648 = vadd.f32 %v2605, %v2647
    %2649 = vdwg.mxu0
    %v2650 = vmax.f32 %v2470, 0.0
    %v2651 = vmax.f32 %v2472, 0.0
    %v2652 = vmax.f32 %v2642, 0.0
    %v2653 = vmax.f32 %v2644, 0.0
    %v2654 = vmax.f32 %v2474, 0.0
    %v2655 = vmax.f32 %v2476, 0.0
    %v2656 = vmax.f32 %v2646, 0.0
    %v2657 = vmax.f32 %v2648, 0.0
    %v2658 = vmin.f32 %v2650, 6.0
    %v2659 = vmin.f32 %v2651, 6.0
    %v2660 = vmin.f32 %v2652, 6.0
    %v2661 = vmin.f32 %v2653, 6.0
    %v2662 = vmin.f32 %v2654, 6.0
    %v2663 = vmin.f32 %v2655, 6.0
    %v2664 = vmin.f32 %v2656, 6.0
    %v2665 = vmin.f32 %v2657, 6.0
    %v2666 = vpack.c.bf16 %v2662, %v2658
    %v2667 = vpack.c.bf16 %v2663, %v2659
    %v2668 = vpack.c.bf16 %v2664, %v2660
    %v2669 = vpack.c.bf16 %v2665, %v2661
    %v2670 = vld [vmem:[#allocation6] sm:$0xff]
    %v2671 = vld [vmem:[#allocation6 + $0x8] sm:$0xff]
    %v2672 = vld [vmem:[#allocation6 + $0x10] sm:$0xff]
    %v2673 = vld [vmem:[#allocation6 + $0x18] sm:$0xff]
    %v2674 = vld [vmem:[#allocation6 + $0x20] sm:$0xff]
    %v2675 = vld [vmem:[#allocation6 + $0x28] sm:$0xff]
    %v2676 = vld [vmem:[#allocation6 + $0x30] sm:$0xff]
    %v2677 = vld [vmem:[#allocation6 + $0x38] sm:$0xff]
    %v2678 = vld [vmem:[#allocation6 + $0x40] sm:$0xff]
    %v2679 = vld [vmem:[#allocation6 + $0x48] sm:$0xff]
    %v2680 = vld [vmem:[#allocation6 + $0x50] sm:$0xff]
    %v2681 = vld [vmem:[#allocation6 + $0x58] sm:$0xff]
    %v2682 = vld [vmem:[#allocation6 + $0x60] sm:$0xff]
    %v2683 = vld [vmem:[#allocation6 + $0x68] sm:$0xff]
    %v2684 = vld [vmem:[#allocation6 + $0x70] sm:$0xff]
    %v2685 = vld [vmem:[#allocation6 + $0x78] sm:$0xff]
    %v2686 = vld [vmem:[#allocation6 + $0x80] sm:$0xff]
    %v2687 = vld [vmem:[#allocation6 + $0x88] sm:$0xff]
    %v2688 = vld [vmem:[#allocation6 + $0x90] sm:$0xff]
    %v2689 = vld [vmem:[#allocation6 + $0x98] sm:$0xff]
    %v2690 = vld [vmem:[#allocation6 + $0xa0] sm:$0xff]
    %v2691 = vld [vmem:[#allocation6 + $0xa8] sm:$0xff]
    %v2692 = vld [vmem:[#allocation6 + $0xb0] sm:$0xff]
    %v2693 = vld [vmem:[#allocation6 + $0xb8] sm:$0xff]
    %v2694 = vld [vmem:[#allocation6 + $0xc0] sm:$0xff]
    %v2695 = vld [vmem:[#allocation6 + $0xc8] sm:$0xff]
    %v2696 = vld [vmem:[#allocation6 + $0xd0] sm:$0xff]
    %v2697 = vld [vmem:[#allocation6 + $0xd8] sm:$0xff]
    %v2698 = vld [vmem:[#allocation6 + $0xe0] sm:$0xff]
    %v2699 = vld [vmem:[#allocation6 + $0xe8] sm:$0xff]
    %v2700 = vld [vmem:[#allocation6 + $0xf0] sm:$0xff]
    %v2701 = vld [vmem:[#allocation6 + $0xf8] sm:$0xff]
    %v2702 = vld [vmem:[#allocation6 + $0x100] sm:$0xff]
    %v2703 = vld [vmem:[#allocation6 + $0x108] sm:$0xff]
    %v2704 = vld [vmem:[#allocation6 + $0x110] sm:$0xff]
    %v2705 = vld [vmem:[#allocation6 + $0x118] sm:$0xff]
    %v2706 = vld [vmem:[#allocation6 + $0x120] sm:$0xff]
    %v2707 = vld [vmem:[#allocation6 + $0x128] sm:$0xff]
    %v2708 = vld [vmem:[#allocation6 + $0x130] sm:$0xff]
    %v2709 = vld [vmem:[#allocation6 + $0x138] sm:$0xff]
    %v2710 = vld [vmem:[#allocation6 + $0x140] sm:$0xff]
    %v2711 = vld [vmem:[#allocation6 + $0x148] sm:$0xff]
    %v2712 = vld [vmem:[#allocation6 + $0x150] sm:$0xff]
    %v2713 = vld [vmem:[#allocation6 + $0x158] sm:$0xff]
    %v2714 = vld [vmem:[#allocation6 + $0x160] sm:$0xff]
    %v2715 = vld [vmem:[#allocation6 + $0x168] sm:$0xff]
    %v2716 = vld [vmem:[#allocation6 + $0x170] sm:$0xff]
    %v2717 = vld [vmem:[#allocation6 + $0x178] sm:$0xff]
    %v2718 = vld [vmem:[#allocation6 + $0x180] sm:$0xff]
    %v2719 = vld [vmem:[#allocation6 + $0x188] sm:$0xff]
    %v2720 = vld [vmem:[#allocation6 + $0x190] sm:$0xff]
    %v2721 = vld [vmem:[#allocation6 + $0x198] sm:$0xff]
    %v2722 = vld [vmem:[#allocation6 + $0x1a0] sm:$0xff]
    %v2723 = vld [vmem:[#allocation6 + $0x1a8] sm:$0xff]
    %v2724 = vld [vmem:[#allocation6 + $0x1b0] sm:$0xff]
    %v2725 = vld [vmem:[#allocation6 + $0x1b8] sm:$0xff]
    %v2726 = vld [vmem:[#allocation6 + $0x1c0] sm:$0xff]
    %v2727 = vld [vmem:[#allocation6 + $0x1c8] sm:$0xff]
    %v2728 = vld [vmem:[#allocation6 + $0x1d0] sm:$0xff]
    %v2729 = vld [vmem:[#allocation6 + $0x1d8] sm:$0xff]
    %v2730 = vld [vmem:[#allocation6 + $0x1e0] sm:$0xff]
    %v2731 = vld [vmem:[#allocation6 + $0x1e8] sm:$0xff]
    %v2732 = vld [vmem:[#allocation6 + $0x1f0] sm:$0xff]
    %v2733 = vld [vmem:[#allocation6 + $0x1f8] sm:$0xff]
    %v2734 = vlaneseq
    %v2735 = vshrl.u32 %v2734, 7
    %v2736 = vsub.s32 2, %v2735
    %v2737 = vrot.slane %v126, %v2736
    %v2738 = vlaneseq
    %v2739 = vshrl.u32 %v2738, 7
    %v2740 = vsub.s32 2, %v2739
    %v2741 = vrot.slane %v127, %v2740
    %v2806 = vunpack.c.l.b16 %v2670
    %v2807 = vunpack.c.h.b16 %v2670
    %v2808 = vunpack.c.l.b16 %v2671
    %v2809 = vunpack.c.h.b16 %v2671
    %v2810 = vunpack.c.l.b16 %v2672
    %v2811 = vunpack.c.h.b16 %v2672
    %v2812 = vunpack.c.l.b16 %v2673
    %v2813 = vunpack.c.h.b16 %v2673
    %v2814 = vunpack.c.l.b16 %v2674
    %v2815 = vunpack.c.h.b16 %v2674
    %v2816 = vunpack.c.l.b16 %v2675
    %v2817 = vunpack.c.h.b16 %v2675
    %v2818 = vunpack.c.l.b16 %v2676
    %v2819 = vunpack.c.h.b16 %v2676
    %v2820 = vunpack.c.l.b16 %v2677
    %v2821 = vunpack.c.h.b16 %v2677
    %v2822 = vunpack.c.l.b16 %v2678
    %v2823 = vunpack.c.h.b16 %v2678
    %v2824 = vunpack.c.l.b16 %v2679
    %v2825 = vunpack.c.h.b16 %v2679
    %v2826 = vunpack.c.l.b16 %v2680
    %v2827 = vunpack.c.h.b16 %v2680
    %v2828 = vunpack.c.l.b16 %v2681
    %v2829 = vunpack.c.h.b16 %v2681
    %v2830 = vunpack.c.l.b16 %v2682
    %v2831 = vunpack.c.h.b16 %v2682
    %v2832 = vunpack.c.l.b16 %v2683
    %v2833 = vunpack.c.h.b16 %v2683
    %v2834 = vunpack.c.l.b16 %v2684
    %v2835 = vunpack.c.h.b16 %v2684
    %v2836 = vunpack.c.l.b16 %v2685
    %v2837 = vunpack.c.h.b16 %v2685
    %v2838 = vunpack.c.l.b16 %v2686
    %v2839 = vunpack.c.h.b16 %v2686
    %v2840 = vunpack.c.l.b16 %v2687
    %v2841 = vunpack.c.h.b16 %v2687
    %v2842 = vunpack.c.l.b16 %v2688
    %v2843 = vunpack.c.h.b16 %v2688
    %v2844 = vunpack.c.l.b16 %v2689
    %v2845 = vunpack.c.h.b16 %v2689
    %v2846 = vunpack.c.l.b16 %v2690
    %v2847 = vunpack.c.h.b16 %v2690
    %v2848 = vunpack.c.l.b16 %v2691
    %v2849 = vunpack.c.h.b16 %v2691
    %v2850 = vunpack.c.l.b16 %v2692
    %v2851 = vunpack.c.h.b16 %v2692
    %v2852 = vunpack.c.l.b16 %v2693
    %v2853 = vunpack.c.h.b16 %v2693
    %v2854 = vunpack.c.l.b16 %v2694
    %v2855 = vunpack.c.h.b16 %v2694
    %v2856 = vunpack.c.l.b16 %v2695
    %v2857 = vunpack.c.h.b16 %v2695
    %v2858 = vunpack.c.l.b16 %v2696
    %v2859 = vunpack.c.h.b16 %v2696
    %v2860 = vunpack.c.l.b16 %v2697
    %v2861 = vunpack.c.h.b16 %v2697
    %v2862 = vunpack.c.l.b16 %v2698
    %v2863 = vunpack.c.h.b16 %v2698
    %v2864 = vunpack.c.l.b16 %v2699
    %v2865 = vunpack.c.h.b16 %v2699
    %v2866 = vunpack.c.l.b16 %v2700
    %v2867 = vunpack.c.h.b16 %v2700
    %v2868 = vunpack.c.l.b16 %v2701
    %v2869 = vunpack.c.h.b16 %v2701
    %v2870 = vunpack.c.l.b16 %v2702
    %v2871 = vunpack.c.h.b16 %v2702
    %v2872 = vunpack.c.l.b16 %v2703
    %v2873 = vunpack.c.h.b16 %v2703
    %v2874 = vunpack.c.l.b16 %v2704
    %v2875 = vunpack.c.h.b16 %v2704
    %v2876 = vunpack.c.l.b16 %v2705
    %v2877 = vunpack.c.h.b16 %v2705
    %v2878 = vunpack.c.l.b16 %v2706
    %v2879 = vunpack.c.h.b16 %v2706
    %v2880 = vunpack.c.l.b16 %v2707
    %v2881 = vunpack.c.h.b16 %v2707
    %v2882 = vunpack.c.l.b16 %v2708
    %v2883 = vunpack.c.h.b16 %v2708
    %v2884 = vunpack.c.l.b16 %v2709
    %v2885 = vunpack.c.h.b16 %v2709
    %v2886 = vunpack.c.l.b16 %v2710
    %v2887 = vunpack.c.h.b16 %v2710
    %v2888 = vunpack.c.l.b16 %v2711
    %v2889 = vunpack.c.h.b16 %v2711
    %v2890 = vunpack.c.l.b16 %v2712
    %v2891 = vunpack.c.h.b16 %v2712
    %v2892 = vunpack.c.l.b16 %v2713
    %v2893 = vunpack.c.h.b16 %v2713
    %v2894 = vunpack.c.l.b16 %v2714
    %v2895 = vunpack.c.h.b16 %v2714
    %v2896 = vunpack.c.l.b16 %v2715
    %v2897 = vunpack.c.h.b16 %v2715
    %v2898 = vunpack.c.l.b16 %v2716
    %v2899 = vunpack.c.h.b16 %v2716
    %v2900 = vunpack.c.l.b16 %v2717
    %v2901 = vunpack.c.h.b16 %v2717
    %v2902 = vunpack.c.l.b16 %v2718
    %v2903 = vunpack.c.h.b16 %v2718
    %v2904 = vunpack.c.l.b16 %v2719
    %v2905 = vunpack.c.h.b16 %v2719
    %v2906 = vunpack.c.l.b16 %v2720
    %v2907 = vunpack.c.h.b16 %v2720
    %v2908 = vunpack.c.l.b16 %v2721
    %v2909 = vunpack.c.h.b16 %v2721
    %v2910 = vunpack.c.l.b16 %v2722
    %v2911 = vunpack.c.h.b16 %v2722
    %v2912 = vunpack.c.l.b16 %v2723
    %v2913 = vunpack.c.h.b16 %v2723
    %v2914 = vunpack.c.l.b16 %v2724
    %v2915 = vunpack.c.h.b16 %v2724
    %v2916 = vunpack.c.l.b16 %v2725
    %v2917 = vunpack.c.h.b16 %v2725
    %v2918 = vunpack.c.l.b16 %v2726
    %v2919 = vunpack.c.h.b16 %v2726
    %v2920 = vunpack.c.l.b16 %v2727
    %v2921 = vunpack.c.h.b16 %v2727
    %v2922 = vunpack.c.l.b16 %v2728
    %v2923 = vunpack.c.h.b16 %v2728
    %v2924 = vunpack.c.l.b16 %v2729
    %v2925 = vunpack.c.h.b16 %v2729
    %v2926 = vunpack.c.l.b16 %v2730
    %v2927 = vunpack.c.h.b16 %v2730
    %v2928 = vunpack.c.l.b16 %v2731
    %v2929 = vunpack.c.h.b16 %v2731
    %v2930 = vunpack.c.l.b16 %v2732
    %v2931 = vunpack.c.h.b16 %v2732
    %v2932 = vunpack.c.l.b16 %v2733
    %v2933 = vunpack.c.h.b16 %v2733
    %v2934 = vpack.c.b16 %v2808, %v2806
    %v2935 = vpack.c.b16 %v2809, %v2807
    %v2936 = vpack.c.b16 %v2812, %v2810
    %v2937 = vpack.c.b16 %v2813, %v2811
    %v2938 = vpack.c.b16 %v2816, %v2814
    %v2939 = vpack.c.b16 %v2817, %v2815
    %v2940 = vpack.c.b16 %v2820, %v2818
    %v2941 = vpack.c.b16 %v2821, %v2819
    %v2942 = vpack.c.b16 %v2824, %v2822
    %v2943 = vpack.c.b16 %v2825, %v2823
    %v2944 = vpack.c.b16 %v2828, %v2826
    %v2945 = vpack.c.b16 %v2829, %v2827
    %v2946 = vpack.c.b16 %v2832, %v2830
    %v2947 = vpack.c.b16 %v2833, %v2831
    %v2948 = vpack.c.b16 %v2836, %v2834
    %v2949 = vpack.c.b16 %v2837, %v2835
    %v2950 = vpack.c.b16 %v2840, %v2838
    %v2951 = vpack.c.b16 %v2841, %v2839
    %v2952 = vpack.c.b16 %v2844, %v2842
    %v2953 = vpack.c.b16 %v2845, %v2843
    %v2954 = vpack.c.b16 %v2848, %v2846
    %v2955 = vpack.c.b16 %v2849, %v2847
    %v2956 = vpack.c.b16 %v2852, %v2850
    %v2957 = vpack.c.b16 %v2853, %v2851
    %v2958 = vpack.c.b16 %v2856, %v2854
    %v2959 = vpack.c.b16 %v2857, %v2855
    %v2960 = vpack.c.b16 %v2860, %v2858
    %v2961 = vpack.c.b16 %v2861, %v2859
    %v2962 = vpack.c.b16 %v2864, %v2862
    %v2963 = vpack.c.b16 %v2865, %v2863
    %v2964 = vpack.c.b16 %v2868, %v2866
    %v2965 = vpack.c.b16 %v2869, %v2867
    %v2966 = vpack.c.b16 %v2872, %v2870
    %v2967 = vpack.c.b16 %v2873, %v2871
    %v2968 = vpack.c.b16 %v2876, %v2874
    %v2969 = vpack.c.b16 %v2877, %v2875
    %v2970 = vpack.c.b16 %v2880, %v2878
    %v2971 = vpack.c.b16 %v2881, %v2879
    %v2972 = vpack.c.b16 %v2884, %v2882
    %v2973 = vpack.c.b16 %v2885, %v2883
    %v2974 = vpack.c.b16 %v2888, %v2886
    %v2975 = vpack.c.b16 %v2889, %v2887
    %v2976 = vpack.c.b16 %v2892, %v2890
    %v2977 = vpack.c.b16 %v2893, %v2891
    %v2978 = vpack.c.b16 %v2896, %v2894
    %v2979 = vpack.c.b16 %v2897, %v2895
    %v2980 = vpack.c.b16 %v2900, %v2898
    %v2981 = vpack.c.b16 %v2901, %v2899
    %v2982 = vpack.c.b16 %v2904, %v2902
    %v2983 = vpack.c.b16 %v2905, %v2903
    %v2984 = vpack.c.b16 %v2908, %v2906
    %v2985 = vpack.c.b16 %v2909, %v2907
    %v2986 = vpack.c.b16 %v2912, %v2910
    %v2987 = vpack.c.b16 %v2913, %v2911
    %v2988 = vpack.c.b16 %v2916, %v2914
    %v2989 = vpack.c.b16 %v2917, %v2915
    %v2990 = vpack.c.b16 %v2920, %v2918
    %v2991 = vpack.c.b16 %v2921, %v2919
    %v2992 = vpack.c.b16 %v2924, %v2922
    %v2993 = vpack.c.b16 %v2925, %v2923
    %v2994 = vpack.c.b16 %v2928, %v2926
    %v2995 = vpack.c.b16 %v2929, %v2927
    %v2996 = vpack.c.b16 %v2932, %v2930
    %v2997 = vpack.c.b16 %v2933, %v2931
    %3062 = vmatprep.subr.bf16.mxu0 %v2935
    %3063 = vmatpush1.bf16.msra.mxu0 %v2934
    %3064 = vmatprep.subr.bf16.mxu0 %v2937
    %3065 = vmatpush1.bf16.msra.mxu0 %v2936
    %3066 = vmatprep.subr.bf16.mxu0 %v2939
    %3067 = vmatpush1.bf16.msra.mxu0 %v2938
    %3068 = vmatprep.subr.bf16.mxu0 %v2941
    %3069 = vmatpush1.bf16.msra.mxu0 %v2940
    %3070 = vmatprep.subr.bf16.mxu0 %v2943
    %3071 = vmatpush1.bf16.msra.mxu0 %v2942
    %3072 = vmatprep.subr.bf16.mxu0 %v2945
    %3073 = vmatpush1.bf16.msra.mxu0 %v2944
    %3074 = vmatprep.subr.bf16.mxu0 %v2947
    %3075 = vmatpush1.bf16.msra.mxu0 %v2946
    %3076 = vmatprep.subr.bf16.mxu0 %v2949
    %3077 = vmatpush1.bf16.msra.mxu0 %v2948
    %3078 = vmatprep.subr.bf16.mxu0 %v2951
    %3079 = vmatpush1.bf16.msra.mxu0 %v2950
    %3080 = vmatprep.subr.bf16.mxu0 %v2953
    %3081 = vmatpush1.bf16.msra.mxu0 %v2952
    %3082 = vmatprep.subr.bf16.mxu0 %v2955
    %3083 = vmatpush1.bf16.msra.mxu0 %v2954
    %3084 = vmatprep.subr.bf16.mxu0 %v2957
    %3085 = vmatpush1.bf16.msra.mxu0 %v2956
    %3086 = vmatprep.subr.bf16.mxu0 %v2959
    %3087 = vmatpush1.bf16.msra.mxu0 %v2958
    %3088 = vmatprep.subr.bf16.mxu0 %v2961
    %3089 = vmatpush1.bf16.msra.mxu0 %v2960
    %3090 = vmatprep.subr.bf16.mxu0 %v2963
    %3091 = vmatpush1.bf16.msra.mxu0 %v2962
    %3092 = vmatprep.subr.bf16.mxu0 %v2965
    %3093 = vmatpush1.bf16.msra.mxu0 %v2964
    %3094 = vmatprep.mubr.bf16.mxu0 %v2667
    %3095 = vmatmul.mubr.bf16.gmra.mrb[0].mxu0 %v2666
    %v3096 = vpop.f32.mrb[0].mxu0
    %v3097 = vadd.f32 %v2737, %v3096
    %v3098 = vpop.f32.mrb[0].mxu0
    %v3099 = vadd.f32 %v2741, %v3098
    %v3100 = vpop.f32.mrb[0].mxu0
    %v3101 = vadd.f32 %v2737, %v3100
    %v3102 = vpop.f32.mrb[0].mxu0
    %v3103 = vadd.f32 %v2741, %v3102
    %3104 = vdwg.mxu0
    %3105 = vmatprep.subr.bf16.mxu0 %v2967
    %3106 = vmatpush1.bf16.msra.mxu0 %v2966
    %3107 = vmatprep.subr.bf16.mxu0 %v2969
    %3108 = vmatpush1.bf16.msra.mxu0 %v2968
    %3109 = vmatprep.subr.bf16.mxu0 %v2971
    %3110 = vmatpush1.bf16.msra.mxu0 %v2970
    %3111 = vmatprep.subr.bf16.mxu0 %v2973
    %3112 = vmatpush1.bf16.msra.mxu0 %v2972
    %3113 = vmatprep.subr.bf16.mxu0 %v2975
    %3114 = vmatpush1.bf16.msra.mxu0 %v2974
    %3115 = vmatprep.subr.bf16.mxu0 %v2977
    %3116 = vmatpush1.bf16.msra.mxu0 %v2976
    %3117 = vmatprep.subr.bf16.mxu0 %v2979
    %3118 = vmatpush1.bf16.msra.mxu0 %v2978
    %3119 = vmatprep.subr.bf16.mxu0 %v2981
    %3120 = vmatpush1.bf16.msra.mxu0 %v2980
    %3121 = vmatprep.subr.bf16.mxu0 %v2983
    %3122 = vmatpush1.bf16.msra.mxu0 %v2982
    %3123 = vmatprep.subr.bf16.mxu0 %v2985
    %3124 = vmatpush1.bf16.msra.mxu0 %v2984
    %3125 = vmatprep.subr.bf16.mxu0 %v2987
    %3126 = vmatpush1.bf16.msra.mxu0 %v2986
    %3127 = vmatprep.subr.bf16.mxu0 %v2989
    %3128 = vmatpush1.bf16.msra.mxu0 %v2988
    %3129 = vmatprep.subr.bf16.mxu0 %v2991
    %3130 = vmatpush1.bf16.msra.mxu0 %v2990
    %3131 = vmatprep.subr.bf16.mxu0 %v2993
    %3132 = vmatpush1.bf16.msra.mxu0 %v2992
    %3133 = vmatprep.subr.bf16.mxu0 %v2995
    %3134 = vmatpush1.bf16.msra.mxu0 %v2994
    %3135 = vmatprep.subr.bf16.mxu0 %v2997
    %3136 = vmatpush1.bf16.msra.mxu0 %v2996
    %3137 = vmatprep.mubr.bf16.mxu0 %v2669
    %3138 = vmatmul.mubr.bf16.gmra.mrb[0].mxu0 %v2668
    %v3139 = vpop.f32.mrb[0].mxu0
    %v3140 = vadd.f32 %v3097, %v3139
    %v3141 = vpop.f32.mrb[0].mxu0
    %v3142 = vadd.f32 %v3099, %v3141
    %v3143 = vpop.f32.mrb[0].mxu0
    %v3144 = vadd.f32 %v3101, %v3143
    %v3145 = vpop.f32.mrb[0].mxu0
    %v3146 = vadd.f32 %v3103, %v3145
    %3147 = vdwg.mxu0
    %v3148 = vmax.f32 %v3140, 0.0
    %v3149 = vmax.f32 %v3142, 0.0
    %v3150 = vmax.f32 %v3144, 0.0
    %v3151 = vmax.f32 %v3146, 0.0
    %v3152 = vmin.f32 %v3148, 6.0
    %v3153 = vmin.f32 %v3149, 6.0
    %v3154 = vmin.f32 %v3150, 6.0
    %v3155 = vmin.f32 %v3151, 6.0
    %v3156 = vpack.c.bf16 %v3154, %v3152
    %v3157 = vpack.c.bf16 %v3155, %v3153
    %v3158 = vld [vmem:[#allocation7] sm:$0xf]
    %v3159 = vld [vmem:[#allocation7 + $0x4] sm:$0xf]
    %v3160 = vld [vmem:[#allocation7 + $0x8] sm:$0xf]
    %v3161 = vld [vmem:[#allocation7 + $0xc] sm:$0xf]
    %v3162 = vld [vmem:[#allocation7 + $0x10] sm:$0xf]
    %v3163 = vld [vmem:[#allocation7 + $0x14] sm:$0xf]
    %v3164 = vld [vmem:[#allocation7 + $0x18] sm:$0xf]
    %v3165 = vld [vmem:[#allocation7 + $0x1c] sm:$0xf]
    %v3166 = vld [vmem:[#allocation7 + $0x20] sm:$0xf]
    %v3167 = vld [vmem:[#allocation7 + $0x24] sm:$0xf]
    %v3168 = vld [vmem:[#allocation7 + $0x28] sm:$0xf]
    %v3169 = vld [vmem:[#allocation7 + $0x2c] sm:$0xf]
    %v3170 = vld [vmem:[#allocation7 + $0x30] sm:$0xf]
    %v3171 = vld [vmem:[#allocation7 + $0x34] sm:$0xf]
    %v3172 = vld [vmem:[#allocation7 + $0x38] sm:$0xf]
    %v3173 = vld [vmem:[#allocation7 + $0x3c] sm:$0xf]
    %v3174 = vld [vmem:[#allocation7 + $0x40] sm:$0xf]
    %v3175 = vld [vmem:[#allocation7 + $0x44] sm:$0xf]
    %v3176 = vld [vmem:[#allocation7 + $0x48] sm:$0xf]
    %v3177 = vld [vmem:[#allocation7 + $0x4c] sm:$0xf]
    %v3178 = vld [vmem:[#allocation7 + $0x50] sm:$0xf]
    %v3179 = vld [vmem:[#allocation7 + $0x54] sm:$0xf]
    %v3180 = vld [vmem:[#allocation7 + $0x58] sm:$0xf]
    %v3181 = vld [vmem:[#allocation7 + $0x5c] sm:$0xf]
    %v3182 = vld [vmem:[#allocation7 + $0x60] sm:$0xf]
    %v3183 = vld [vmem:[#allocation7 + $0x64] sm:$0xf]
    %v3184 = vld [vmem:[#allocation7 + $0x68] sm:$0xf]
    %v3185 = vld [vmem:[#allocation7 + $0x6c] sm:$0xf]
    %v3186 = vld [vmem:[#allocation7 + $0x70] sm:$0xf]
    %v3187 = vld [vmem:[#allocation7 + $0x74] sm:$0xf]
    %v3188 = vld [vmem:[#allocation7 + $0x78] sm:$0xf]
    %v3189 = vld [vmem:[#allocation7 + $0x7c] sm:$0xf]
    %v3190 = vlaneseq
    %v3191 = vshrl.u32 %v3190, 7
    %v3192 = vsub.s32 3, %v3191
    %v3193 = vrot.slane %v126, %v3192
    %v3226 = vunpack.c.l.b16 %v3158
    %v3227 = vunpack.c.l.b16 %v3159
    %v3228 = vunpack.c.l.b16 %v3160
    %v3229 = vunpack.c.l.b16 %v3161
    %v3230 = vunpack.c.l.b16 %v3162
    %v3231 = vunpack.c.l.b16 %v3163
    %v3232 = vunpack.c.l.b16 %v3164
    %v3233 = vunpack.c.l.b16 %v3165
    %v3234 = vunpack.c.l.b16 %v3166
    %v3235 = vunpack.c.l.b16 %v3167
    %v3236 = vunpack.c.l.b16 %v3168
    %v3237 = vunpack.c.l.b16 %v3169
    %v3238 = vunpack.c.l.b16 %v3170
    %v3239 = vunpack.c.l.b16 %v3171
    %v3240 = vunpack.c.l.b16 %v3172
    %v3241 = vunpack.c.l.b16 %v3173
    %v3242 = vunpack.c.l.b16 %v3174
    %v3243 = vunpack.c.l.b16 %v3175
    %v3244 = vunpack.c.l.b16 %v3176
    %v3245 = vunpack.c.l.b16 %v3177
    %v3246 = vunpack.c.l.b16 %v3178
    %v3247 = vunpack.c.l.b16 %v3179
    %v3248 = vunpack.c.l.b16 %v3180
    %v3249 = vunpack.c.l.b16 %v3181
    %v3250 = vunpack.c.l.b16 %v3182
    %v3251 = vunpack.c.l.b16 %v3183
    %v3252 = vunpack.c.l.b16 %v3184
    %v3253 = vunpack.c.l.b16 %v3185
    %v3254 = vunpack.c.l.b16 %v3186
    %v3255 = vunpack.c.l.b16 %v3187
    %v3256 = vunpack.c.l.b16 %v3188
    %v3257 = vunpack.c.l.b16 %v3189
    %v3258 = vpack.c.b16 %v3227, %v3226
    %v3259 = vpack.c.b16 %v3229, %v3228
    %v3260 = vpack.c.b16 %v3231, %v3230
    %v3261 = vpack.c.b16 %v3233, %v3232
    %v3262 = vpack.c.b16 %v3235, %v3234
    %v3263 = vpack.c.b16 %v3237, %v3236
    %v3264 = vpack.c.b16 %v3239, %v3238
    %v3265 = vpack.c.b16 %v3241, %v3240
    %v3266 = vpack.c.b16 %v3243, %v3242
    %v3267 = vpack.c.b16 %v3245, %v3244
    %v3268 = vpack.c.b16 %v3247, %v3246
    %v3269 = vpack.c.b16 %v3249, %v3248
    %v3270 = vpack.c.b16 %v3251, %v3250
    %v3271 = vpack.c.b16 %v3253, %v3252
    %v3272 = vpack.c.b16 %v3255, %v3254
    %v3273 = vpack.c.b16 %v3257, %v3256
    %3290 = vmatprep.subr.bf16.mxu0 0
    %3291 = vmatpush1.bf16.msra.mxu0 %v3258
    %3292 = vmatprep.subr.bf16.mxu0 0
    %3293 = vmatpush1.bf16.msra.mxu0 %v3259
    %3294 = vmatprep.subr.bf16.mxu0 0
    %3295 = vmatpush1.bf16.msra.mxu0 %v3260
    %3296 = vmatprep.subr.bf16.mxu0 0
    %3297 = vmatpush1.bf16.msra.mxu0 %v3261
    %3298 = vmatprep.subr.bf16.mxu0 0
    %3299 = vmatpush1.bf16.msra.mxu0 %v3262
    %3300 = vmatprep.subr.bf16.mxu0 0
    %3301 = vmatpush1.bf16.msra.mxu0 %v3263
    %3302 = vmatprep.subr.bf16.mxu0 0
    %3303 = vmatpush1.bf16.msra.mxu0 %v3264
    %3304 = vmatprep.subr.bf16.mxu0 0
    %3305 = vmatpush1.bf16.msra.mxu0 %v3265
    %3306 = vmatprep.subr.bf16.mxu0 0
    %3307 = vmatpush1.bf16.msra.mxu0 %v3266
    %3308 = vmatprep.subr.bf16.mxu0 0
    %3309 = vmatpush1.bf16.msra.mxu0 %v3267
    %3310 = vmatprep.subr.bf16.mxu0 0
    %3311 = vmatpush1.bf16.msra.mxu0 %v3268
    %3312 = vmatprep.subr.bf16.mxu0 0
    %3313 = vmatpush1.bf16.msra.mxu0 %v3269
    %3314 = vmatprep.subr.bf16.mxu0 0
    %3315 = vmatpush1.bf16.msra.mxu0 %v3270
    %3316 = vmatprep.subr.bf16.mxu0 0
    %3317 = vmatpush1.bf16.msra.mxu0 %v3271
    %3318 = vmatprep.subr.bf16.mxu0 0
    %3319 = vmatpush1.bf16.msra.mxu0 %v3272
    %3320 = vmatprep.subr.bf16.mxu0 0
    %3321 = vmatpush1.bf16.msra.mxu0 %v3273
    %3322 = vmatprep.mubr.bf16.mxu0 %v3157
    %3323 = vmatmul.mubr.bf16.gmra.mrb[0].mxu0 %v3156
    %v3324 = vpop.f32.mrb[0].mxu0
    %v3325 = vadd.f32 %v3193, %v3324
    %v3326 = vpop.f32.mrb[0].mxu0
    %v3327 = vpop.f32.mrb[0].mxu0
    %v3328 = vadd.f32 %v3193, %v3327
    %v3329 = vpop.f32.mrb[0].mxu0
    %3330 = vdwg.mxu0
    %v3331 = vmax.f32 %v3325, 0.0
    %v3332 = vmax.f32 %v3328, 0.0
    %v3333 = vmin.f32 %v3331, 6.0
    %v3334 = vmin.f32 %v3332, 6.0
    %v3335 = vpack.c.bf16 %v3334, %v3333
    %v3336 = vld [vmem:[%s5] sm:$0xf]
    %v3337 = vld [vmem:[%s5 + $0x4] sm:$0xf]
    %v3338 = vld [vmem:[%s5 + $0x8] sm:$0xf]
    %v3339 = vld [vmem:[%s5 + $0xc] sm:$0xf]
    %v3340 = vld [vmem:[%s5 + $0x10] sm:$0xf]
    %v3341 = vld [vmem:[%s5 + $0x14] sm:$0xf]
    %v3342 = vld [vmem:[%s5 + $0x18] sm:$0xf]
    %v3343 = vld [vmem:[%s5 + $0x1c] sm:$0xf]
    %v3344 = vld [vmem:[%s5 + $0x20] sm:$0xf]
    %v3345 = vld [vmem:[%s5 + $0x24] sm:$0xf]
    %v3346 = vld [vmem:[%s5 + $0x28] sm:$0xf]
    %v3347 = vld [vmem:[%s5 + $0x2c] sm:$0xf]
    %v3348 = vld [vmem:[%s5 + $0x30] sm:$0xf]
    %v3349 = vld [vmem:[%s5 + $0x34] sm:$0xf]
    %v3350 = vld [vmem:[%s5 + $0x38] sm:$0xf]
    %v3351 = vld [vmem:[%s5 + $0x3c] sm:$0xf]
    %v3352 = vlaneseq
    %v3353 = vshrl.u32 %v3352, 7
    %v3354 = vsub.s32 4, %v3353
    %v3355 = vrot.slane %v126, %v3354
    %v3372 = vunpack.c.l.b16 %v3336
    %v3373 = vunpack.c.l.b16 %v3337
    %v3374 = vunpack.c.l.b16 %v3338
    %v3375 = vunpack.c.l.b16 %v3339
    %v3376 = vunpack.c.l.b16 %v3340
    %v3377 = vunpack.c.l.b16 %v3341
    %v3378 = vunpack.c.l.b16 %v3342
    %v3379 = vunpack.c.l.b16 %v3343
    %v3380 = vunpack.c.l.b16 %v3344
    %v3381 = vunpack.c.l.b16 %v3345
    %v3382 = vunpack.c.l.b16 %v3346
    %v3383 = vunpack.c.l.b16 %v3347
    %v3384 = vunpack.c.l.b16 %v3348
    %v3385 = vunpack.c.l.b16 %v3349
    %v3386 = vunpack.c.l.b16 %v3350
    %v3387 = vunpack.c.l.b16 %v3351
    %v3388 = vpack.c.b16 %v3373, %v3372
    %v3389 = vpack.c.b16 %v3375, %v3374
    %v3390 = vpack.c.b16 %v3377, %v3376
    %v3391 = vpack.c.b16 %v3379, %v3378
    %v3392 = vpack.c.b16 %v3381, %v3380
    %v3393 = vpack.c.b16 %v3383, %v3382
    %v3394 = vpack.c.b16 %v3385, %v3384
    %v3395 = vpack.c.b16 %v3387, %v3386
    %3404 = vmatprep.subr.bf16.mxu0 0
    %3405 = vmatpush1.bf16.msra.mxu0 %v3388
    %3406 = vmatprep.subr.bf16.mxu0 0
    %3407 = vmatpush1.bf16.msra.mxu0 %v3389
    %3408 = vmatprep.subr.bf16.mxu0 0
    %3409 = vmatpush1.bf16.msra.mxu0 %v3390
    %3410 = vmatprep.subr.bf16.mxu0 0
    %3411 = vmatpush1.bf16.msra.mxu0 %v3391
    %3412 = vmatprep.subr.bf16.mxu0 0
    %3413 = vmatpush1.bf16.msra.mxu0 %v3392
    %3414 = vmatprep.subr.bf16.mxu0 0
    %3415 = vmatpush1.bf16.msra.mxu0 %v3393
    %3416 = vmatprep.subr.bf16.mxu0 0
    %3417 = vmatpush1.bf16.msra.mxu0 %v3394
    %3418 = vmatprep.subr.bf16.mxu0 0
    %3419 = vmatpush1.bf16.msra.mxu0 %v3395
    %3420 = vmatprep.subr.bf16.mxu0 0
    %3421 = vmatpush1.bf16.msra.mxu0 0
    %3422 = vmatprep.subr.bf16.mxu0 0
    %3423 = vmatpush1.bf16.msra.mxu0 0
    %3424 = vmatprep.subr.bf16.mxu0 0
    %3425 = vmatpush1.bf16.msra.mxu0 0
    %3426 = vmatprep.subr.bf16.mxu0 0
    %3427 = vmatpush1.bf16.msra.mxu0 0
    %3428 = vmatprep.subr.bf16.mxu0 0
    %3429 = vmatpush1.bf16.msra.mxu0 0
    %3430 = vmatprep.subr.bf16.mxu0 0
    %3431 = vmatpush1.bf16.msra.mxu0 0
    %3432 = vmatprep.subr.bf16.mxu0 0
    %3433 = vmatpush1.bf16.msra.mxu0 0
    %3434 = vmatprep.subr.bf16.mxu0 0
    %3435 = vmatpush1.bf16.msra.mxu0 0
    %3436 = vmatprep.mubr.bf16.mxu0 0
    %3437 = vmatmul.mubr.bf16.gmra.mrb[0].mxu0 %v3335
    %v3438 = vpop.f32.mrb[0].mxu0
    %v3439 = vadd.f32 %v3355, %v3438
    %v3440 = vpop.f32.mrb[0].mxu0
    %v3441 = vpop.f32.mrb[0].mxu0
    %v3442 = vadd.f32 %v3355, %v3441
    %v3443 = vpop.f32.mrb[0].mxu0
    %3444 = vdwg.mxu0
    %v3445 = vmax.f32 %v3439, 0.0
    %v3446 = vmax.f32 %v3442, 0.0
    %v3447 = vmin.f32 %v3445, 6.0
    %v3448 = vmin.f32 %v3446, 6.0
    %v3449 = vpack.c.bf16 %v3448, %v3447
    %v3450 = vld [vmem:[#allocation9] sm:$0xf]
    %v3451 = vld [vmem:[#allocation9 + $0x4] sm:$0xf]
    %v3452 = vld [vmem:[#allocation9 + $0x8] sm:$0xf]
    %v3453 = vld [vmem:[#allocation9 + $0xc] sm:$0xf]
    %v3454 = vld [vmem:[#allocation9 + $0x10] sm:$0xf]
    %v3455 = vld [vmem:[#allocation9 + $0x14] sm:$0xf]
    %v3456 = vld [vmem:[#allocation9 + $0x18] sm:$0xf]
    %v3457 = vld [vmem:[#allocation9 + $0x1c] sm:$0xf]
    %v3458 = vld [vmem:[#allocation9 + $0x20] sm:$0xf]
    %v3459 = vld [vmem:[#allocation9 + $0x24] sm:$0xf]
    %v3460 = vld [vmem:[#allocation9 + $0x28] sm:$0xf]
    %v3461 = vld [vmem:[#allocation9 + $0x2c] sm:$0xf]
    %v3462 = vld [vmem:[#allocation9 + $0x30] sm:$0xf]
    %v3463 = vld [vmem:[#allocation9 + $0x34] sm:$0xf]
    %v3464 = vld [vmem:[#allocation9 + $0x38] sm:$0xf]
    %v3465 = vld [vmem:[#allocation9 + $0x3c] sm:$0xf]
    %v3466 = vlaneseq
    %v3467 = vshrl.u32 %v3466, 7
    %v3468 = vsub.s32 5, %v3467
    %v3469 = vrot.slane %v126, %v3468
    %v3486 = vunpack.c.l.b16 %v3450
    %v3487 = vunpack.c.l.b16 %v3451
    %v3488 = vunpack.c.l.b16 %v3452
    %v3489 = vunpack.c.l.b16 %v3453
    %v3490 = vunpack.c.l.b16 %v3454
    %v3491 = vunpack.c.l.b16 %v3455
    %v3492 = vunpack.c.l.b16 %v3456
    %v3493 = vunpack.c.l.b16 %v3457
    %v3494 = vunpack.c.l.b16 %v3458
    %v3495 = vunpack.c.l.b16 %v3459
    %v3496 = vunpack.c.l.b16 %v3460
    %v3497 = vunpack.c.l.b16 %v3461
    %v3498 = vunpack.c.l.b16 %v3462
    %v3499 = vunpack.c.l.b16 %v3463
    %v3500 = vunpack.c.l.b16 %v3464
    %v3501 = vunpack.c.l.b16 %v3465
    %v3502 = vpack.c.b16 %v3487, %v3486
    %v3503 = vpack.c.b16 %v3489, %v3488
    %v3504 = vpack.c.b16 %v3491, %v3490
    %v3505 = vpack.c.b16 %v3493, %v3492
    %v3506 = vpack.c.b16 %v3495, %v3494
    %v3507 = vpack.c.b16 %v3497, %v3496
    %v3508 = vpack.c.b16 %v3499, %v3498
    %v3509 = vpack.c.b16 %v3501, %v3500
    %3518 = vmatprep.subr.bf16.mxu0 0
    %3519 = vmatpush1.bf16.msra.mxu0 %v3502
    %3520 = vmatprep.subr.bf16.mxu0 0
    %3521 = vmatpush1.bf16.msra.mxu0 %v3503
    %3522 = vmatprep.subr.bf16.mxu0 0
    %3523 = vmatpush1.bf16.msra.mxu0 %v3504
    %3524 = vmatprep.subr.bf16.mxu0 0
    %3525 = vmatpush1.bf16.msra.mxu0 %v3505
    %3526 = vmatprep.subr.bf16.mxu0 0
    %3527 = vmatpush1.bf16.msra.mxu0 %v3506
    %3528 = vmatprep.subr.bf16.mxu0 0
    %3529 = vmatpush1.bf16.msra.mxu0 %v3507
    %3530 = vmatprep.subr.bf16.mxu0 0
    %3531 = vmatpush1.bf16.msra.mxu0 %v3508
    %3532 = vmatprep.subr.bf16.mxu0 0
    %3533 = vmatpush1.bf16.msra.mxu0 %v3509
    %3534 = vmatprep.subr.bf16.mxu0 0
    %3535 = vmatpush1.bf16.msra.mxu0 0
    %3536 = vmatprep.subr.bf16.mxu0 0
    %3537 = vmatpush1.bf16.msra.mxu0 0
    %3538 = vmatprep.subr.bf16.mxu0 0
    %3539 = vmatpush1.bf16.msra.mxu0 0
    %3540 = vmatprep.subr.bf16.mxu0 0
    %3541 = vmatpush1.bf16.msra.mxu0 0
    %3542 = vmatprep.subr.bf16.mxu0 0
    %3543 = vmatpush1.bf16.msra.mxu0 0
    %3544 = vmatprep.subr.bf16.mxu0 0
    %3545 = vmatpush1.bf16.msra.mxu0 0
    %3546 = vmatprep.subr.bf16.mxu0 0
    %3547 = vmatpush1.bf16.msra.mxu0 0
    %3548 = vmatprep.subr.bf16.mxu0 0
    %3549 = vmatpush1.bf16.msra.mxu0 0
    %3550 = vmatprep.mubr.bf16.mxu0 0
    %3551 = vmatmul.mubr.bf16.gmra.mrb[0].mxu0 %v3449
    %v3552 = vpop.f32.mrb[0].mxu0
    %v3553 = vadd.f32 %v3469, %v3552
    %v3554 = vpop.f32.mrb[0].mxu0
    %v3555 = vpop.f32.mrb[0].mxu0
    %v3556 = vadd.f32 %v3469, %v3555
    %v3557 = vpop.f32.mrb[0].mxu0
    %3558 = vdwg.mxu0
    %v3559 = vmax.f32 %v3553, 0.0
    %v3560 = vmax.f32 %v3556, 0.0
    %v3561 = vmin.f32 %v3559, 6.0
    %v3562 = vmin.f32 %v3560, 6.0
    %v3563 = vpack.c.bf16 %v3562, %v3561
    %v3564 = vld [vmem:[#allocation10] sm:$0xf]
    %v3565 = vld [vmem:[#allocation10 + $0x4] sm:$0xf]
    %v3566 = vld [vmem:[#allocation10 + $0x8] sm:$0xf]
    %v3567 = vld [vmem:[#allocation10 + $0xc] sm:$0xf]
    %v3568 = vld [vmem:[#allocation10 + $0x10] sm:$0xf]
    %v3569 = vld [vmem:[#allocation10 + $0x14] sm:$0xf]
    %v3570 = vld [vmem:[#allocation10 + $0x18] sm:$0xf]
    %v3571 = vld [vmem:[#allocation10 + $0x1c] sm:$0xf]
    %v3572 = vld [vmem:[#allocation10 + $0x20] sm:$0xf]
    %v3573 = vld [vmem:[#allocation10 + $0x24] sm:$0xf]
    %v3574 = vld [vmem:[#allocation10 + $0x28] sm:$0xf]
    %v3575 = vld [vmem:[#allocation10 + $0x2c] sm:$0xf]
    %v3576 = vld [vmem:[#allocation10 + $0x30] sm:$0xf]
    %v3577 = vld [vmem:[#allocation10 + $0x34] sm:$0xf]
    %v3578 = vld [vmem:[#allocation10 + $0x38] sm:$0xf]
    %v3579 = vld [vmem:[#allocation10 + $0x3c] sm:$0xf]
    %v3580 = vlaneseq
    %v3581 = vshrl.u32 %v3580, 7
    %v3582 = vsub.s32 6, %v3581
    %v3583 = vrot.slane %v126, %v3582
    %v3600 = vunpack.c.l.b16 %v3564
    %v3601 = vunpack.c.l.b16 %v3565
    %v3602 = vunpack.c.l.b16 %v3566
    %v3603 = vunpack.c.l.b16 %v3567
    %v3604 = vunpack.c.l.b16 %v3568
    %v3605 = vunpack.c.l.b16 %v3569
    %v3606 = vunpack.c.l.b16 %v3570
    %v3607 = vunpack.c.l.b16 %v3571
    %v3608 = vunpack.c.l.b16 %v3572
    %v3609 = vunpack.c.l.b16 %v3573
    %v3610 = vunpack.c.l.b16 %v3574
    %v3611 = vunpack.c.l.b16 %v3575
    %v3612 = vunpack.c.l.b16 %v3576
    %v3613 = vunpack.c.l.b16 %v3577
    %v3614 = vunpack.c.l.b16 %v3578
    %v3615 = vunpack.c.l.b16 %v3579
    %v3616 = vpack.c.b16 %v3601, %v3600
    %v3617 = vpack.c.b16 %v3603, %v3602
    %v3618 = vpack.c.b16 %v3605, %v3604
    %v3619 = vpack.c.b16 %v3607, %v3606
    %v3620 = vpack.c.b16 %v3609, %v3608
    %v3621 = vpack.c.b16 %v3611, %v3610
    %v3622 = vpack.c.b16 %v3613, %v3612
    %v3623 = vpack.c.b16 %v3615, %v3614
    %3632 = vmatprep.subr.bf16.mxu0 0
    %3633 = vmatpush1.bf16.msra.mxu0 %v3616
    %3634 = vmatprep.subr.bf16.mxu0 0
    %3635 = vmatpush1.bf16.msra.mxu0 %v3617
    %3636 = vmatprep.subr.bf16.mxu0 0
    %3637 = vmatpush1.bf16.msra.mxu0 %v3618
    %3638 = vmatprep.subr.bf16.mxu0 0
    %3639 = vmatpush1.bf16.msra.mxu0 %v3619
    %3640 = vmatprep.subr.bf16.mxu0 0
    %3641 = vmatpush1.bf16.msra.mxu0 %v3620
    %3642 = vmatprep.subr.bf16.mxu0 0
    %3643 = vmatpush1.bf16.msra.mxu0 %v3621
    %3644 = vmatprep.subr.bf16.mxu0 0
    %3645 = vmatpush1.bf16.msra.mxu0 %v3622
    %3646 = vmatprep.subr.bf16.mxu0 0
    %3647 = vmatpush1.bf16.msra.mxu0 %v3623
    %3648 = vmatprep.subr.bf16.mxu0 0
    %3649 = vmatpush1.bf16.msra.mxu0 0
    %3650 = vmatprep.subr.bf16.mxu0 0
    %3651 = vmatpush1.bf16.msra.mxu0 0
    %3652 = vmatprep.subr.bf16.mxu0 0
    %3653 = vmatpush1.bf16.msra.mxu0 0
    %3654 = vmatprep.subr.bf16.mxu0 0
    %3655 = vmatpush1.bf16.msra.mxu0 0
    %3656 = vmatprep.subr.bf16.mxu0 0
    %3657 = vmatpush1.bf16.msra.mxu0 0
    %3658 = vmatprep.subr.bf16.mxu0 0
    %3659 = vmatpush1.bf16.msra.mxu0 0
    %3660 = vmatprep.subr.bf16.mxu0 0
    %3661 = vmatpush1.bf16.msra.mxu0 0
    %3662 = vmatprep.subr.bf16.mxu0 0
    %3663 = vmatpush1.bf16.msra.mxu0 0
    %3664 = vmatprep.mubr.bf16.mxu0 0
    %3665 = vmatmul.mubr.bf16.gmra.mrb[0].mxu0 %v3563
    %v3666 = vpop.f32.mrb[0].mxu0
    %v3667 = vadd.f32 %v3583, %v3666
    %v3668 = vpop.f32.mrb[0].mxu0
    %v3669 = vpop.f32.mrb[0].mxu0
    %v3670 = vadd.f32 %v3583, %v3669
    %v3671 = vpop.f32.mrb[0].mxu0
    %3672 = vdwg.mxu0
    %3673 = vst [vmem:[%s9] sm:$0xff] %v3667
    %3674 = vst [vmem:[%s9 + $0x8] sm:$0xff] %v3670
    // Predicated region
    $region66: #{define_classifier_forward.1} parent=1 // pred_check
      _
    $region67: #{define_classifier_forward.1} parent=1 // pred_check_branch
      %3676 = sbr.rel (0) target = $region69
    $region68: #{define_classifier_forward.1} parent=1 // pred_region
      _
    $region69: #{define_classifier_forward.1} parent=1 // pred_fallthru
      _
    // Predicated region
    $region70: #{define_classifier_forward.1} parent=1 // pred_check
      _
    $region71: #{define_classifier_forward.1} parent=1 // pred_check_branch
      %3678 = sbr.rel (0) target = $region73
    $region72: #{define_classifier_forward.1} parent=1 // pred_region
      _
    $region73: #{define_classifier_forward.1} parent=1 // pred_fallthru
      _
    %3679 = vsyncpa [#allocation3], 1
    %3680 = vsyncpa [#allocation5], 1
    %3681 = vsyncpa [#allocation8], 1
    %3682 = vsyncpa [#allocation11], 1

</llo_original>
